<compile_context>
chip_gen: v5e
topology: v5e:2x2
jax: 0.10.0
libtpu: 0.0.40
codegen_flags: <defaults>
</compile_context>

<pallas_src>
import functools

import jax
import jax.numpy as jnp
import numpy as np
from jax.experimental import pallas as pl
from jax.experimental.pallas import tpu as pltpu

LANE = 128


def _round_up(x, m):
    return (x + m - 1) // m * m


def _vmem_capacity_bytes():
    """Per-core VMEM capacity; conservative fallback = v7x 64 MiB."""
    try:
        return int(pltpu.get_tpu_info().vmem_capacity_bytes)
    except Exception:
        return 64 * 1024 * 1024


def _vmem_tile_bytes(shape, dtype):
    """Approximate VMEM footprint of a buffer: lane dim padded to 128,
    sublane dim padded to the packed sublane tile."""
    it = jnp.dtype(dtype).itemsize
    pack = max(1, 4 // it)
    s = list(shape)
    if len(s) >= 1:
        s[-1] = _round_up(s[-1], 128)
    if len(s) >= 2:
        s[-2] = _round_up(s[-2], 8 * pack)
    return int(np.prod(s)) * it


# ------------------------------ fused kernel -------------------------------- #

def _make_head_kernel(num_convs, tile_n, H, W, cin0, conv_cins, cinter,
                      cout_pad, compute_dtype, out_dtype):
    """Fused Head kernel body.

    Ref order: x, (w_l, shift_l) * num_convs, w2, b2, out, [act_scratch if num_convs > 1]
      x          : (tile_n, H+2, W+2, cin0) bf16 (zero-padded); (tile_n,H,W,cin0) if num_convs==0
      w_l        : (9, cin_l, cinter)       bf16, BN scale folded
      shift_l    : (1, cinter)              f32  (BN shift)
      w2         : (c_last, cout_pad)       bf16
      b2         : (1, cout_pad)            f32
      out        : (tile_n*H*W, cout_pad)   out_dtype (lane-dense)
      act_scratch: (tile_n, H+2, W+2, cinter) bf16 VMEM (inter-layer activation)
    """
    L = num_convs
    Mt = tile_n * H * W
    Hp, Wp = H + 2, W + 2

    def kernel(*refs):
        x_ref = refs[0]
        w_refs = [refs[1 + 2 * l] for l in range(L)]
        s_refs = [refs[2 + 2 * l] for l in range(L)]
        w2_ref = refs[1 + 2 * L]
        b2_ref = refs[2 + 2 * L]
        o_ref = refs[3 + 2 * L]
        act_ref = refs[4 + 2 * L] if L > 1 else None

        if L == 0:
            h_cd = x_ref[...].reshape(Mt, cin0)
        else:
            if L > 1:
                # Zero once per step so the 1-pixel border of the intermediate
                # activation scratch is a valid zero pad for the next 3x3 conv.
                act_ref[...] = jnp.zeros((tile_n, Hp, Wp, cinter), compute_dtype)
            cur_ref = x_ref
            h = None
            for l in range(L):
                cin_l = conv_cins[l]
                acc = jnp.zeros((Mt, cinter), jnp.float32)
                # 3x3 conv == sum over 9 shifted windows, each a (Mt,cin)x(cin,cinter) matmul.
                for kh in range(3):
                    for kw in range(3):
                        patch = cur_ref[:, kh:kh + H, kw:kw + W, :]      # (tile_n,H,W,cin_l)
                        p2 = patch.reshape(Mt, cin_l)
                        acc = acc + jnp.dot(p2, w_refs[l][kh * 3 + kw],
                                            preferred_element_type=jnp.float32)
                h = jnp.maximum(acc + s_refs[l][...], 0.0)               # f32 BN-shift + ReLU
                if l < L - 1:
                    act_ref[:, 1:1 + H, 1:1 + W, :] = (
                        h.astype(compute_dtype).reshape(tile_n, H, W, cinter))
                    cur_ref = act_ref
            h_cd = h.astype(compute_dtype)

        y = jnp.dot(h_cd, w2_ref[...], preferred_element_type=jnp.float32) + b2_ref[...]
        o_ref[...] = y.astype(out_dtype)                                 # lane-dense store

    return kernel


# --------------------------------- Head ------------------------------------- #

class HeadPallas:
    """Pallas re-implementation of Head(in_c, out_c, inter_c, num_convs)."""

    def __init__(self, in_channels, out_channels, inter_channels=None, num_convs=0,
                 seed=0, bn_eps=1e-5, compute_dtype=jnp.bfloat16, out_dtype=jnp.float32):
        key = jax.random.PRNGKey(seed)
        self.num_convs = int(num_convs)
        self.in_channels = in_channels
        self.inter_channels = inter_channels if self.num_convs > 0 else in_channels
        self.out_channels = out_channels
        self.out_channels_pad = _round_up(out_channels, LANE)
        self.compute_dtype = compute_dtype
        self.out_dtype = out_dtype
        self._vmem_cap = _vmem_capacity_bytes()

        self.conv_params = []
        cin = in_channels
        for _ in range(self.num_convs):
            key, kw = jax.random.split(key)
            # PyTorch conv weight layout (Cout, Cin, 3, 3); bias=False (BN follows).
            w = jax.random.normal(kw, (self.inter_channels, cin, 3, 3), jnp.float32) * 0.1
            # BN eval semantics; identity running stats as placeholders.
            # NOTE: load real pretrained stats here before folding in production.
            gamma = jnp.ones((self.inter_channels,), jnp.float32)
            beta = jnp.zeros((self.inter_channels,), jnp.float32)
            rmean = jnp.zeros((self.inter_channels,), jnp.float32)
            rvar = jnp.ones((self.inter_channels,), jnp.float32)
            scale = gamma / jnp.sqrt(rvar + bn_eps)
            shift = beta - rmean * scale
            # (Cout,Cin,3,3) -> (kh,kw,Cin,Cout) -> (9,Cin,Cout); fold BN scale into weight.
            w9 = jnp.transpose(w, (2, 3, 1, 0)).reshape(9, cin, self.inter_channels)
            w9 = (w9 * scale[None, None, :]).astype(compute_dtype)
            self.conv_params.append((w9, shift[None, :].astype(jnp.float32)))
            cin = self.inter_channels

        key, kw2, kb2 = jax.random.split(key, 3)
        c_last = cin
        w2 = jax.random.normal(kw2, (out_channels, c_last, 1, 1), jnp.float32) * 0.1
        b2 = jax.random.normal(kb2, (out_channels,), jnp.float32) * 0.01
        pad_c = self.out_channels_pad - out_channels
        # Zero-pad out channels to a full 128-lane width -> unmasked lane-dense stores.
        self.w2_mat = jnp.pad(jnp.transpose(w2[:, :, 0, 0], (1, 0)),
                              ((0, 0), (0, pad_c))).astype(compute_dtype)
        self.b2 = jnp.pad(b2, (0, pad_c)).astype(jnp.float32)[None, :]

    # ----------------------- VMEM-aware tile selection ---------------------- #

    def _vmem_estimate(self, tile_n, H, W):
        L = self.num_convs
        Hp, Wp = (H + 2, W + 2) if L > 0 else (H, W)
        cdt, odt = self.compute_dtype, self.out_dtype
        x_blk = _vmem_tile_bytes((tile_n, Hp, Wp, self.in_channels), cdt)
        out_blk = _vmem_tile_bytes((tile_n * H * W, self.out_channels_pad), odt)
        w_bytes = sum(_vmem_tile_bytes(w.shape, cdt) + _vmem_tile_bytes(s.shape, jnp.float32)
                      for w, s in self.conv_params)
        w_bytes += _vmem_tile_bytes(self.w2_mat.shape, cdt)
        w_bytes += _vmem_tile_bytes(self.b2.shape, jnp.float32)
        scratch = (_vmem_tile_bytes((tile_n, Hp, Wp, self.inter_channels), cdt)
                   if L > 1 else 0)
        live = 2 * _vmem_tile_bytes((tile_n * H * W, self.inter_channels), jnp.float32)
        return 2 * (x_blk + out_blk + w_bytes) + scratch + live

    def _pick_tile_n(self, N, H, W):
        budget = int(self._vmem_cap * 0.6)
        divisors = [d for d in range(1, N + 1) if N % d == 0]
        fitting = [d for d in divisors if self._vmem_estimate(d, H, W) <= budget]
        if not fitting:
            return 1  # smallest tile; very large images would need halo tiling (TODO above)
        even = [d for d in fitting if (N // d) >= 2 and (N // d) % 2 == 0]
        if even:      # v7x megacore: even grid of >= 2 steps keeps both TCs busy
            return max(even)
        multi = [d for d in fitting if (N // d) >= 2]
        if multi:
            return max(multi)
        return max(fitting)

    # --------------------------------- forward ------------------------------ #

    @functools.partial(jax.jit, static_argnums=0)
    def __call__(self, x_nchw):
        N, C, H, W = x_nchw.shape
        L = self.num_convs
        cdt = self.compute_dtype
        tile_n = self._pick_tile_n(N, H, W)
        grid = (N // tile_n,)
        Mt = tile_n * H * W

        x = jnp.transpose(x_nchw, (0, 2, 3, 1)).astype(cdt)        # NCHW -> NHWC
        if L > 0:
            # 1x-data spatial zero pad of the input only (no 9x im2col buffer).
            x = jnp.pad(x, ((0, 0), (1, 1), (1, 1), (0, 0)))
        Hp, Wp = x.shape[1], x.shape[2]

        conv_cins = ([self.in_channels] + [self.inter_channels] * (L - 1)) if L > 0 else []
        kernel = _make_head_kernel(L, tile_n, H, W, C, conv_cins, self.inter_channels,
                                   self.out_channels_pad, cdt, self.out_dtype)

        operands = [x]
        in_specs = [pl.BlockSpec((tile_n, Hp, Wp, C), lambda i: (i, 0, 0, 0))]
        for (w9, shift) in self.conv_params:
            operands += [w9, shift]
            in_specs += [pl.BlockSpec(w9.shape, lambda i: (0, 0, 0)),
                         pl.BlockSpec(shift.shape, lambda i: (0, 0))]
        operands += [self.w2_mat, self.b2]
        in_specs += [pl.BlockSpec(self.w2_mat.shape, lambda i: (0, 0)),
                     pl.BlockSpec(self.b2.shape, lambda i: (0, 0))]

        scratch_shapes = []
        if L > 1:
            scratch_shapes.append(pltpu.VMEM((tile_n, Hp, Wp, self.inter_channels), cdt))

        c_last = self.inter_channels if L > 0 else C
        flops = 2 * N * H * W * (sum(9 * c * self.inter_channels for c in conv_cins)
                                 + c_last * self.out_channels_pad)
        bytes_acc = (x.size * x.dtype.itemsize
                     + sum(int(o.size) * o.dtype.itemsize for o in operands[1:])
                     + N * H * W * self.out_channels_pad * jnp.dtype(self.out_dtype).itemsize)
        est = self._vmem_estimate(tile_n, H, W)
        vmem_limit = int(min(max(2 * est, 32 * 1024 * 1024),
                             self._vmem_cap - 4 * 1024 * 1024))

        y = pl.pallas_call(
            kernel,
            out_shape=jax.ShapeDtypeStruct((N * H * W, self.out_channels_pad),
                                           self.out_dtype),
            grid_spec=pltpu.PrefetchScalarGridSpec(
                num_scalar_prefetch=0,
                grid=grid,
                in_specs=in_specs,
                out_specs=pl.BlockSpec((Mt, self.out_channels_pad), lambda i: (i, 0)),
                scratch_shapes=scratch_shapes,
            ),
            compiler_params=pltpu.CompilerParams(
                dimension_semantics=("parallel",),
                vmem_limit_bytes=vmem_limit),
            cost_estimate=pl.CostEstimate(flops=int(flops), transcendentals=0,
                                          bytes_accessed=int(bytes_acc)),
        )(*operands)

        y = y[:, :self.out_channels].reshape(N, H, W, self.out_channels)
        return jnp.transpose(y, (0, 3, 1, 2)).astype(jnp.float32)    # NHWC -> NCHW


# ------------------------------ reference (JAX) ------------------------------ #

def head_reference(head, x_nchw):
    """Pure-JAX f32 reference of the same forward (same BN-folded weights)."""
    x = jnp.transpose(x_nchw, (0, 2, 3, 1)).astype(jnp.float32)
    N, H, W, _ = x.shape
    for (w9, shift) in head.conv_params:
        w9f = w9.astype(jnp.float32)
        xp = jnp.pad(x, ((0, 0), (1, 1), (1, 1), (0, 0)))
        acc = jnp.zeros((N, H, W, head.inter_channels), jnp.float32)
        for k in range(9):
            kh, kw = divmod(k, 3)
            acc = acc + jnp.einsum('nhwc,cd->nhwd',
                                   xp[:, kh:kh + H, kw:kw + W, :], w9f[k])
        x = jnp.maximum(acc + shift.reshape(1, 1, 1, -1), 0.0)
    y = jnp.einsum('nhwc,cd->nhwd', x, head.w2_mat.astype(jnp.float32))
    y = y + head.b2.reshape(1, 1, 1, -1)
    y = y[..., :head.out_channels]
    return jnp.transpose(y, (0, 3, 1, 2))


# ----------------------------------- main ------------------------------------ #

if __name__ == "__main__":
    key = jax.random.PRNGKey(0)
    N, Cin, H, W = 2, 4, 16, 16
    Cinter, Cout = 32, 5
    x = jax.random.normal(key, (N, Cin, H, W), jnp.float32)

    # num_convs=1: fused [3x3 conv + BN + ReLU] -> [1x1 conv + bias], one kernel.
    head1 = HeadPallas(Cin, Cout, Cinter, num_convs=1, seed=0)
    out1 = jax.block_until_ready(head1(x))
    ref1 = jax.block_until_ready(head_reference(head1, x))
    assert out1.shape == (N, Cout, H, W), out1.shape
    np.testing.assert_allclose(np.asarray(out1), np.asarray(ref1), rtol=5e-2, atol=2e-2)

    # num_convs=2: both conv layers fused in the same kernel (VMEM-resident intermediate).
    head2 = HeadPallas(Cin, Cout, Cinter, num_convs=2, seed=1)
    out2 = jax.block_until_ready(head2(x))
    ref2 = jax.block_until_ready(head_reference(head2, x))
    assert out2.shape == (N, Cout, H, W), out2.shape
    np.testing.assert_allclose(np.asarray(out2), np.asarray(ref2), rtol=5e-2, atol=2e-2)

    # num_convs=0: single 1x1 conv + bias (the module's default config).
    head0 = HeadPallas(Cin, Cout, num_convs=0, seed=2)
    out0 = jax.block_until_ready(head0(x))
    ref0 = jax.block_until_ready(head_reference(head0, x))
    assert out0.shape == (N, Cout, H, W), out0.shape
    np.testing.assert_allclose(np.asarray(out0), np.asarray(ref0), rtol=5e-2, atol=2e-2)

    print("KERNEL_OK")
</pallas_src>

<mosaic_0001>
module attributes {stable_mosaic.version = 11 : i64} {
  func.func @kernel(%arg0: i32, %arg1: memref<1x18x18x4xbf16, #tpu.memory_space<vmem>>, %arg2: memref<9x4x32xbf16, #tpu.memory_space<vmem>>, %arg3: memref<1x32xf32, #tpu.memory_space<vmem>>, %arg4: memref<32x128xbf16, #tpu.memory_space<vmem>>, %arg5: memref<1x128xf32, #tpu.memory_space<vmem>>, %arg6: memref<256x128xf32, #tpu.memory_space<vmem>>) attributes {dimension_semantics = [#tpu.dimension_semantics<parallel>], iteration_bounds = array<i64: 2>, scalar_prefetch = 0 : i64, scratch_operands = 0 : i64, tpu.core_type = #tpu.core_type<tc>, window_params = [{transform_indices = @transform_0, window_bounds = array<i64: 1, 18, 18, 4>}, {pipeline_mode = #tpu.pipeline_mode<synchronous>, transform_indices = @transform_1, window_bounds = array<i64: 9, 4, 32>}, {pipeline_mode = #tpu.pipeline_mode<synchronous>, transform_indices = @transform_2, window_bounds = array<i64: 1, 32>}, {pipeline_mode = #tpu.pipeline_mode<synchronous>, transform_indices = @transform_3, window_bounds = array<i64: 32, 128>}, {pipeline_mode = #tpu.pipeline_mode<synchronous>, transform_indices = @transform_4, window_bounds = array<i64: 1, 128>}, {transform_indices = @transform_5, window_bounds = array<i64: 256, 128>}]} {
    %cst = arith.constant 0.000000e+00 : f32
    %0 = vector.broadcast %cst : f32 to vector<256x32xf32>
    %c0 = arith.constant 0 : index
    %c0_0 = arith.constant 0 : index
    %c0_1 = arith.constant 0 : index
    %c0_2 = arith.constant 0 : index
    %1 = vector.load %arg1[%c0, %c0_0, %c0_1, %c0_2] : memref<1x18x18x4xbf16, #tpu.memory_space<vmem>>, vector<1x16x16x4xbf16>
    %2 = vector.shape_cast %1 : vector<1x16x16x4xbf16> to vector<256x4xbf16>
    %c0_3 = arith.constant 0 : index
    %c0_4 = arith.constant 0 : index
    %c0_5 = arith.constant 0 : index
    %3 = vector.load %arg2[%c0_3, %c0_4, %c0_5] : memref<9x4x32xbf16, #tpu.memory_space<vmem>>, vector<1x4x32xbf16>
    %4 = vector.shape_cast %3 : vector<1x4x32xbf16> to vector<4x32xbf16>
    %cst_6 = arith.constant dense<0.000000e+00> : vector<256x32xf32>
    %5 = tpu.matmul %2, %4, %cst_6 {dimension_numbers = #tpu.dot_dimension_numbers<[1], [0], [0], [1], [0, 0, 1, 1], [], []>} : vector<256x4xbf16>, vector<4x32xbf16>, vector<256x32xf32> -> vector<256x32xf32>
    %6 = arith.addf %0, %5 : vector<256x32xf32>
    %c0_7 = arith.constant 0 : index
    %c0_8 = arith.constant 0 : index
    %c1 = arith.constant 1 : index
    %c0_9 = arith.constant 0 : index
    %7 = vector.load %arg1[%c0_7, %c0_8, %c1, %c0_9] : memref<1x18x18x4xbf16, #tpu.memory_space<vmem>>, vector<1x16x16x4xbf16>
    %8 = vector.shape_cast %7 : vector<1x16x16x4xbf16> to vector<256x4xbf16>
    %c1_10 = arith.constant 1 : index
    %c0_11 = arith.constant 0 : index
    %c0_12 = arith.constant 0 : index
    %9 = vector.load %arg2[%c1_10, %c0_11, %c0_12] : memref<9x4x32xbf16, #tpu.memory_space<vmem>>, vector<1x4x32xbf16>
    %10 = vector.shape_cast %9 : vector<1x4x32xbf16> to vector<4x32xbf16>
    %cst_13 = arith.constant dense<0.000000e+00> : vector<256x32xf32>
    %11 = tpu.matmul %8, %10, %cst_13 {dimension_numbers = #tpu.dot_dimension_numbers<[1], [0], [0], [1], [0, 0, 1, 1], [], []>} : vector<256x4xbf16>, vector<4x32xbf16>, vector<256x32xf32> -> vector<256x32xf32>
    %12 = arith.addf %6, %11 : vector<256x32xf32>
    %c0_14 = arith.constant 0 : index
    %c0_15 = arith.constant 0 : index
    %c2 = arith.constant 2 : index
    %c0_16 = arith.constant 0 : index
    %13 = vector.load %arg1[%c0_14, %c0_15, %c2, %c0_16] : memref<1x18x18x4xbf16, #tpu.memory_space<vmem>>, vector<1x16x16x4xbf16>
    %14 = vector.shape_cast %13 : vector<1x16x16x4xbf16> to vector<256x4xbf16>
    %c2_17 = arith.constant 2 : index
    %c0_18 = arith.constant 0 : index
    %c0_19 = arith.constant 0 : index
    %15 = vector.load %arg2[%c2_17, %c0_18, %c0_19] : memref<9x4x32xbf16, #tpu.memory_space<vmem>>, vector<1x4x32xbf16>
    %16 = vector.shape_cast %15 : vector<1x4x32xbf16> to vector<4x32xbf16>
    %cst_20 = arith.constant dense<0.000000e+00> : vector<256x32xf32>
    %17 = tpu.matmul %14, %16, %cst_20 {dimension_numbers = #tpu.dot_dimension_numbers<[1], [0], [0], [1], [0, 0, 1, 1], [], []>} : vector<256x4xbf16>, vector<4x32xbf16>, vector<256x32xf32> -> vector<256x32xf32>
    %18 = arith.addf %12, %17 : vector<256x32xf32>
    %c0_21 = arith.constant 0 : index
    %c1_22 = arith.constant 1 : index
    %c0_23 = arith.constant 0 : index
    %c0_24 = arith.constant 0 : index
    %19 = vector.load %arg1[%c0_21, %c1_22, %c0_23, %c0_24] : memref<1x18x18x4xbf16, #tpu.memory_space<vmem>>, vector<1x16x16x4xbf16>
    %20 = vector.shape_cast %19 : vector<1x16x16x4xbf16> to vector<256x4xbf16>
    %c3 = arith.constant 3 : index
    %c0_25 = arith.constant 0 : index
    %c0_26 = arith.constant 0 : index
    %21 = vector.load %arg2[%c3, %c0_25, %c0_26] : memref<9x4x32xbf16, #tpu.memory_space<vmem>>, vector<1x4x32xbf16>
    %22 = vector.shape_cast %21 : vector<1x4x32xbf16> to vector<4x32xbf16>
    %cst_27 = arith.constant dense<0.000000e+00> : vector<256x32xf32>
    %23 = tpu.matmul %20, %22, %cst_27 {dimension_numbers = #tpu.dot_dimension_numbers<[1], [0], [0], [1], [0, 0, 1, 1], [], []>} : vector<256x4xbf16>, vector<4x32xbf16>, vector<256x32xf32> -> vector<256x32xf32>
    %24 = arith.addf %18, %23 : vector<256x32xf32>
    %c0_28 = arith.constant 0 : index
    %c1_29 = arith.constant 1 : index
    %c1_30 = arith.constant 1 : index
    %c0_31 = arith.constant 0 : index
    %25 = vector.load %arg1[%c0_28, %c1_29, %c1_30, %c0_31] : memref<1x18x18x4xbf16, #tpu.memory_space<vmem>>, vector<1x16x16x4xbf16>
    %26 = vector.shape_cast %25 : vector<1x16x16x4xbf16> to vector<256x4xbf16>
    %c4 = arith.constant 4 : index
    %c0_32 = arith.constant 0 : index
    %c0_33 = arith.constant 0 : index
    %27 = vector.load %arg2[%c4, %c0_32, %c0_33] : memref<9x4x32xbf16, #tpu.memory_space<vmem>>, vector<1x4x32xbf16>
    %28 = vector.shape_cast %27 : vector<1x4x32xbf16> to vector<4x32xbf16>
    %cst_34 = arith.constant dense<0.000000e+00> : vector<256x32xf32>
    %29 = tpu.matmul %26, %28, %cst_34 {dimension_numbers = #tpu.dot_dimension_numbers<[1], [0], [0], [1], [0, 0, 1, 1], [], []>} : vector<256x4xbf16>, vector<4x32xbf16>, vector<256x32xf32> -> vector<256x32xf32>
    %30 = arith.addf %24, %29 : vector<256x32xf32>
    %c0_35 = arith.constant 0 : index
    %c1_36 = arith.constant 1 : index
    %c2_37 = arith.constant 2 : index
    %c0_38 = arith.constant 0 : index
    %31 = vector.load %arg1[%c0_35, %c1_36, %c2_37, %c0_38] : memref<1x18x18x4xbf16, #tpu.memory_space<vmem>>, vector<1x16x16x4xbf16>
    %32 = vector.shape_cast %31 : vector<1x16x16x4xbf16> to vector<256x4xbf16>
    %c5 = arith.constant 5 : index
    %c0_39 = arith.constant 0 : index
    %c0_40 = arith.constant 0 : index
    %33 = vector.load %arg2[%c5, %c0_39, %c0_40] : memref<9x4x32xbf16, #tpu.memory_space<vmem>>, vector<1x4x32xbf16>
    %34 = vector.shape_cast %33 : vector<1x4x32xbf16> to vector<4x32xbf16>
    %cst_41 = arith.constant dense<0.000000e+00> : vector<256x32xf32>
    %35 = tpu.matmul %32, %34, %cst_41 {dimension_numbers = #tpu.dot_dimension_numbers<[1], [0], [0], [1], [0, 0, 1, 1], [], []>} : vector<256x4xbf16>, vector<4x32xbf16>, vector<256x32xf32> -> vector<256x32xf32>
    %36 = arith.addf %30, %35 : vector<256x32xf32>
    %c0_42 = arith.constant 0 : index
    %c2_43 = arith.constant 2 : index
    %c0_44 = arith.constant 0 : index
    %c0_45 = arith.constant 0 : index
    %37 = vector.load %arg1[%c0_42, %c2_43, %c0_44, %c0_45] : memref<1x18x18x4xbf16, #tpu.memory_space<vmem>>, vector<1x16x16x4xbf16>
    %38 = vector.shape_cast %37 : vector<1x16x16x4xbf16> to vector<256x4xbf16>
    %c6 = arith.constant 6 : index
    %c0_46 = arith.constant 0 : index
    %c0_47 = arith.constant 0 : index
    %39 = vector.load %arg2[%c6, %c0_46, %c0_47] : memref<9x4x32xbf16, #tpu.memory_space<vmem>>, vector<1x4x32xbf16>
    %40 = vector.shape_cast %39 : vector<1x4x32xbf16> to vector<4x32xbf16>
    %cst_48 = arith.constant dense<0.000000e+00> : vector<256x32xf32>
    %41 = tpu.matmul %38, %40, %cst_48 {dimension_numbers = #tpu.dot_dimension_numbers<[1], [0], [0], [1], [0, 0, 1, 1], [], []>} : vector<256x4xbf16>, vector<4x32xbf16>, vector<256x32xf32> -> vector<256x32xf32>
    %42 = arith.addf %36, %41 : vector<256x32xf32>
    %c0_49 = arith.constant 0 : index
    %c2_50 = arith.constant 2 : index
    %c1_51 = arith.constant 1 : index
    %c0_52 = arith.constant 0 : index
    %43 = vector.load %arg1[%c0_49, %c2_50, %c1_51, %c0_52] : memref<1x18x18x4xbf16, #tpu.memory_space<vmem>>, vector<1x16x16x4xbf16>
    %44 = vector.shape_cast %43 : vector<1x16x16x4xbf16> to vector<256x4xbf16>
    %c7 = arith.constant 7 : index
    %c0_53 = arith.constant 0 : index
    %c0_54 = arith.constant 0 : index
    %45 = vector.load %arg2[%c7, %c0_53, %c0_54] : memref<9x4x32xbf16, #tpu.memory_space<vmem>>, vector<1x4x32xbf16>
    %46 = vector.shape_cast %45 : vector<1x4x32xbf16> to vector<4x32xbf16>
    %cst_55 = arith.constant dense<0.000000e+00> : vector<256x32xf32>
    %47 = tpu.matmul %44, %46, %cst_55 {dimension_numbers = #tpu.dot_dimension_numbers<[1], [0], [0], [1], [0, 0, 1, 1], [], []>} : vector<256x4xbf16>, vector<4x32xbf16>, vector<256x32xf32> -> vector<256x32xf32>
    %48 = arith.addf %42, %47 : vector<256x32xf32>
    %c0_56 = arith.constant 0 : index
    %c2_57 = arith.constant 2 : index
    %c2_58 = arith.constant 2 : index
    %c0_59 = arith.constant 0 : index
    %49 = vector.load %arg1[%c0_56, %c2_57, %c2_58, %c0_59] : memref<1x18x18x4xbf16, #tpu.memory_space<vmem>>, vector<1x16x16x4xbf16>
    %50 = vector.shape_cast %49 : vector<1x16x16x4xbf16> to vector<256x4xbf16>
    %c8 = arith.constant 8 : index
    %c0_60 = arith.constant 0 : index
    %c0_61 = arith.constant 0 : index
    %51 = vector.load %arg2[%c8, %c0_60, %c0_61] : memref<9x4x32xbf16, #tpu.memory_space<vmem>>, vector<1x4x32xbf16>
    %52 = vector.shape_cast %51 : vector<1x4x32xbf16> to vector<4x32xbf16>
    %cst_62 = arith.constant dense<0.000000e+00> : vector<256x32xf32>
    %53 = tpu.matmul %50, %52, %cst_62 {dimension_numbers = #tpu.dot_dimension_numbers<[1], [0], [0], [1], [0, 0, 1, 1], [], []>} : vector<256x4xbf16>, vector<4x32xbf16>, vector<256x32xf32> -> vector<256x32xf32>
    %54 = arith.addf %48, %53 : vector<256x32xf32>
    %c0_63 = arith.constant 0 : index
    %c0_64 = arith.constant 0 : index
    %55 = vector.load %arg3[%c0_63, %c0_64] : memref<1x32xf32, #tpu.memory_space<vmem>>, vector<1x32xf32>
    %56 = vector.broadcast %55 : vector<1x32xf32> to vector<256x32xf32>
    %57 = arith.addf %54, %56 : vector<256x32xf32>
    %cst_65 = arith.constant 0.000000e+00 : f32
    %58 = vector.broadcast %cst_65 : f32 to vector<256x32xf32>
    %59 = arith.maximumf %57, %58 : vector<256x32xf32>
    %60 = arith.truncf %59 : vector<256x32xf32> to vector<256x32xbf16>
    %c0_66 = arith.constant 0 : index
    %c0_67 = arith.constant 0 : index
    %61 = vector.load %arg4[%c0_66, %c0_67] : memref<32x128xbf16, #tpu.memory_space<vmem>>, vector<32x128xbf16>
    %cst_68 = arith.constant dense<0.000000e+00> : vector<256x128xf32>
    %62 = tpu.matmul %60, %61, %cst_68 {dimension_numbers = #tpu.dot_dimension_numbers<[1], [0], [0], [1], [0, 0, 1, 1], [], []>} : vector<256x32xbf16>, vector<32x128xbf16>, vector<256x128xf32> -> vector<256x128xf32>
    %c0_69 = arith.constant 0 : index
    %c0_70 = arith.constant 0 : index
    %63 = vector.load %arg5[%c0_69, %c0_70] : memref<1x128xf32, #tpu.memory_space<vmem>>, vector<1x128xf32>
    %64 = vector.broadcast %63 : vector<1x128xf32> to vector<256x128xf32>
    %65 = arith.addf %62, %64 : vector<256x128xf32>
    %c0_71 = arith.constant 0 : index
    %c0_72 = arith.constant 0 : index
    %66 = vector.load %arg6[%c0_71, %c0_72] : memref<256x128xf32, #tpu.memory_space<vmem>>, vector<256x128xf32>
    tpu.vector_store %arg6[%c0_71, %c0_72], %65 {strides = array<i32>} : memref<256x128xf32, #tpu.memory_space<vmem>>, vector<256x128xf32>,
    return
  }
  func.func @transform_0(%arg0: i32) -> (i32, i32, i32, i32) {
    %c0_i32 = arith.constant 0 : i32
    %c0_i32_0 = arith.constant 0 : i32
    %c0_i32_1 = arith.constant 0 : i32
    %c0_i32_2 = arith.constant 0 : i32
    return %arg0, %c0_i32, %c0_i32_0, %c0_i32_1 : i32, i32, i32, i32
  }
  func.func @transform_1(%arg0: i32) -> (i32, i32, i32) {
    %c0_i32 = arith.constant 0 : i32
    %c0_i32_0 = arith.constant 0 : i32
    %c0_i32_1 = arith.constant 0 : i32
    %c0_i32_2 = arith.constant 0 : i32
    return %c0_i32, %c0_i32_0, %c0_i32_1 : i32, i32, i32
  }
  func.func @transform_2(%arg0: i32) -> (i32, i32) {
    %c0_i32 = arith.constant 0 : i32
    %c0_i32_0 = arith.constant 0 : i32
    %c0_i32_1 = arith.constant 0 : i32
    return %c0_i32, %c0_i32_0 : i32, i32
  }
  func.func @transform_3(%arg0: i32) -> (i32, i32) {
    %c0_i32 = arith.constant 0 : i32
    %c0_i32_0 = arith.constant 0 : i32
    %c0_i32_1 = arith.constant 0 : i32
    return %c0_i32, %c0_i32_0 : i32, i32
  }
  func.func @transform_4(%arg0: i32) -> (i32, i32) {
    %c0_i32 = arith.constant 0 : i32
    %c0_i32_0 = arith.constant 0 : i32
    %c0_i32_1 = arith.constant 0 : i32
    return %c0_i32, %c0_i32_0 : i32, i32
  }
  func.func @transform_5(%arg0: i32) -> (i32, i32) {
    %c0_i32 = arith.constant 0 : i32
    %c0_i32_0 = arith.constant 0 : i32
    return %arg0, %c0_i32 : i32, i32
  }
}

</mosaic_0001>

<llo_original>
// kernel: a_call__.1
$region0: #{a_call__.1}
  #allocation0 [shape = 'u32[]', space=smem, size = 0x4, offset = 0x4, fixed_abs, tag = 'smem constant byte address 0x4 - core index']
  #allocation1 [shape = 'u32[72,128]{1,0:T(1,128)}', space=vmem, size = 0x9000, scoped, tag = 'internal scratch']
  %s0 = inlined_call_operand.vmem [shape: bf16[2,18,18,4], index: 0, kind: input, shape index: {}]
  %s1 = inlined_call_operand.vmem [shape: bf16[9,4,32], index: 1, kind: input, shape index: {}]
  %s2 = inlined_call_operand.vmem [shape: f32[1,32], index: 2, kind: input, shape index: {}]
  %s3 = inlined_call_operand.vmem [shape: bf16[32,128], index: 3, kind: input, shape index: {}]
  %s4 = inlined_call_operand.vmem [shape: f32[1,128], index: 4, kind: input, shape index: {}]
  %s5 = inlined_call_operand.vmem [shape: f32[512,128], index: 5, kind: output, shape index: {}]
  %s6 = sld [smem:[#allocation0]]
  $region53: #{a_call__.1} parent=0
    _
  %s8 = ssub.s32 1, %s6
  %s9 = scalar_select 0, %s8, %s6
  loop: start=0, step=1, limit=4
  $region2: #{a_call__.1} parent=0 // loop_pre_header
    _
  $region3: #{a_call__.1} parent=0 // loop_header
    %s11 = sphi 0, %s15
    %p12 = scmp.ge.s32.totalorder %s11, 4
    %s21 = sphi 0, %s23
    %s24 = sphi 0, %s21
    %s25 = sphi 0, %s24
    %s41 = sphi 0, %s25
    %s45 = sphi 0, %s45
    %s47 = sphi 0, %s45
    %s48 = sphi 0, %s47
    %s62 = sphi 0, %s48
    %s66 = sphi 0, %s66
    %s68 = sphi 0, %s66
    %s69 = sphi 0, %s68
    %s83 = sphi 0, %s69
    %s87 = sphi 0, %s87
    %s89 = sphi 0, %s87
    %s90 = sphi 0, %s89
    %s104 = sphi 0, %s90
    %s108 = sphi 0, %s108
    %s110 = sphi 0, %s108
    %s111 = sphi 0, %s110
    %s125 = sphi 0, %s111
    %s131 = sphi 0, %s133
    %s134 = sphi 0, %s131
    %s135 = sphi 0, %s134
    %s151 = sphi 0, %s135
  $region4: #{a_call__.1} parent=0 // loop_header_branch
    %14 = sbr.rel (%p12) target = $region8
  $region5: #{a_call__.1} parent=0 // loop_body
    %s16 = ssub.s32 %s11, 1
    %s17 = ssub.s32 %s11, 2
    %s18 = sadd.s32 %s11, 1
    %s19 = ssub.s32 %s11, %s18
    %p20 = scmp.eq.s32.totalorder %s19, 0
    %s22 = sadd.s32 %s21, 1
    %s23 = scalar_select %p20, %s21, %s22
    %p26 = pneg %p20
    %p27 = scmp.eq.s32.totalorder %s11, 1
    %p28 = por %p26, %p27
    %p29 = scmp.ne.s32.totalorder %s21, %s24
    %p30 = scmp.eq.s32.totalorder %s11, 0
    %p31 = por %p29, %p30
    %p32 = scmp.ne.s32.totalorder %s21, %s24
    %p33 = scmp.eq.s32.totalorder %s16, 1
    %p34 = por %p32, %p33
    %p35 = scmp.ne.s32.totalorder %s24, %s25
    %p36 = scmp.eq.s32.totalorder %s16, 0
    %p37 = por %p35, %p36
    %p38 = scmp.ne.s32.totalorder %s24, %s25
    %p39 = scmp.eq.s32.totalorder %s17, 1
    %p40 = por %p38, %p39
    %p42 = scmp.ne.s32.totalorder %s25, %s41
    %p43 = scmp.eq.s32.totalorder %s17, 0
    %p44 = por %p42, %p43
    %s46 = sadd.s32 %s45, 1
    %p49 = scmp.eq.s32.totalorder %s11, 1
    %p50 = scmp.ne.s32.totalorder %s45, %s47
    %p51 = scmp.eq.s32.totalorder %s11, 0
    %p52 = por %p50, %p51
    %p53 = scmp.ne.s32.totalorder %s45, %s47
    %p54 = scmp.eq.s32.totalorder %s16, 1
    %p55 = por %p53, %p54
    %p56 = scmp.ne.s32.totalorder %s47, %s48
    %p57 = scmp.eq.s32.totalorder %s16, 0
    %p58 = por %p56, %p57
    %p59 = scmp.ne.s32.totalorder %s47, %s48
    %p60 = scmp.eq.s32.totalorder %s17, 1
    %p61 = por %p59, %p60
    %p63 = scmp.ne.s32.totalorder %s48, %s62
    %p64 = scmp.eq.s32.totalorder %s17, 0
    %p65 = por %p63, %p64
    %s67 = sadd.s32 %s66, 1
    %p70 = scmp.eq.s32.totalorder %s11, 1
    %p71 = scmp.ne.s32.totalorder %s66, %s68
    %p72 = scmp.eq.s32.totalorder %s11, 0
    %p73 = por %p71, %p72
    %p74 = scmp.ne.s32.totalorder %s66, %s68
    %p75 = scmp.eq.s32.totalorder %s16, 1
    %p76 = por %p74, %p75
    %p77 = scmp.ne.s32.totalorder %s68, %s69
    %p78 = scmp.eq.s32.totalorder %s16, 0
    %p79 = por %p77, %p78
    %p80 = scmp.ne.s32.totalorder %s68, %s69
    %p81 = scmp.eq.s32.totalorder %s17, 1
    %p82 = por %p80, %p81
    %p84 = scmp.ne.s32.totalorder %s69, %s83
    %p85 = scmp.eq.s32.totalorder %s17, 0
    %p86 = por %p84, %p85
    %s88 = sadd.s32 %s87, 1
    %p91 = scmp.eq.s32.totalorder %s11, 1
    %p92 = scmp.ne.s32.totalorder %s87, %s89
    %p93 = scmp.eq.s32.totalorder %s11, 0
    %p94 = por %p92, %p93
    %p95 = scmp.ne.s32.totalorder %s87, %s89
    %p96 = scmp.eq.s32.totalorder %s16, 1
    %p97 = por %p95, %p96
    %p98 = scmp.ne.s32.totalorder %s89, %s90
    %p99 = scmp.eq.s32.totalorder %s16, 0
    %p100 = por %p98, %p99
    %p101 = scmp.ne.s32.totalorder %s89, %s90
    %p102 = scmp.eq.s32.totalorder %s17, 1
    %p103 = por %p101, %p102
    %p105 = scmp.ne.s32.totalorder %s90, %s104
    %p106 = scmp.eq.s32.totalorder %s17, 0
    %p107 = por %p105, %p106
    %s109 = sadd.s32 %s108, 1
    %p112 = scmp.eq.s32.totalorder %s11, 1
    %p113 = scmp.ne.s32.totalorder %s108, %s110
    %p114 = scmp.eq.s32.totalorder %s11, 0
    %p115 = por %p113, %p114
    %p116 = scmp.ne.s32.totalorder %s108, %s110
    %p117 = scmp.eq.s32.totalorder %s16, 1
    %p118 = por %p116, %p117
    %p119 = scmp.ne.s32.totalorder %s110, %s111
    %p120 = scmp.eq.s32.totalorder %s16, 0
    %p121 = por %p119, %p120
    %p122 = scmp.ne.s32.totalorder %s110, %s111
    %p123 = scmp.eq.s32.totalorder %s17, 1
    %p124 = por %p122, %p123
    %p126 = scmp.ne.s32.totalorder %s111, %s125
    %p127 = scmp.eq.s32.totalorder %s17, 0
    %p128 = por %p126, %p127
    %s129 = ssub.s32 %s11, %s18
    %p130 = scmp.eq.s32.totalorder %s129, 0
    %s132 = sadd.s32 %s131, 1
    %s133 = scalar_select %p130, %s131, %s132
    %p136 = pneg %p130
    %p137 = scmp.eq.s32.totalorder %s11, 1
    %p138 = por %p136, %p137
    %p139 = scmp.ne.s32.totalorder %s131, %s134
    %p140 = scmp.eq.s32.totalorder %s11, 0
    %p141 = por %p139, %p140
    %p142 = scmp.ne.s32.totalorder %s131, %s134
    %p143 = scmp.eq.s32.totalorder %s16, 1
    %p144 = por %p142, %p143
    %p145 = scmp.ne.s32.totalorder %s134, %s135
    %p146 = scmp.eq.s32.totalorder %s16, 0
    %p147 = por %p145, %p146
    %p148 = scmp.ne.s32.totalorder %s134, %s135
    %p149 = scmp.eq.s32.totalorder %s17, 1
    %p150 = por %p148, %p149
    %p152 = scmp.ne.s32.totalorder %s135, %s151
    %p153 = scmp.eq.s32.totalorder %s17, 0
    %p154 = por %p152, %p153
    %p155 = scmp.le.s32.totalorder 1, %s11
    %p156 = scmp.lt.s32.totalorder %s11, 3
    %p157 = pnand %p155, %p156
    %p158 = pneg %p157
    // Predicated region
    $region9: #{a_call__.1} parent=5 // pred_check
      _
    $region10: #{a_call__.1} parent=5 // pred_check_branch
      %160 = sbr.rel (%p157) target = $region12
    $region11: #{a_call__.1} parent=5 // pred_region
      %s161 = ssub.s32 %s11, 1
      // Predicated region
      $region13: #{a_call__.1} parent=11 // pred_check
        %p162 = pneg %p58
      $region14: #{a_call__.1} parent=11 // pred_check_branch
        %164 = sbr.rel (%p162) target = $region16
      $region15: #{a_call__.1} parent=11 // pred_region
        _
      $region16: #{a_call__.1} parent=11 // pred_fallthru
        _
      // Predicated region
      $region17: #{a_call__.1} parent=11 // pred_check
        %p165 = pneg %p79
      $region18: #{a_call__.1} parent=11 // pred_check_branch
        %167 = sbr.rel (%p165) target = $region20
      $region19: #{a_call__.1} parent=11 // pred_region
        _
      $region20: #{a_call__.1} parent=11 // pred_fallthru
        _
      // Predicated region
      $region21: #{a_call__.1} parent=11 // pred_check
        %p168 = pneg %p100
      $region22: #{a_call__.1} parent=11 // pred_check_branch
        %170 = sbr.rel (%p168) target = $region24
      $region23: #{a_call__.1} parent=11 // pred_region
        _
      $region24: #{a_call__.1} parent=11 // pred_fallthru
        _
      // Predicated region
      $region25: #{a_call__.1} parent=11 // pred_check
        %p171 = pneg %p121
      $region26: #{a_call__.1} parent=11 // pred_check_branch
        %173 = sbr.rel (%p171) target = $region28
      $region27: #{a_call__.1} parent=11 // pred_region
        _
      $region28: #{a_call__.1} parent=11 // pred_fallthru
        _
    $region12: #{a_call__.1} parent=5 // pred_fallthru
      _
    %p174 = scmp.lt.s32.totalorder %s11, 2
    // Predicated region
    $region29: #{a_call__.1} parent=5 // pred_check
      %p175 = pneg %p174
    $region30: #{a_call__.1} parent=5 // pred_check_branch
      %177 = sbr.rel (%p175) target = $region32
    $region31: #{a_call__.1} parent=5 // pred_region
      // Predicated region
      $region33: #{a_call__.1} parent=31 // pred_check
        %p178 = pneg %p31
      $region34: #{a_call__.1} parent=31 // pred_check_branch
        %180 = sbr.rel (%p178) target = $region36
      $region35: #{a_call__.1} parent=31 // pred_region
        %p181 = scmp.lt.s32.totalorder %s11, 1
        %s182 = scalar_select %p181, %s11, 1
        %s183 = smul.addr %s182, 54
        %s184 = smul.addr %s183, 4
        %s185 = scalar_lea.vmem %s0, %s184
      $region36: #{a_call__.1} parent=31 // pred_fallthru
        _
    $region32: #{a_call__.1} parent=5 // pred_fallthru
      _
    %p186 = scmp.le.s32.totalorder 1, %s11
    %p187 = scmp.lt.s32.totalorder %s11, 3
    %p188 = pnand %p186, %p187
    %p189 = pneg %p188
    // Predicated region
    $region37: #{a_call__.1} parent=5 // pred_check
      _
    $region38: #{a_call__.1} parent=5 // pred_check_branch
      %191 = sbr.rel (%p188) target = $region40
    $region39: #{a_call__.1} parent=5 // pred_region
      %s192 = ssub.s32 %s11, 1
      %p193 = scmp.lt.s32.totalorder %s16, 1
      %s194 = scalar_select %p193, %s16, 1
      %s195 = smul.addr %s194, 54
      %s196 = smul.addr %s195, 4
      %s197 = scalar_lea.vmem %s0, %s196
      %p198 = pneg %p37
      %p199 = pneg %p34
      %p200 = pneg %p58
      %p201 = pneg %p55
      %p202 = pneg %p79
      %p203 = pneg %p76
      %p204 = pneg %p100
      %p205 = pneg %p97
      %p206 = pneg %p121
      %p207 = pneg %p118
      %p208 = pneg %p147
      %p209 = pneg %p144
      %s210 = smul.u32 32, %s16
      %p211 = scmp.lt.s32.totalorder %s210, 63
      %s212 = scalar_select %p211, %s210, 63
      %s213 = smul.addr %s212, 8
      %s214 = scalar_lea.vmem %s5, %s213
      %p215 = scmp.lt.s32.totalorder %s16, 1
      %s216 = scalar_select %p215, %s16, 1
      %s217 = smul.addr %s216, 54
      %s218 = smul.addr %s217, 4
      %s219 = scalar_lea.vmem %s0, %s218
      %s220 = smul.u32 32, %s16
      %p221 = scmp.lt.s32.totalorder %s220, 63
      %s222 = scalar_select %p221, %s220, 63
      %s223 = smul.addr %s222, 8
      %s224 = scalar_lea.vmem %s5, %s223
      %s225 = smul.u32 32, %s16
      %v227 = vld [vmem:[%s219] sm:$0xf]
      %v228 = vld [vmem:[%s219 + $0x4] sm:$0xf]
      %v229 = vld [vmem:[%s219 + $0xc] sm:$0xf]
      %v230 = vld [vmem:[%s219 + $0x10] sm:$0xf]
      %v231 = vld [vmem:[%s219 + $0x18] sm:$0xf]
      %v232 = vld [vmem:[%s219 + $0x1c] sm:$0xf]
      %v233 = vld [vmem:[%s219 + $0x24] sm:$0xf]
      %v234 = vld [vmem:[%s219 + $0x28] sm:$0xf]
      %v235 = vld [vmem:[%s219 + $0x30] sm:$0xf]
      %v236 = vld [vmem:[%s219 + $0x34] sm:$0xf]
      %v237 = vld [vmem:[%s219 + $0x3c] sm:$0xf]
      %v238 = vld [vmem:[%s219 + $0x40] sm:$0xf]
      %v239 = vld [vmem:[%s219 + $0x48] sm:$0xf]
      %v240 = vld [vmem:[%s219 + $0x4c] sm:$0xf]
      %v241 = vld [vmem:[%s219 + $0x54] sm:$0xf]
      %v242 = vld [vmem:[%s219 + $0x58] sm:$0xf]
      %v243 = vld [vmem:[%s219 + $0x60] sm:$0xf]
      %v244 = vld [vmem:[%s219 + $0x64] sm:$0xf]
      %v245 = vld [vmem:[%s219 + $0x6c] sm:$0xf]
      %v246 = vld [vmem:[%s219 + $0x70] sm:$0xf]
      %v247 = vld [vmem:[%s219 + $0x78] sm:$0xf]
      %v248 = vld [vmem:[%s219 + $0x7c] sm:$0xf]
      %v249 = vld [vmem:[%s219 + $0x84] sm:$0xf]
      %v250 = vld [vmem:[%s219 + $0x88] sm:$0xf]
      %v251 = vld [vmem:[%s219 + $0x90] sm:$0xf]
      %v252 = vld [vmem:[%s219 + $0x94] sm:$0xf]
      %v253 = vld [vmem:[%s219 + $0x9c] sm:$0xf]
      %v254 = vld [vmem:[%s219 + $0xa0] sm:$0xf]
      %v255 = vld [vmem:[%s219 + $0xa8] sm:$0xf]
      %v256 = vld [vmem:[%s219 + $0xac] sm:$0xf]
      %v257 = vld [vmem:[%s219 + $0xb4] sm:$0xf]
      %v258 = vld [vmem:[%s219 + $0xb8] sm:$0xf]
      %v259 = vld [vmem:[%s1] sm:$0x3]
      %v260 = vld [vmem:[%s219 + $0x8] sm:$0x1]
      %v261 = vld [vmem:[%s219 + $0x14] sm:$0x1]
      %v262 = vld [vmem:[%s219 + $0x20] sm:$0x1]
      %v263 = vld [vmem:[%s219 + $0x2c] sm:$0x1]
      %v264 = vld [vmem:[%s219 + $0x38] sm:$0x1]
      %v265 = vld [vmem:[%s219 + $0x44] sm:$0x1]
      %v266 = vld [vmem:[%s219 + $0x50] sm:$0x1]
      %v267 = vld [vmem:[%s219 + $0x5c] sm:$0x1]
      %v268 = vld [vmem:[%s219 + $0x68] sm:$0x1]
      %v269 = vld [vmem:[%s219 + $0x74] sm:$0x1]
      %v270 = vld [vmem:[%s219 + $0x80] sm:$0x1]
      %v271 = vld [vmem:[%s219 + $0x8c] sm:$0x1]
      %v272 = vld [vmem:[%s219 + $0x98] sm:$0x1]
      %v273 = vld [vmem:[%s219 + $0xa4] sm:$0x1]
      %v274 = vld [vmem:[%s219 + $0xb0] sm:$0x1]
      %v275 = vld [vmem:[%s219 + $0xbc] sm:$0x1]
      %vm276 = vsmask.f32 3328
      %vm277 = vsmask.f32 7440
      %vm278 = vmor %vm276, %vm277
      %v280 = vshrl.u32 %v227, 16
      %v282 = vrot.slane %v280, 4
      %v283 = vshll.u32 %v227, 16
      %v285 = vrot.slane %v283, 5
      %v286 = vor.u32 %v282, %v285
      %v287 = vrot.slane %v286, 4
      %v289 = vshll.u32 %v228, 16
      %v291 = vrot.slane %v289, 5
      %v292 = vsel %vm278, %v287, %v291
      %v293 = vshrl.u32 %v228, 16
      %v295 = vrot.slane %v293, 4
      %v296 = vor.u32 %v295, %v291
      %v297 = vrot.slane %v296, 4
      %v299 = vshll.u32 %v260, 16
      %v301 = vrot.slane %v299, 5
      %v302 = vsel %vm278, %v297, %v301
      %v304 = vshrl.u32 %v229, 16
      %v306 = vrot.slane %v304, 4
      %v307 = vshll.u32 %v229, 16
      %v309 = vrot.slane %v307, 5
      %v310 = vor.u32 %v306, %v309
      %v311 = vrot.slane %v310, 4
      %v313 = vshll.u32 %v230, 16
      %v315 = vrot.slane %v313, 5
      %v316 = vsel %vm278, %v311, %v315
      %v317 = vshrl.u32 %v230, 16
      %v319 = vrot.slane %v317, 4
      %v320 = vor.u32 %v319, %v315
      %v321 = vrot.slane %v320, 4
      %v323 = vshll.u32 %v261, 16
      %v325 = vrot.slane %v323, 5
      %v326 = vsel %vm278, %v321, %v325
      %v328 = vshrl.u32 %v231, 16
      %v330 = vrot.slane %v328, 4
      %v331 = vshll.u32 %v231, 16
      %v333 = vrot.slane %v331, 5
      %v334 = vor.u32 %v330, %v333
      %v335 = vrot.slane %v334, 4
      %v337 = vshll.u32 %v232, 16
      %v339 = vrot.slane %v337, 5
      %v340 = vsel %vm278, %v335, %v339
      %v341 = vshrl.u32 %v232, 16
      %v343 = vrot.slane %v341, 4
      %v344 = vor.u32 %v343, %v339
      %v345 = vrot.slane %v344, 4
      %v347 = vshll.u32 %v262, 16
      %v349 = vrot.slane %v347, 5
      %v350 = vsel %vm278, %v345, %v349
      %v352 = vshrl.u32 %v233, 16
      %v354 = vrot.slane %v352, 4
      %v355 = vshll.u32 %v233, 16
      %v357 = vrot.slane %v355, 5
      %v358 = vor.u32 %v354, %v357
      %v359 = vrot.slane %v358, 4
      %v361 = vshll.u32 %v234, 16
      %v363 = vrot.slane %v361, 5
      %v364 = vsel %vm278, %v359, %v363
      %v365 = vshrl.u32 %v234, 16
      %v367 = vrot.slane %v365, 4
      %v368 = vor.u32 %v367, %v363
      %v369 = vrot.slane %v368, 4
      %v371 = vshll.u32 %v263, 16
      %v373 = vrot.slane %v371, 5
      %v374 = vsel %vm278, %v369, %v373
      %v376 = vshrl.u32 %v235, 16
      %v378 = vrot.slane %v376, 4
      %v379 = vshll.u32 %v235, 16
      %v381 = vrot.slane %v379, 5
      %v382 = vor.u32 %v378, %v381
      %v383 = vrot.slane %v382, 4
      %v385 = vshll.u32 %v236, 16
      %v387 = vrot.slane %v385, 5
      %v388 = vsel %vm278, %v383, %v387
      %v389 = vshrl.u32 %v236, 16
      %v391 = vrot.slane %v389, 4
      %v392 = vor.u32 %v391, %v387
      %v393 = vrot.slane %v392, 4
      %v395 = vshll.u32 %v264, 16
      %v397 = vrot.slane %v395, 5
      %v398 = vsel %vm278, %v393, %v397
      %v400 = vshrl.u32 %v237, 16
      %v402 = vrot.slane %v400, 4
      %v403 = vshll.u32 %v237, 16
      %v405 = vrot.slane %v403, 5
      %v406 = vor.u32 %v402, %v405
      %v407 = vrot.slane %v406, 4
      %v409 = vshll.u32 %v238, 16
      %v411 = vrot.slane %v409, 5
      %v412 = vsel %vm278, %v407, %v411
      %v413 = vshrl.u32 %v238, 16
      %v415 = vrot.slane %v413, 4
      %v416 = vor.u32 %v415, %v411
      %v417 = vrot.slane %v416, 4
      %v419 = vshll.u32 %v265, 16
      %v421 = vrot.slane %v419, 5
      %v422 = vsel %vm278, %v417, %v421
      %v424 = vshrl.u32 %v239, 16
      %v426 = vrot.slane %v424, 4
      %v427 = vshll.u32 %v239, 16
      %v429 = vrot.slane %v427, 5
      %v430 = vor.u32 %v426, %v429
      %v431 = vrot.slane %v430, 4
      %v433 = vshll.u32 %v240, 16
      %v435 = vrot.slane %v433, 5
      %v436 = vsel %vm278, %v431, %v435
      %v437 = vshrl.u32 %v240, 16
      %v439 = vrot.slane %v437, 4
      %v440 = vor.u32 %v439, %v435
      %v441 = vrot.slane %v440, 4
      %v443 = vshll.u32 %v266, 16
      %v445 = vrot.slane %v443, 5
      %v446 = vsel %vm278, %v441, %v445
      %v448 = vshrl.u32 %v241, 16
      %v450 = vrot.slane %v448, 4
      %v451 = vshll.u32 %v241, 16
      %v453 = vrot.slane %v451, 5
      %v454 = vor.u32 %v450, %v453
      %v455 = vrot.slane %v454, 4
      %v457 = vshll.u32 %v242, 16
      %v459 = vrot.slane %v457, 5
      %v460 = vsel %vm278, %v455, %v459
      %v461 = vshrl.u32 %v242, 16
      %v463 = vrot.slane %v461, 4
      %v464 = vor.u32 %v463, %v459
      %v465 = vrot.slane %v464, 4
      %v467 = vshll.u32 %v267, 16
      %v469 = vrot.slane %v467, 5
      %v470 = vsel %vm278, %v465, %v469
      %v472 = vshrl.u32 %v243, 16
      %v474 = vrot.slane %v472, 4
      %v475 = vshll.u32 %v243, 16
      %v477 = vrot.slane %v475, 5
      %v478 = vor.u32 %v474, %v477
      %v479 = vrot.slane %v478, 4
      %v481 = vshll.u32 %v244, 16
      %v483 = vrot.slane %v481, 5
      %v484 = vsel %vm278, %v479, %v483
      %v485 = vshrl.u32 %v244, 16
      %v487 = vrot.slane %v485, 4
      %v488 = vor.u32 %v487, %v483
      %v489 = vrot.slane %v488, 4
      %v491 = vshll.u32 %v268, 16
      %v493 = vrot.slane %v491, 5
      %v494 = vsel %vm278, %v489, %v493
      %v496 = vshrl.u32 %v245, 16
      %v498 = vrot.slane %v496, 4
      %v499 = vshll.u32 %v245, 16
      %v501 = vrot.slane %v499, 5
      %v502 = vor.u32 %v498, %v501
      %v503 = vrot.slane %v502, 4
      %v505 = vshll.u32 %v246, 16
      %v507 = vrot.slane %v505, 5
      %v508 = vsel %vm278, %v503, %v507
      %v509 = vshrl.u32 %v246, 16
      %v511 = vrot.slane %v509, 4
      %v512 = vor.u32 %v511, %v507
      %v513 = vrot.slane %v512, 4
      %v515 = vshll.u32 %v269, 16
      %v517 = vrot.slane %v515, 5
      %v518 = vsel %vm278, %v513, %v517
      %v520 = vshrl.u32 %v247, 16
      %v522 = vrot.slane %v520, 4
      %v523 = vshll.u32 %v247, 16
      %v525 = vrot.slane %v523, 5
      %v526 = vor.u32 %v522, %v525
      %v527 = vrot.slane %v526, 4
      %v529 = vshll.u32 %v248, 16
      %v531 = vrot.slane %v529, 5
      %v532 = vsel %vm278, %v527, %v531
      %v533 = vshrl.u32 %v248, 16
      %v535 = vrot.slane %v533, 4
      %v536 = vor.u32 %v535, %v531
      %v537 = vrot.slane %v536, 4
      %v539 = vshll.u32 %v270, 16
      %v541 = vrot.slane %v539, 5
      %v542 = vsel %vm278, %v537, %v541
      %v544 = vshrl.u32 %v249, 16
      %v546 = vrot.slane %v544, 4
      %v547 = vshll.u32 %v249, 16
      %v549 = vrot.slane %v547, 5
      %v550 = vor.u32 %v546, %v549
      %v551 = vrot.slane %v550, 4
      %v553 = vshll.u32 %v250, 16
      %v555 = vrot.slane %v553, 5
      %v556 = vsel %vm278, %v551, %v555
      %v557 = vshrl.u32 %v250, 16
      %v559 = vrot.slane %v557, 4
      %v560 = vor.u32 %v559, %v555
      %v561 = vrot.slane %v560, 4
      %v563 = vshll.u32 %v271, 16
      %v565 = vrot.slane %v563, 5
      %v566 = vsel %vm278, %v561, %v565
      %v568 = vshrl.u32 %v251, 16
      %v570 = vrot.slane %v568, 4
      %v571 = vshll.u32 %v251, 16
      %v573 = vrot.slane %v571, 5
      %v574 = vor.u32 %v570, %v573
      %v575 = vrot.slane %v574, 4
      %v577 = vshll.u32 %v252, 16
      %v579 = vrot.slane %v577, 5
      %v580 = vsel %vm278, %v575, %v579
      %v581 = vshrl.u32 %v252, 16
      %v583 = vrot.slane %v581, 4
      %v584 = vor.u32 %v583, %v579
      %v585 = vrot.slane %v584, 4
      %v587 = vshll.u32 %v272, 16
      %v589 = vrot.slane %v587, 5
      %v590 = vsel %vm278, %v585, %v589
      %v592 = vshrl.u32 %v253, 16
      %v594 = vrot.slane %v592, 4
      %v595 = vshll.u32 %v253, 16
      %v597 = vrot.slane %v595, 5
      %v598 = vor.u32 %v594, %v597
      %v599 = vrot.slane %v598, 4
      %v601 = vshll.u32 %v254, 16
      %v603 = vrot.slane %v601, 5
      %v604 = vsel %vm278, %v599, %v603
      %v605 = vshrl.u32 %v254, 16
      %v607 = vrot.slane %v605, 4
      %v608 = vor.u32 %v607, %v603
      %v609 = vrot.slane %v608, 4
      %v611 = vshll.u32 %v273, 16
      %v613 = vrot.slane %v611, 5
      %v614 = vsel %vm278, %v609, %v613
      %v616 = vshrl.u32 %v255, 16
      %v618 = vrot.slane %v616, 4
      %v619 = vshll.u32 %v255, 16
      %v621 = vrot.slane %v619, 5
      %v622 = vor.u32 %v618, %v621
      %v623 = vrot.slane %v622, 4
      %v625 = vshll.u32 %v256, 16
      %v627 = vrot.slane %v625, 5
      %v628 = vsel %vm278, %v623, %v627
      %v629 = vshrl.u32 %v256, 16
      %v631 = vrot.slane %v629, 4
      %v632 = vor.u32 %v631, %v627
      %v633 = vrot.slane %v632, 4
      %v635 = vshll.u32 %v274, 16
      %v637 = vrot.slane %v635, 5
      %v638 = vsel %vm278, %v633, %v637
      %v640 = vshrl.u32 %v257, 16
      %v642 = vrot.slane %v640, 4
      %v643 = vshll.u32 %v257, 16
      %v645 = vrot.slane %v643, 5
      %v646 = vor.u32 %v642, %v645
      %v647 = vrot.slane %v646, 4
      %v649 = vshll.u32 %v258, 16
      %v651 = vrot.slane %v649, 5
      %v652 = vsel %vm278, %v647, %v651
      %v653 = vshrl.u32 %v258, 16
      %v655 = vrot.slane %v653, 4
      %v656 = vor.u32 %v655, %v651
      %v657 = vrot.slane %v656, 4
      %v659 = vshll.u32 %v275, 16
      %v661 = vrot.slane %v659, 5
      %v662 = vsel %vm278, %v657, %v661
      %s663 = scalar_lea.vmem %s1, 2
      %v664 = vld [vmem:[%s663] sm:$0x3]
      %v665 = vunpack.c.l.b16 %v292
      %v666 = vunpack.c.l.b16 %v302
      %v667 = vunpack.c.l.b16 %v316
      %v668 = vunpack.c.l.b16 %v326
      %v669 = vunpack.c.l.b16 %v340
      %v670 = vunpack.c.l.b16 %v350
      %v671 = vunpack.c.l.b16 %v364
      %v672 = vunpack.c.l.b16 %v374
      %v673 = vunpack.c.l.b16 %v388
      %v674 = vunpack.c.l.b16 %v398
      %v675 = vunpack.c.l.b16 %v412
      %v676 = vunpack.c.l.b16 %v422
      %v677 = vunpack.c.l.b16 %v436
      %v678 = vunpack.c.l.b16 %v446
      %v679 = vunpack.c.l.b16 %v460
      %v680 = vunpack.c.l.b16 %v470
      %v681 = vunpack.c.l.b16 %v484
      %v682 = vunpack.c.l.b16 %v494
      %v683 = vunpack.c.l.b16 %v508
      %v684 = vunpack.c.l.b16 %v518
      %v685 = vunpack.c.l.b16 %v532
      %v686 = vunpack.c.l.b16 %v542
      %v687 = vunpack.c.l.b16 %v556
      %v688 = vunpack.c.l.b16 %v566
      %v689 = vunpack.c.l.b16 %v580
      %v690 = vunpack.c.l.b16 %v590
      %v691 = vunpack.c.l.b16 %v604
      %v692 = vunpack.c.l.b16 %v614
      %v693 = vunpack.c.l.b16 %v628
      %v694 = vunpack.c.l.b16 %v638
      %v695 = vunpack.c.l.b16 %v652
      %v696 = vunpack.c.l.b16 %v662
      %v697 = vpack.c.b16 %v666, %v665
      %v698 = vpack.c.b16 %v668, %v667
      %v699 = vpack.c.b16 %v670, %v669
      %v700 = vpack.c.b16 %v672, %v671
      %v701 = vpack.c.b16 %v674, %v673
      %v702 = vpack.c.b16 %v676, %v675
      %v703 = vpack.c.b16 %v678, %v677
      %v704 = vpack.c.b16 %v680, %v679
      %v705 = vpack.c.b16 %v682, %v681
      %v706 = vpack.c.b16 %v684, %v683
      %v707 = vpack.c.b16 %v686, %v685
      %v708 = vpack.c.b16 %v688, %v687
      %v709 = vpack.c.b16 %v690, %v689
      %v710 = vpack.c.b16 %v692, %v691
      %v711 = vpack.c.b16 %v694, %v693
      %v712 = vpack.c.b16 %v696, %v695
      %vm713 = vcmask 31744
      %v715 = vsel %vm713, %v697, 0
      %v718 = vsel %vm713, %v698, 0
      %v721 = vsel %vm713, %v699, 0
      %v724 = vsel %vm713, %v700, 0
      %v727 = vsel %vm713, %v701, 0
      %v730 = vsel %vm713, %v702, 0
      %v733 = vsel %vm713, %v703, 0
      %v736 = vsel %vm713, %v704, 0
      %v739 = vsel %vm713, %v705, 0
      %v742 = vsel %vm713, %v706, 0
      %v745 = vsel %vm713, %v707, 0
      %v748 = vsel %vm713, %v708, 0
      %v751 = vsel %vm713, %v709, 0
      %v754 = vsel %vm713, %v710, 0
      %v757 = vsel %vm713, %v711, 0
      %v760 = vsel %vm713, %v712, 0
      %vm762 = vcmask 1041408
      %v764 = vsel %vm762, %v664, 0
      %766 = vmatpush.bf16.msra.mxu0 0
      %767 = vmatpush.bf16.msra.mxu0 0
      %768 = vmatpush.bf16.msra.mxu0 0
      %769 = vmatpush.bf16.msra.mxu0 0
      %770 = vmatpush.bf16.msra.mxu0 0
      %771 = vmatpush.bf16.msra.mxu0 0
      %772 = vmatpush.bf16.msra.mxu0 0
      %773 = vmatpush.bf16.msra.mxu0 %v764
      %774 = vmatmul.bf16.gmra.mxu0 %v715
      %v775 = vpop.f32.mrf.mxu0
      %v776 = vadd.f32 0.0, %v775
      %v777 = vpop.f32.mrf.mxu0
      %v778 = vadd.f32 0.0, %v777
      %779 = vmatmul.bf16.gmra.mxu0 %v718
      %v780 = vpop.f32.mrf.mxu0
      %v781 = vadd.f32 0.0, %v780
      %v782 = vpop.f32.mrf.mxu0
      %v783 = vadd.f32 0.0, %v782
      %784 = vmatmul.bf16.gmra.mxu0 %v721
      %v785 = vpop.f32.mrf.mxu0
      %v786 = vadd.f32 0.0, %v785
      %v787 = vpop.f32.mrf.mxu0
      %v788 = vadd.f32 0.0, %v787
      %789 = vmatmul.bf16.gmra.mxu0 %v724
      %v790 = vpop.f32.mrf.mxu0
      %v791 = vadd.f32 0.0, %v790
      %v792 = vpop.f32.mrf.mxu0
      %v793 = vadd.f32 0.0, %v792
      %794 = vmatmul.bf16.gmra.mxu0 %v727
      %v795 = vpop.f32.mrf.mxu0
      %v796 = vadd.f32 0.0, %v795
      %v797 = vpop.f32.mrf.mxu0
      %v798 = vadd.f32 0.0, %v797
      %799 = vmatmul.bf16.gmra.mxu0 %v730
      %v800 = vpop.f32.mrf.mxu0
      %v801 = vadd.f32 0.0, %v800
      %v802 = vpop.f32.mrf.mxu0
      %v803 = vadd.f32 0.0, %v802
      %804 = vmatmul.bf16.gmra.mxu0 %v733
      %v805 = vpop.f32.mrf.mxu0
      %v806 = vadd.f32 0.0, %v805
      %v807 = vpop.f32.mrf.mxu0
      %v808 = vadd.f32 0.0, %v807
      %809 = vmatmul.bf16.gmra.mxu0 %v736
      %v810 = vpop.f32.mrf.mxu0
      %v811 = vadd.f32 0.0, %v810
      %v812 = vpop.f32.mrf.mxu0
      %v813 = vadd.f32 0.0, %v812
      %814 = vmatmul.bf16.gmra.mxu0 %v739
      %v815 = vpop.f32.mrf.mxu0
      %v816 = vadd.f32 0.0, %v815
      %v817 = vpop.f32.mrf.mxu0
      %v818 = vadd.f32 0.0, %v817
      %819 = vmatmul.bf16.gmra.mxu0 %v742
      %v820 = vpop.f32.mrf.mxu0
      %v821 = vadd.f32 0.0, %v820
      %v822 = vpop.f32.mrf.mxu0
      %v823 = vadd.f32 0.0, %v822
      %824 = vmatmul.bf16.gmra.mxu0 %v745
      %v825 = vpop.f32.mrf.mxu0
      %v826 = vadd.f32 0.0, %v825
      %v827 = vpop.f32.mrf.mxu0
      %v828 = vadd.f32 0.0, %v827
      %829 = vmatmul.bf16.gmra.mxu0 %v748
      %v830 = vpop.f32.mrf.mxu0
      %v831 = vadd.f32 0.0, %v830
      %v832 = vpop.f32.mrf.mxu0
      %v833 = vadd.f32 0.0, %v832
      %834 = vmatmul.bf16.gmra.mxu0 %v751
      %v835 = vpop.f32.mrf.mxu0
      %v836 = vadd.f32 0.0, %v835
      %v837 = vpop.f32.mrf.mxu0
      %v838 = vadd.f32 0.0, %v837
      %839 = vmatmul.bf16.gmra.mxu0 %v754
      %v840 = vpop.f32.mrf.mxu0
      %v841 = vadd.f32 0.0, %v840
      %v842 = vpop.f32.mrf.mxu0
      %v843 = vadd.f32 0.0, %v842
      %844 = vmatmul.bf16.gmra.mxu0 %v757
      %v845 = vpop.f32.mrf.mxu0
      %v846 = vadd.f32 0.0, %v845
      %v847 = vpop.f32.mrf.mxu0
      %v848 = vadd.f32 0.0, %v847
      %849 = vmatmul.bf16.gmra.mxu0 %v760
      %v850 = vpop.f32.mrf.mxu0
      %v851 = vadd.f32 0.0, %v850
      %v852 = vpop.f32.mrf.mxu0
      %v853 = vadd.f32 0.0, %v852
      %854 = vdwg.mxu0
      %v887 = vunpack.c.l.b16 %v227
      %v888 = vunpack.c.l.b16 %v228
      %v889 = vunpack.c.l.b16 %v229
      %v890 = vunpack.c.l.b16 %v230
      %v891 = vunpack.c.l.b16 %v231
      %v892 = vunpack.c.l.b16 %v232
      %v893 = vunpack.c.l.b16 %v233
      %v894 = vunpack.c.l.b16 %v234
      %v895 = vunpack.c.l.b16 %v235
      %v896 = vunpack.c.l.b16 %v236
      %v897 = vunpack.c.l.b16 %v237
      %v898 = vunpack.c.l.b16 %v238
      %v899 = vunpack.c.l.b16 %v239
      %v900 = vunpack.c.l.b16 %v240
      %v901 = vunpack.c.l.b16 %v241
      %v902 = vunpack.c.l.b16 %v242
      %v903 = vunpack.c.l.b16 %v243
      %v904 = vunpack.c.l.b16 %v244
      %v905 = vunpack.c.l.b16 %v245
      %v906 = vunpack.c.l.b16 %v246
      %v907 = vunpack.c.l.b16 %v247
      %v908 = vunpack.c.l.b16 %v248
      %v909 = vunpack.c.l.b16 %v249
      %v910 = vunpack.c.l.b16 %v250
      %v911 = vunpack.c.l.b16 %v251
      %v912 = vunpack.c.l.b16 %v252
      %v913 = vunpack.c.l.b16 %v253
      %v914 = vunpack.c.l.b16 %v254
      %v915 = vunpack.c.l.b16 %v255
      %v916 = vunpack.c.l.b16 %v256
      %v917 = vunpack.c.l.b16 %v257
      %v918 = vunpack.c.l.b16 %v258
      %v919 = vpack.c.b16 %v888, %v887
      %v920 = vpack.c.b16 %v890, %v889
      %v921 = vpack.c.b16 %v892, %v891
      %v922 = vpack.c.b16 %v894, %v893
      %v923 = vpack.c.b16 %v896, %v895
      %v924 = vpack.c.b16 %v898, %v897
      %v925 = vpack.c.b16 %v900, %v899
      %v926 = vpack.c.b16 %v902, %v901
      %v927 = vpack.c.b16 %v904, %v903
      %v928 = vpack.c.b16 %v906, %v905
      %v929 = vpack.c.b16 %v908, %v907
      %v930 = vpack.c.b16 %v910, %v909
      %v931 = vpack.c.b16 %v912, %v911
      %v932 = vpack.c.b16 %v914, %v913
      %v933 = vpack.c.b16 %v916, %v915
      %v934 = vpack.c.b16 %v918, %v917
      %v936 = vsel %vm713, %v919, 0
      %v939 = vsel %vm713, %v920, 0
      %v942 = vsel %vm713, %v921, 0
      %v945 = vsel %vm713, %v922, 0
      %v948 = vsel %vm713, %v923, 0
      %v951 = vsel %vm713, %v924, 0
      %v954 = vsel %vm713, %v925, 0
      %v957 = vsel %vm713, %v926, 0
      %v960 = vsel %vm713, %v927, 0
      %v963 = vsel %vm713, %v928, 0
      %v966 = vsel %vm713, %v929, 0
      %v969 = vsel %vm713, %v930, 0
      %v972 = vsel %vm713, %v931, 0
      %v975 = vsel %vm713, %v932, 0
      %v978 = vsel %vm713, %v933, 0
      %v981 = vsel %vm713, %v934, 0
      %v984 = vsel %vm762, %v259, 0
      %986 = vmatpush.bf16.msra.mxu0 0
      %987 = vmatpush.bf16.msra.mxu0 0
      %988 = vmatpush.bf16.msra.mxu0 0
      %989 = vmatpush.bf16.msra.mxu0 0
      %990 = vmatpush.bf16.msra.mxu0 0
      %991 = vmatpush.bf16.msra.mxu0 0
      %992 = vmatpush.bf16.msra.mxu0 0
      %993 = vmatpush.bf16.msra.mxu0 %v984
      %994 = vmatmul.bf16.gmra.mxu0 %v936
      %v995 = vpop.f32.mrf.mxu0
      %v996 = vadd.f32 %v776, %v995
      %v997 = vpop.f32.mrf.mxu0
      %v998 = vadd.f32 %v778, %v997
      %999 = vmatmul.bf16.gmra.mxu0 %v939
      %v1000 = vpop.f32.mrf.mxu0
      %v1001 = vadd.f32 %v781, %v1000
      %v1002 = vpop.f32.mrf.mxu0
      %v1003 = vadd.f32 %v783, %v1002
      %1004 = vmatmul.bf16.gmra.mxu0 %v942
      %v1005 = vpop.f32.mrf.mxu0
      %v1006 = vadd.f32 %v786, %v1005
      %v1007 = vpop.f32.mrf.mxu0
      %v1008 = vadd.f32 %v788, %v1007
      %1009 = vmatmul.bf16.gmra.mxu0 %v945
      %v1010 = vpop.f32.mrf.mxu0
      %v1011 = vadd.f32 %v791, %v1010
      %v1012 = vpop.f32.mrf.mxu0
      %v1013 = vadd.f32 %v793, %v1012
      %1014 = vmatmul.bf16.gmra.mxu0 %v948
      %v1015 = vpop.f32.mrf.mxu0
      %v1016 = vadd.f32 %v796, %v1015
      %v1017 = vpop.f32.mrf.mxu0
      %v1018 = vadd.f32 %v798, %v1017
      %1019 = vmatmul.bf16.gmra.mxu0 %v951
      %v1020 = vpop.f32.mrf.mxu0
      %v1021 = vadd.f32 %v801, %v1020
      %v1022 = vpop.f32.mrf.mxu0
      %v1023 = vadd.f32 %v803, %v1022
      %1024 = vmatmul.bf16.gmra.mxu0 %v954
      %v1025 = vpop.f32.mrf.mxu0
      %v1026 = vadd.f32 %v806, %v1025
      %v1027 = vpop.f32.mrf.mxu0
      %v1028 = vadd.f32 %v808, %v1027
      %1029 = vmatmul.bf16.gmra.mxu0 %v957
      %v1030 = vpop.f32.mrf.mxu0
      %v1031 = vadd.f32 %v811, %v1030
      %v1032 = vpop.f32.mrf.mxu0
      %v1033 = vadd.f32 %v813, %v1032
      %1034 = vmatmul.bf16.gmra.mxu0 %v960
      %v1035 = vpop.f32.mrf.mxu0
      %v1036 = vadd.f32 %v816, %v1035
      %v1037 = vpop.f32.mrf.mxu0
      %v1038 = vadd.f32 %v818, %v1037
      %1039 = vmatmul.bf16.gmra.mxu0 %v963
      %v1040 = vpop.f32.mrf.mxu0
      %v1041 = vadd.f32 %v821, %v1040
      %v1042 = vpop.f32.mrf.mxu0
      %v1043 = vadd.f32 %v823, %v1042
      %1044 = vmatmul.bf16.gmra.mxu0 %v966
      %v1045 = vpop.f32.mrf.mxu0
      %v1046 = vadd.f32 %v826, %v1045
      %v1047 = vpop.f32.mrf.mxu0
      %v1048 = vadd.f32 %v828, %v1047
      %1049 = vmatmul.bf16.gmra.mxu0 %v969
      %v1050 = vpop.f32.mrf.mxu0
      %v1051 = vadd.f32 %v831, %v1050
      %v1052 = vpop.f32.mrf.mxu0
      %v1053 = vadd.f32 %v833, %v1052
      %1054 = vmatmul.bf16.gmra.mxu0 %v972
      %v1055 = vpop.f32.mrf.mxu0
      %v1056 = vadd.f32 %v836, %v1055
      %v1057 = vpop.f32.mrf.mxu0
      %v1058 = vadd.f32 %v838, %v1057
      %1059 = vmatmul.bf16.gmra.mxu0 %v975
      %v1060 = vpop.f32.mrf.mxu0
      %v1061 = vadd.f32 %v841, %v1060
      %v1062 = vpop.f32.mrf.mxu0
      %v1063 = vadd.f32 %v843, %v1062
      %1064 = vmatmul.bf16.gmra.mxu0 %v978
      %v1065 = vpop.f32.mrf.mxu0
      %v1066 = vadd.f32 %v846, %v1065
      %v1067 = vpop.f32.mrf.mxu0
      %v1068 = vadd.f32 %v848, %v1067
      %1069 = vmatmul.bf16.gmra.mxu0 %v981
      %v1070 = vpop.f32.mrf.mxu0
      %v1071 = vadd.f32 %v851, %v1070
      %v1072 = vpop.f32.mrf.mxu0
      %v1073 = vadd.f32 %v853, %v1072
      %1074 = vdwg.mxu0
      %v1075 = vld [vmem:[%s219] sm:$0xe]
      %v1076 = vld [vmem:[%s219 + $0xc] sm:$0xe]
      %v1077 = vld [vmem:[%s219 + $0x18] sm:$0xe]
      %v1078 = vld [vmem:[%s219 + $0x24] sm:$0xe]
      %v1079 = vld [vmem:[%s219 + $0x30] sm:$0xe]
      %v1080 = vld [vmem:[%s219 + $0x3c] sm:$0xe]
      %v1081 = vld [vmem:[%s219 + $0x48] sm:$0xe]
      %v1082 = vld [vmem:[%s219 + $0x54] sm:$0xe]
      %v1083 = vld [vmem:[%s219 + $0x60] sm:$0xe]
      %v1084 = vld [vmem:[%s219 + $0x6c] sm:$0xe]
      %v1085 = vld [vmem:[%s219 + $0x78] sm:$0xe]
      %v1086 = vld [vmem:[%s219 + $0x84] sm:$0xe]
      %v1087 = vld [vmem:[%s219 + $0x90] sm:$0xe]
      %v1088 = vld [vmem:[%s219 + $0x9c] sm:$0xe]
      %v1089 = vld [vmem:[%s219 + $0xa8] sm:$0xe]
      %v1090 = vld [vmem:[%s219 + $0xb4] sm:$0xe]
      %vm1123 = vcmask 1042432
      %vm1124 = vcmask 1046532
      %vm1125 = vmor %vm1123, %vm1124
      %v1126 = vrot.slane %v1075, 5
      %v1127 = vrot.slane %v1126, 4
      %v1128 = vrot.slane %v228, 5
      %v1129 = vsel %vm1125, %v1127, %v1128
      %v1130 = vrot.slane %v1128, 4
      %v1131 = vrot.slane %v260, 5
      %v1132 = vsel %vm1125, %v1130, %v1131
      %v1133 = vrot.slane %v1076, 5
      %v1134 = vrot.slane %v1133, 4
      %v1135 = vrot.slane %v230, 5
      %v1136 = vsel %vm1125, %v1134, %v1135
      %v1137 = vrot.slane %v1135, 4
      %v1138 = vrot.slane %v261, 5
      %v1139 = vsel %vm1125, %v1137, %v1138
      %v1140 = vrot.slane %v1077, 5
      %v1141 = vrot.slane %v1140, 4
      %v1142 = vrot.slane %v232, 5
      %v1143 = vsel %vm1125, %v1141, %v1142
      %v1144 = vrot.slane %v1142, 4
      %v1145 = vrot.slane %v262, 5
      %v1146 = vsel %vm1125, %v1144, %v1145
      %v1147 = vrot.slane %v1078, 5
      %v1148 = vrot.slane %v1147, 4
      %v1149 = vrot.slane %v234, 5
      %v1150 = vsel %vm1125, %v1148, %v1149
      %v1151 = vrot.slane %v1149, 4
      %v1152 = vrot.slane %v263, 5
      %v1153 = vsel %vm1125, %v1151, %v1152
      %v1154 = vrot.slane %v1079, 5
      %v1155 = vrot.slane %v1154, 4
      %v1156 = vrot.slane %v236, 5
      %v1157 = vsel %vm1125, %v1155, %v1156
      %v1158 = vrot.slane %v1156, 4
      %v1159 = vrot.slane %v264, 5
      %v1160 = vsel %vm1125, %v1158, %v1159
      %v1161 = vrot.slane %v1080, 5
      %v1162 = vrot.slane %v1161, 4
      %v1163 = vrot.slane %v238, 5
      %v1164 = vsel %vm1125, %v1162, %v1163
      %v1165 = vrot.slane %v1163, 4
      %v1166 = vrot.slane %v265, 5
      %v1167 = vsel %vm1125, %v1165, %v1166
      %v1168 = vrot.slane %v1081, 5
      %v1169 = vrot.slane %v1168, 4
      %v1170 = vrot.slane %v240, 5
      %v1171 = vsel %vm1125, %v1169, %v1170
      %v1172 = vrot.slane %v1170, 4
      %v1173 = vrot.slane %v266, 5
      %v1174 = vsel %vm1125, %v1172, %v1173
      %v1175 = vrot.slane %v1082, 5
      %v1176 = vrot.slane %v1175, 4
      %v1177 = vrot.slane %v242, 5
      %v1178 = vsel %vm1125, %v1176, %v1177
      %v1179 = vrot.slane %v1177, 4
      %v1180 = vrot.slane %v267, 5
      %v1181 = vsel %vm1125, %v1179, %v1180
      %v1182 = vrot.slane %v1083, 5
      %v1183 = vrot.slane %v1182, 4
      %v1184 = vrot.slane %v244, 5
      %v1185 = vsel %vm1125, %v1183, %v1184
      %v1186 = vrot.slane %v1184, 4
      %v1187 = vrot.slane %v268, 5
      %v1188 = vsel %vm1125, %v1186, %v1187
      %v1189 = vrot.slane %v1084, 5
      %v1190 = vrot.slane %v1189, 4
      %v1191 = vrot.slane %v246, 5
      %v1192 = vsel %vm1125, %v1190, %v1191
      %v1193 = vrot.slane %v1191, 4
      %v1194 = vrot.slane %v269, 5
      %v1195 = vsel %vm1125, %v1193, %v1194
      %v1196 = vrot.slane %v1085, 5
      %v1197 = vrot.slane %v1196, 4
      %v1198 = vrot.slane %v248, 5
      %v1199 = vsel %vm1125, %v1197, %v1198
      %v1200 = vrot.slane %v1198, 4
      %v1201 = vrot.slane %v270, 5
      %v1202 = vsel %vm1125, %v1200, %v1201
      %v1203 = vrot.slane %v1086, 5
      %v1204 = vrot.slane %v1203, 4
      %v1205 = vrot.slane %v250, 5
      %v1206 = vsel %vm1125, %v1204, %v1205
      %v1207 = vrot.slane %v1205, 4
      %v1208 = vrot.slane %v271, 5
      %v1209 = vsel %vm1125, %v1207, %v1208
      %v1210 = vrot.slane %v1087, 5
      %v1211 = vrot.slane %v1210, 4
      %v1212 = vrot.slane %v252, 5
      %v1213 = vsel %vm1125, %v1211, %v1212
      %v1214 = vrot.slane %v1212, 4
      %v1215 = vrot.slane %v272, 5
      %v1216 = vsel %vm1125, %v1214, %v1215
      %v1217 = vrot.slane %v1088, 5
      %v1218 = vrot.slane %v1217, 4
      %v1219 = vrot.slane %v254, 5
      %v1220 = vsel %vm1125, %v1218, %v1219
      %v1221 = vrot.slane %v1219, 4
      %v1222 = vrot.slane %v273, 5
      %v1223 = vsel %vm1125, %v1221, %v1222
      %v1224 = vrot.slane %v1089, 5
      %v1225 = vrot.slane %v1224, 4
      %v1226 = vrot.slane %v256, 5
      %v1227 = vsel %vm1125, %v1225, %v1226
      %v1228 = vrot.slane %v1226, 4
      %v1229 = vrot.slane %v274, 5
      %v1230 = vsel %vm1125, %v1228, %v1229
      %v1231 = vrot.slane %v1090, 5
      %v1232 = vrot.slane %v1231, 4
      %v1233 = vrot.slane %v258, 5
      %v1234 = vsel %vm1125, %v1232, %v1233
      %v1235 = vrot.slane %v1233, 4
      %v1236 = vrot.slane %v275, 5
      %v1237 = vsel %vm1125, %v1235, %v1236
      %s1238 = scalar_lea.vmem %s1, 4
      %v1239 = vld [vmem:[%s1238] sm:$0x3]
      %v1240 = vunpack.c.l.b16 %v1129
      %v1241 = vunpack.c.l.b16 %v1132
      %v1242 = vunpack.c.l.b16 %v1136
      %v1243 = vunpack.c.l.b16 %v1139
      %v1244 = vunpack.c.l.b16 %v1143
      %v1245 = vunpack.c.l.b16 %v1146
      %v1246 = vunpack.c.l.b16 %v1150
      %v1247 = vunpack.c.l.b16 %v1153
      %v1248 = vunpack.c.l.b16 %v1157
      %v1249 = vunpack.c.l.b16 %v1160
      %v1250 = vunpack.c.l.b16 %v1164
      %v1251 = vunpack.c.l.b16 %v1167
      %v1252 = vunpack.c.l.b16 %v1171
      %v1253 = vunpack.c.l.b16 %v1174
      %v1254 = vunpack.c.l.b16 %v1178
      %v1255 = vunpack.c.l.b16 %v1181
      %v1256 = vunpack.c.l.b16 %v1185
      %v1257 = vunpack.c.l.b16 %v1188
      %v1258 = vunpack.c.l.b16 %v1192
      %v1259 = vunpack.c.l.b16 %v1195
      %v1260 = vunpack.c.l.b16 %v1199
      %v1261 = vunpack.c.l.b16 %v1202
      %v1262 = vunpack.c.l.b16 %v1206
      %v1263 = vunpack.c.l.b16 %v1209
      %v1264 = vunpack.c.l.b16 %v1213
      %v1265 = vunpack.c.l.b16 %v1216
      %v1266 = vunpack.c.l.b16 %v1220
      %v1267 = vunpack.c.l.b16 %v1223
      %v1268 = vunpack.c.l.b16 %v1227
      %v1269 = vunpack.c.l.b16 %v1230
      %v1270 = vunpack.c.l.b16 %v1234
      %v1271 = vunpack.c.l.b16 %v1237
      %v1272 = vpack.c.b16 %v1241, %v1240
      %v1273 = vpack.c.b16 %v1243, %v1242
      %v1274 = vpack.c.b16 %v1245, %v1244
      %v1275 = vpack.c.b16 %v1247, %v1246
      %v1276 = vpack.c.b16 %v1249, %v1248
      %v1277 = vpack.c.b16 %v1251, %v1250
      %v1278 = vpack.c.b16 %v1253, %v1252
      %v1279 = vpack.c.b16 %v1255, %v1254
      %v1280 = vpack.c.b16 %v1257, %v1256
      %v1281 = vpack.c.b16 %v1259, %v1258
      %v1282 = vpack.c.b16 %v1261, %v1260
      %v1283 = vpack.c.b16 %v1263, %v1262
      %v1284 = vpack.c.b16 %v1265, %v1264
      %v1285 = vpack.c.b16 %v1267, %v1266
      %v1286 = vpack.c.b16 %v1269, %v1268
      %v1287 = vpack.c.b16 %v1271, %v1270
      %v1289 = vsel %vm713, %v1272, 0
      %v1292 = vsel %vm713, %v1273, 0
      %v1295 = vsel %vm713, %v1274, 0
      %v1298 = vsel %vm713, %v1275, 0
      %v1301 = vsel %vm713, %v1276, 0
      %v1304 = vsel %vm713, %v1277, 0
      %v1307 = vsel %vm713, %v1278, 0
      %v1310 = vsel %vm713, %v1279, 0
      %v1313 = vsel %vm713, %v1280, 0
      %v1316 = vsel %vm713, %v1281, 0
      %v1319 = vsel %vm713, %v1282, 0
      %v1322 = vsel %vm713, %v1283, 0
      %v1325 = vsel %vm713, %v1284, 0
      %v1328 = vsel %vm713, %v1285, 0
      %v1331 = vsel %vm713, %v1286, 0
      %v1334 = vsel %vm713, %v1287, 0
      %v1337 = vsel %vm762, %v1239, 0
      %1339 = vmatpush.bf16.msra.mxu0 0
      %1340 = vmatpush.bf16.msra.mxu0 0
      %1341 = vmatpush.bf16.msra.mxu0 0
      %1342 = vmatpush.bf16.msra.mxu0 0
      %1343 = vmatpush.bf16.msra.mxu0 0
      %1344 = vmatpush.bf16.msra.mxu0 0
      %1345 = vmatpush.bf16.msra.mxu0 0
      %1346 = vmatpush.bf16.msra.mxu0 %v1337
      %1347 = vmatmul.bf16.gmra.mxu0 %v1289
      %v1348 = vpop.f32.mrf.mxu0
      %v1349 = vadd.f32 0.0, %v1348
      %v1350 = vpop.f32.mrf.mxu0
      %v1351 = vadd.f32 0.0, %v1350
      %1352 = vmatmul.bf16.gmra.mxu0 %v1292
      %v1353 = vpop.f32.mrf.mxu0
      %v1354 = vadd.f32 0.0, %v1353
      %v1355 = vpop.f32.mrf.mxu0
      %v1356 = vadd.f32 0.0, %v1355
      %1357 = vmatmul.bf16.gmra.mxu0 %v1295
      %v1358 = vpop.f32.mrf.mxu0
      %v1359 = vadd.f32 0.0, %v1358
      %v1360 = vpop.f32.mrf.mxu0
      %v1361 = vadd.f32 0.0, %v1360
      %1362 = vmatmul.bf16.gmra.mxu0 %v1298
      %v1363 = vpop.f32.mrf.mxu0
      %v1364 = vadd.f32 0.0, %v1363
      %v1365 = vpop.f32.mrf.mxu0
      %v1366 = vadd.f32 0.0, %v1365
      %1367 = vmatmul.bf16.gmra.mxu0 %v1301
      %v1368 = vpop.f32.mrf.mxu0
      %v1369 = vadd.f32 0.0, %v1368
      %v1370 = vpop.f32.mrf.mxu0
      %v1371 = vadd.f32 0.0, %v1370
      %1372 = vmatmul.bf16.gmra.mxu0 %v1304
      %v1373 = vpop.f32.mrf.mxu0
      %v1374 = vadd.f32 0.0, %v1373
      %v1375 = vpop.f32.mrf.mxu0
      %v1376 = vadd.f32 0.0, %v1375
      %1377 = vmatmul.bf16.gmra.mxu0 %v1307
      %v1378 = vpop.f32.mrf.mxu0
      %v1379 = vadd.f32 0.0, %v1378
      %v1380 = vpop.f32.mrf.mxu0
      %v1381 = vadd.f32 0.0, %v1380
      %1382 = vmatmul.bf16.gmra.mxu0 %v1310
      %v1383 = vpop.f32.mrf.mxu0
      %v1384 = vadd.f32 0.0, %v1383
      %v1385 = vpop.f32.mrf.mxu0
      %v1386 = vadd.f32 0.0, %v1385
      %1387 = vmatmul.bf16.gmra.mxu0 %v1313
      %v1388 = vpop.f32.mrf.mxu0
      %v1389 = vadd.f32 0.0, %v1388
      %v1390 = vpop.f32.mrf.mxu0
      %v1391 = vadd.f32 0.0, %v1390
      %1392 = vmatmul.bf16.gmra.mxu0 %v1316
      %v1393 = vpop.f32.mrf.mxu0
      %v1394 = vadd.f32 0.0, %v1393
      %v1395 = vpop.f32.mrf.mxu0
      %v1396 = vadd.f32 0.0, %v1395
      %1397 = vmatmul.bf16.gmra.mxu0 %v1319
      %v1398 = vpop.f32.mrf.mxu0
      %v1399 = vadd.f32 0.0, %v1398
      %v1400 = vpop.f32.mrf.mxu0
      %v1401 = vadd.f32 0.0, %v1400
      %1402 = vmatmul.bf16.gmra.mxu0 %v1322
      %v1403 = vpop.f32.mrf.mxu0
      %v1404 = vadd.f32 0.0, %v1403
      %v1405 = vpop.f32.mrf.mxu0
      %v1406 = vadd.f32 0.0, %v1405
      %1407 = vmatmul.bf16.gmra.mxu0 %v1325
      %v1408 = vpop.f32.mrf.mxu0
      %v1409 = vadd.f32 0.0, %v1408
      %v1410 = vpop.f32.mrf.mxu0
      %v1411 = vadd.f32 0.0, %v1410
      %1412 = vmatmul.bf16.gmra.mxu0 %v1328
      %v1413 = vpop.f32.mrf.mxu0
      %v1414 = vadd.f32 0.0, %v1413
      %v1415 = vpop.f32.mrf.mxu0
      %v1416 = vadd.f32 0.0, %v1415
      %1417 = vmatmul.bf16.gmra.mxu0 %v1331
      %v1418 = vpop.f32.mrf.mxu0
      %v1419 = vadd.f32 0.0, %v1418
      %v1420 = vpop.f32.mrf.mxu0
      %v1421 = vadd.f32 0.0, %v1420
      %1422 = vmatmul.bf16.gmra.mxu0 %v1334
      %v1423 = vpop.f32.mrf.mxu0
      %v1424 = vadd.f32 0.0, %v1423
      %v1425 = vpop.f32.mrf.mxu0
      %v1426 = vadd.f32 0.0, %v1425
      %1427 = vdwg.mxu0
      %v1428 = vadd.f32 %v996, %v1349
      %v1429 = vadd.f32 %v998, %v1351
      %v1430 = vadd.f32 %v1001, %v1354
      %v1431 = vadd.f32 %v1003, %v1356
      %v1432 = vadd.f32 %v1006, %v1359
      %v1433 = vadd.f32 %v1008, %v1361
      %v1434 = vadd.f32 %v1011, %v1364
      %v1435 = vadd.f32 %v1013, %v1366
      %v1436 = vadd.f32 %v1016, %v1369
      %v1437 = vadd.f32 %v1018, %v1371
      %v1438 = vadd.f32 %v1021, %v1374
      %v1439 = vadd.f32 %v1023, %v1376
      %v1440 = vadd.f32 %v1026, %v1379
      %v1441 = vadd.f32 %v1028, %v1381
      %v1442 = vadd.f32 %v1031, %v1384
      %v1443 = vadd.f32 %v1033, %v1386
      %v1444 = vadd.f32 %v1036, %v1389
      %v1445 = vadd.f32 %v1038, %v1391
      %v1446 = vadd.f32 %v1041, %v1394
      %v1447 = vadd.f32 %v1043, %v1396
      %v1448 = vadd.f32 %v1046, %v1399
      %v1449 = vadd.f32 %v1048, %v1401
      %v1450 = vadd.f32 %v1051, %v1404
      %v1451 = vadd.f32 %v1053, %v1406
      %v1452 = vadd.f32 %v1056, %v1409
      %v1453 = vadd.f32 %v1058, %v1411
      %v1454 = vadd.f32 %v1061, %v1414
      %v1455 = vadd.f32 %v1063, %v1416
      %v1456 = vadd.f32 %v1066, %v1419
      %v1457 = vadd.f32 %v1068, %v1421
      %v1458 = vadd.f32 %v1071, %v1424
      %v1459 = vadd.f32 %v1073, %v1426
      %s1460 = scalar_lea.vmem %s219, 12
      %v1461 = vld [vmem:[%s1460] sm:$0xf]
      %v1462 = vld [vmem:[%s1460 + $0x4] sm:$0xf]
      %v1463 = vld [vmem:[%s1460 + $0xc] sm:$0xf]
      %v1464 = vld [vmem:[%s1460 + $0x10] sm:$0xf]
      %v1465 = vld [vmem:[%s1460 + $0x18] sm:$0xf]
      %v1466 = vld [vmem:[%s1460 + $0x1c] sm:$0xf]
      %v1467 = vld [vmem:[%s1460 + $0x24] sm:$0xf]
      %v1468 = vld [vmem:[%s1460 + $0x28] sm:$0xf]
      %v1469 = vld [vmem:[%s1460 + $0x30] sm:$0xf]
      %v1470 = vld [vmem:[%s1460 + $0x34] sm:$0xf]
      %v1471 = vld [vmem:[%s1460 + $0x3c] sm:$0xf]
      %v1472 = vld [vmem:[%s1460 + $0x40] sm:$0xf]
      %v1473 = vld [vmem:[%s1460 + $0x48] sm:$0xf]
      %v1474 = vld [vmem:[%s1460 + $0x4c] sm:$0xf]
      %v1475 = vld [vmem:[%s1460 + $0x54] sm:$0xf]
      %v1476 = vld [vmem:[%s1460 + $0x58] sm:$0xf]
      %v1477 = vld [vmem:[%s1460 + $0x60] sm:$0xf]
      %v1478 = vld [vmem:[%s1460 + $0x64] sm:$0xf]
      %v1479 = vld [vmem:[%s1460 + $0x6c] sm:$0xf]
      %v1480 = vld [vmem:[%s1460 + $0x70] sm:$0xf]
      %v1481 = vld [vmem:[%s1460 + $0x78] sm:$0xf]
      %v1482 = vld [vmem:[%s1460 + $0x7c] sm:$0xf]
      %v1483 = vld [vmem:[%s1460 + $0x84] sm:$0xf]
      %v1484 = vld [vmem:[%s1460 + $0x88] sm:$0xf]
      %v1485 = vld [vmem:[%s1460 + $0x90] sm:$0xf]
      %v1486 = vld [vmem:[%s1460 + $0x94] sm:$0xf]
      %v1487 = vld [vmem:[%s1460 + $0x9c] sm:$0xf]
      %v1488 = vld [vmem:[%s1460 + $0xa0] sm:$0xf]
      %v1489 = vld [vmem:[%s1460 + $0xa8] sm:$0xf]
      %v1490 = vld [vmem:[%s1460 + $0xac] sm:$0xf]
      %v1491 = vld [vmem:[%s1460 + $0xb4] sm:$0xf]
      %v1492 = vld [vmem:[%s1460 + $0xb8] sm:$0xf]
      %s1493 = scalar_lea.vmem %s1, 6
      %v1494 = vld [vmem:[%s1493] sm:$0x3]
      %v1527 = vunpack.c.l.b16 %v1461
      %v1528 = vunpack.c.l.b16 %v1462
      %v1529 = vunpack.c.l.b16 %v1463
      %v1530 = vunpack.c.l.b16 %v1464
      %v1531 = vunpack.c.l.b16 %v1465
      %v1532 = vunpack.c.l.b16 %v1466
      %v1533 = vunpack.c.l.b16 %v1467
      %v1534 = vunpack.c.l.b16 %v1468
      %v1535 = vunpack.c.l.b16 %v1469
      %v1536 = vunpack.c.l.b16 %v1470
      %v1537 = vunpack.c.l.b16 %v1471
      %v1538 = vunpack.c.l.b16 %v1472
      %v1539 = vunpack.c.l.b16 %v1473
      %v1540 = vunpack.c.l.b16 %v1474
      %v1541 = vunpack.c.l.b16 %v1475
      %v1542 = vunpack.c.l.b16 %v1476
      %v1543 = vunpack.c.l.b16 %v1477
      %v1544 = vunpack.c.l.b16 %v1478
      %v1545 = vunpack.c.l.b16 %v1479
      %v1546 = vunpack.c.l.b16 %v1480
      %v1547 = vunpack.c.l.b16 %v1481
      %v1548 = vunpack.c.l.b16 %v1482
      %v1549 = vunpack.c.l.b16 %v1483
      %v1550 = vunpack.c.l.b16 %v1484
      %v1551 = vunpack.c.l.b16 %v1485
      %v1552 = vunpack.c.l.b16 %v1486
      %v1553 = vunpack.c.l.b16 %v1487
      %v1554 = vunpack.c.l.b16 %v1488
      %v1555 = vunpack.c.l.b16 %v1489
      %v1556 = vunpack.c.l.b16 %v1490
      %v1557 = vunpack.c.l.b16 %v1491
      %v1558 = vunpack.c.l.b16 %v1492
      %v1559 = vpack.c.b16 %v1528, %v1527
      %v1560 = vpack.c.b16 %v1530, %v1529
      %v1561 = vpack.c.b16 %v1532, %v1531
      %v1562 = vpack.c.b16 %v1534, %v1533
      %v1563 = vpack.c.b16 %v1536, %v1535
      %v1564 = vpack.c.b16 %v1538, %v1537
      %v1565 = vpack.c.b16 %v1540, %v1539
      %v1566 = vpack.c.b16 %v1542, %v1541
      %v1567 = vpack.c.b16 %v1544, %v1543
      %v1568 = vpack.c.b16 %v1546, %v1545
      %v1569 = vpack.c.b16 %v1548, %v1547
      %v1570 = vpack.c.b16 %v1550, %v1549
      %v1571 = vpack.c.b16 %v1552, %v1551
      %v1572 = vpack.c.b16 %v1554, %v1553
      %v1573 = vpack.c.b16 %v1556, %v1555
      %v1574 = vpack.c.b16 %v1558, %v1557
      %v1576 = vsel %vm713, %v1559, 0
      %v1579 = vsel %vm713, %v1560, 0
      %v1582 = vsel %vm713, %v1561, 0
      %v1585 = vsel %vm713, %v1562, 0
      %v1588 = vsel %vm713, %v1563, 0
      %v1591 = vsel %vm713, %v1564, 0
      %v1594 = vsel %vm713, %v1565, 0
      %v1597 = vsel %vm713, %v1566, 0
      %v1600 = vsel %vm713, %v1567, 0
      %v1603 = vsel %vm713, %v1568, 0
      %v1606 = vsel %vm713, %v1569, 0
      %v1609 = vsel %vm713, %v1570, 0
      %v1612 = vsel %vm713, %v1571, 0
      %v1615 = vsel %vm713, %v1572, 0
      %v1618 = vsel %vm713, %v1573, 0
      %v1621 = vsel %vm713, %v1574, 0
      %v1624 = vsel %vm762, %v1494, 0
      %1626 = vmatpush.bf16.msra.mxu0 0
      %1627 = vmatpush.bf16.msra.mxu0 0
      %1628 = vmatpush.bf16.msra.mxu0 0
      %1629 = vmatpush.bf16.msra.mxu0 0
      %1630 = vmatpush.bf16.msra.mxu0 0
      %1631 = vmatpush.bf16.msra.mxu0 0
      %1632 = vmatpush.bf16.msra.mxu0 0
      %1633 = vmatpush.bf16.msra.mxu0 %v1624
      %1634 = vmatmul.bf16.gmra.mxu0 %v1576
      %v1635 = vpop.f32.mrf.mxu0
      %v1636 = vadd.f32 0.0, %v1635
      %v1637 = vpop.f32.mrf.mxu0
      %v1638 = vadd.f32 0.0, %v1637
      %1639 = vmatmul.bf16.gmra.mxu0 %v1579
      %v1640 = vpop.f32.mrf.mxu0
      %v1641 = vadd.f32 0.0, %v1640
      %v1642 = vpop.f32.mrf.mxu0
      %v1643 = vadd.f32 0.0, %v1642
      %1644 = vmatmul.bf16.gmra.mxu0 %v1582
      %v1645 = vpop.f32.mrf.mxu0
      %v1646 = vadd.f32 0.0, %v1645
      %v1647 = vpop.f32.mrf.mxu0
      %v1648 = vadd.f32 0.0, %v1647
      %1649 = vmatmul.bf16.gmra.mxu0 %v1585
      %v1650 = vpop.f32.mrf.mxu0
      %v1651 = vadd.f32 0.0, %v1650
      %v1652 = vpop.f32.mrf.mxu0
      %v1653 = vadd.f32 0.0, %v1652
      %1654 = vmatmul.bf16.gmra.mxu0 %v1588
      %v1655 = vpop.f32.mrf.mxu0
      %v1656 = vadd.f32 0.0, %v1655
      %v1657 = vpop.f32.mrf.mxu0
      %v1658 = vadd.f32 0.0, %v1657
      %1659 = vmatmul.bf16.gmra.mxu0 %v1591
      %v1660 = vpop.f32.mrf.mxu0
      %v1661 = vadd.f32 0.0, %v1660
      %v1662 = vpop.f32.mrf.mxu0
      %v1663 = vadd.f32 0.0, %v1662
      %1664 = vmatmul.bf16.gmra.mxu0 %v1594
      %v1665 = vpop.f32.mrf.mxu0
      %v1666 = vadd.f32 0.0, %v1665
      %v1667 = vpop.f32.mrf.mxu0
      %v1668 = vadd.f32 0.0, %v1667
      %1669 = vmatmul.bf16.gmra.mxu0 %v1597
      %v1670 = vpop.f32.mrf.mxu0
      %v1671 = vadd.f32 0.0, %v1670
      %v1672 = vpop.f32.mrf.mxu0
      %v1673 = vadd.f32 0.0, %v1672
      %1674 = vmatmul.bf16.gmra.mxu0 %v1600
      %v1675 = vpop.f32.mrf.mxu0
      %v1676 = vadd.f32 0.0, %v1675
      %v1677 = vpop.f32.mrf.mxu0
      %v1678 = vadd.f32 0.0, %v1677
      %1679 = vmatmul.bf16.gmra.mxu0 %v1603
      %v1680 = vpop.f32.mrf.mxu0
      %v1681 = vadd.f32 0.0, %v1680
      %v1682 = vpop.f32.mrf.mxu0
      %v1683 = vadd.f32 0.0, %v1682
      %1684 = vmatmul.bf16.gmra.mxu0 %v1606
      %v1685 = vpop.f32.mrf.mxu0
      %v1686 = vadd.f32 0.0, %v1685
      %v1687 = vpop.f32.mrf.mxu0
      %v1688 = vadd.f32 0.0, %v1687
      %1689 = vmatmul.bf16.gmra.mxu0 %v1609
      %v1690 = vpop.f32.mrf.mxu0
      %v1691 = vadd.f32 0.0, %v1690
      %v1692 = vpop.f32.mrf.mxu0
      %v1693 = vadd.f32 0.0, %v1692
      %1694 = vmatmul.bf16.gmra.mxu0 %v1612
      %v1695 = vpop.f32.mrf.mxu0
      %v1696 = vadd.f32 0.0, %v1695
      %v1697 = vpop.f32.mrf.mxu0
      %v1698 = vadd.f32 0.0, %v1697
      %1699 = vmatmul.bf16.gmra.mxu0 %v1615
      %v1700 = vpop.f32.mrf.mxu0
      %v1701 = vadd.f32 0.0, %v1700
      %v1702 = vpop.f32.mrf.mxu0
      %v1703 = vadd.f32 0.0, %v1702
      %1704 = vmatmul.bf16.gmra.mxu0 %v1618
      %v1705 = vpop.f32.mrf.mxu0
      %v1706 = vadd.f32 0.0, %v1705
      %v1707 = vpop.f32.mrf.mxu0
      %v1708 = vadd.f32 0.0, %v1707
      %1709 = vmatmul.bf16.gmra.mxu0 %v1621
      %v1710 = vpop.f32.mrf.mxu0
      %v1711 = vadd.f32 0.0, %v1710
      %v1712 = vpop.f32.mrf.mxu0
      %v1713 = vadd.f32 0.0, %v1712
      %1714 = vdwg.mxu0
      %v1715 = vadd.f32 %v1428, %v1636
      %v1716 = vadd.f32 %v1429, %v1638
      %v1717 = vadd.f32 %v1430, %v1641
      %v1718 = vadd.f32 %v1431, %v1643
      %v1719 = vadd.f32 %v1432, %v1646
      %v1720 = vadd.f32 %v1433, %v1648
      %v1721 = vadd.f32 %v1434, %v1651
      %v1722 = vadd.f32 %v1435, %v1653
      %v1723 = vadd.f32 %v1436, %v1656
      %v1724 = vadd.f32 %v1437, %v1658
      %v1725 = vadd.f32 %v1438, %v1661
      %v1726 = vadd.f32 %v1439, %v1663
      %v1727 = vadd.f32 %v1440, %v1666
      %v1728 = vadd.f32 %v1441, %v1668
      %v1729 = vadd.f32 %v1442, %v1671
      %v1730 = vadd.f32 %v1443, %v1673
      %v1731 = vadd.f32 %v1444, %v1676
      %v1732 = vadd.f32 %v1445, %v1678
      %v1733 = vadd.f32 %v1446, %v1681
      %v1734 = vadd.f32 %v1447, %v1683
      %v1735 = vadd.f32 %v1448, %v1686
      %v1736 = vadd.f32 %v1449, %v1688
      %v1737 = vadd.f32 %v1450, %v1691
      %v1738 = vadd.f32 %v1451, %v1693
      %v1739 = vadd.f32 %v1452, %v1696
      %v1740 = vadd.f32 %v1453, %v1698
      %v1741 = vadd.f32 %v1454, %v1701
      %v1742 = vadd.f32 %v1455, %v1703
      %v1743 = vadd.f32 %v1456, %v1706
      %v1744 = vadd.f32 %v1457, %v1708
      %v1745 = vadd.f32 %v1458, %v1711
      %v1746 = vadd.f32 %v1459, %v1713
      %v1747 = vld [vmem:[%s1460] sm:$0xf]
      %v1748 = vld [vmem:[%s1460 + $0x4] sm:$0xf]
      %v1749 = vld [vmem:[%s1460 + $0x8] sm:$0x1]
      %v1750 = vld [vmem:[%s1460 + $0xc] sm:$0xf]
      %v1751 = vld [vmem:[%s1460 + $0x10] sm:$0xf]
      %v1752 = vld [vmem:[%s1460 + $0x14] sm:$0x1]
      %v1753 = vld [vmem:[%s1460 + $0x18] sm:$0xf]
      %v1754 = vld [vmem:[%s1460 + $0x1c] sm:$0xf]
      %v1755 = vld [vmem:[%s1460 + $0x20] sm:$0x1]
      %v1756 = vld [vmem:[%s1460 + $0x24] sm:$0xf]
      %v1757 = vld [vmem:[%s1460 + $0x28] sm:$0xf]
      %v1758 = vld [vmem:[%s1460 + $0x2c] sm:$0x1]
      %v1759 = vld [vmem:[%s1460 + $0x30] sm:$0xf]
      %v1760 = vld [vmem:[%s1460 + $0x34] sm:$0xf]
      %v1761 = vld [vmem:[%s1460 + $0x38] sm:$0x1]
      %v1762 = vld [vmem:[%s1460 + $0x3c] sm:$0xf]
      %v1763 = vld [vmem:[%s1460 + $0x40] sm:$0xf]
      %v1764 = vld [vmem:[%s1460 + $0x44] sm:$0x1]
      %v1765 = vld [vmem:[%s1460 + $0x48] sm:$0xf]
      %v1766 = vld [vmem:[%s1460 + $0x4c] sm:$0xf]
      %v1767 = vld [vmem:[%s1460 + $0x50] sm:$0x1]
      %v1768 = vld [vmem:[%s1460 + $0x54] sm:$0xf]
      %v1769 = vld [vmem:[%s1460 + $0x58] sm:$0xf]
      %v1770 = vld [vmem:[%s1460 + $0x5c] sm:$0x1]
      %v1771 = vld [vmem:[%s1460 + $0x60] sm:$0xf]
      %v1772 = vld [vmem:[%s1460 + $0x64] sm:$0xf]
      %v1773 = vld [vmem:[%s1460 + $0x68] sm:$0x1]
      %v1774 = vld [vmem:[%s1460 + $0x6c] sm:$0xf]
      %v1775 = vld [vmem:[%s1460 + $0x70] sm:$0xf]
      %v1776 = vld [vmem:[%s1460 + $0x74] sm:$0x1]
      %v1777 = vld [vmem:[%s1460 + $0x78] sm:$0xf]
      %v1778 = vld [vmem:[%s1460 + $0x7c] sm:$0xf]
      %v1779 = vld [vmem:[%s1460 + $0x80] sm:$0x1]
      %v1780 = vld [vmem:[%s1460 + $0x84] sm:$0xf]
      %v1781 = vld [vmem:[%s1460 + $0x88] sm:$0xf]
      %v1782 = vld [vmem:[%s1460 + $0x8c] sm:$0x1]
      %v1783 = vld [vmem:[%s1460 + $0x90] sm:$0xf]
      %v1784 = vld [vmem:[%s1460 + $0x94] sm:$0xf]
      %v1785 = vld [vmem:[%s1460 + $0x98] sm:$0x1]
      %v1786 = vld [vmem:[%s1460 + $0x9c] sm:$0xf]
      %v1787 = vld [vmem:[%s1460 + $0xa0] sm:$0xf]
      %v1788 = vld [vmem:[%s1460 + $0xa4] sm:$0x1]
      %v1789 = vld [vmem:[%s1460 + $0xa8] sm:$0xf]
      %v1790 = vld [vmem:[%s1460 + $0xac] sm:$0xf]
      %v1791 = vld [vmem:[%s1460 + $0xb0] sm:$0x1]
      %v1792 = vld [vmem:[%s1460 + $0xb4] sm:$0xf]
      %v1793 = vld [vmem:[%s1460 + $0xb8] sm:$0xf]
      %v1794 = vld [vmem:[%s1460 + $0xbc] sm:$0x1]
      %v1796 = vshrl.u32 %v1747, 16
      %v1798 = vrot.slane %v1796, 4
      %v1799 = vshll.u32 %v1747, 16
      %v1801 = vrot.slane %v1799, 5
      %v1802 = vor.u32 %v1798, %v1801
      %v1803 = vrot.slane %v1802, 4
      %v1805 = vshll.u32 %v1748, 16
      %v1807 = vrot.slane %v1805, 5
      %v1808 = vsel %vm278, %v1803, %v1807
      %v1809 = vshrl.u32 %v1748, 16
      %v1811 = vrot.slane %v1809, 4
      %v1812 = vor.u32 %v1811, %v1807
      %v1813 = vrot.slane %v1812, 4
      %v1815 = vshll.u32 %v1749, 16
      %v1817 = vrot.slane %v1815, 5
      %v1818 = vsel %vm278, %v1813, %v1817
      %v1820 = vshrl.u32 %v1750, 16
      %v1822 = vrot.slane %v1820, 4
      %v1823 = vshll.u32 %v1750, 16
      %v1825 = vrot.slane %v1823, 5
      %v1826 = vor.u32 %v1822, %v1825
      %v1827 = vrot.slane %v1826, 4
      %v1829 = vshll.u32 %v1751, 16
      %v1831 = vrot.slane %v1829, 5
      %v1832 = vsel %vm278, %v1827, %v1831
      %v1833 = vshrl.u32 %v1751, 16
      %v1835 = vrot.slane %v1833, 4
      %v1836 = vor.u32 %v1835, %v1831
      %v1837 = vrot.slane %v1836, 4
      %v1839 = vshll.u32 %v1752, 16
      %v1841 = vrot.slane %v1839, 5
      %v1842 = vsel %vm278, %v1837, %v1841
      %v1844 = vshrl.u32 %v1753, 16
      %v1846 = vrot.slane %v1844, 4
      %v1847 = vshll.u32 %v1753, 16
      %v1849 = vrot.slane %v1847, 5
      %v1850 = vor.u32 %v1846, %v1849
      %v1851 = vrot.slane %v1850, 4
      %v1853 = vshll.u32 %v1754, 16
      %v1855 = vrot.slane %v1853, 5
      %v1856 = vsel %vm278, %v1851, %v1855
      %v1857 = vshrl.u32 %v1754, 16
      %v1859 = vrot.slane %v1857, 4
      %v1860 = vor.u32 %v1859, %v1855
      %v1861 = vrot.slane %v1860, 4
      %v1863 = vshll.u32 %v1755, 16
      %v1865 = vrot.slane %v1863, 5
      %v1866 = vsel %vm278, %v1861, %v1865
      %v1868 = vshrl.u32 %v1756, 16
      %v1870 = vrot.slane %v1868, 4
      %v1871 = vshll.u32 %v1756, 16
      %v1873 = vrot.slane %v1871, 5
      %v1874 = vor.u32 %v1870, %v1873
      %v1875 = vrot.slane %v1874, 4
      %v1877 = vshll.u32 %v1757, 16
      %v1879 = vrot.slane %v1877, 5
      %v1880 = vsel %vm278, %v1875, %v1879
      %v1881 = vshrl.u32 %v1757, 16
      %v1883 = vrot.slane %v1881, 4
      %v1884 = vor.u32 %v1883, %v1879
      %v1885 = vrot.slane %v1884, 4
      %v1887 = vshll.u32 %v1758, 16
      %v1889 = vrot.slane %v1887, 5
      %v1890 = vsel %vm278, %v1885, %v1889
      %v1892 = vshrl.u32 %v1759, 16
      %v1894 = vrot.slane %v1892, 4
      %v1895 = vshll.u32 %v1759, 16
      %v1897 = vrot.slane %v1895, 5
      %v1898 = vor.u32 %v1894, %v1897
      %v1899 = vrot.slane %v1898, 4
      %v1901 = vshll.u32 %v1760, 16
      %v1903 = vrot.slane %v1901, 5
      %v1904 = vsel %vm278, %v1899, %v1903
      %v1905 = vshrl.u32 %v1760, 16
      %v1907 = vrot.slane %v1905, 4
      %v1908 = vor.u32 %v1907, %v1903
      %v1909 = vrot.slane %v1908, 4
      %v1911 = vshll.u32 %v1761, 16
      %v1913 = vrot.slane %v1911, 5
      %v1914 = vsel %vm278, %v1909, %v1913
      %v1916 = vshrl.u32 %v1762, 16
      %v1918 = vrot.slane %v1916, 4
      %v1919 = vshll.u32 %v1762, 16
      %v1921 = vrot.slane %v1919, 5
      %v1922 = vor.u32 %v1918, %v1921
      %v1923 = vrot.slane %v1922, 4
      %v1925 = vshll.u32 %v1763, 16
      %v1927 = vrot.slane %v1925, 5
      %v1928 = vsel %vm278, %v1923, %v1927
      %v1929 = vshrl.u32 %v1763, 16
      %v1931 = vrot.slane %v1929, 4
      %v1932 = vor.u32 %v1931, %v1927
      %v1933 = vrot.slane %v1932, 4
      %v1935 = vshll.u32 %v1764, 16
      %v1937 = vrot.slane %v1935, 5
      %v1938 = vsel %vm278, %v1933, %v1937
      %v1940 = vshrl.u32 %v1765, 16
      %v1942 = vrot.slane %v1940, 4
      %v1943 = vshll.u32 %v1765, 16
      %v1945 = vrot.slane %v1943, 5
      %v1946 = vor.u32 %v1942, %v1945
      %v1947 = vrot.slane %v1946, 4
      %v1949 = vshll.u32 %v1766, 16
      %v1951 = vrot.slane %v1949, 5
      %v1952 = vsel %vm278, %v1947, %v1951
      %v1953 = vshrl.u32 %v1766, 16
      %v1955 = vrot.slane %v1953, 4
      %v1956 = vor.u32 %v1955, %v1951
      %v1957 = vrot.slane %v1956, 4
      %v1959 = vshll.u32 %v1767, 16
      %v1961 = vrot.slane %v1959, 5
      %v1962 = vsel %vm278, %v1957, %v1961
      %v1964 = vshrl.u32 %v1768, 16
      %v1966 = vrot.slane %v1964, 4
      %v1967 = vshll.u32 %v1768, 16
      %v1969 = vrot.slane %v1967, 5
      %v1970 = vor.u32 %v1966, %v1969
      %v1971 = vrot.slane %v1970, 4
      %v1973 = vshll.u32 %v1769, 16
      %v1975 = vrot.slane %v1973, 5
      %v1976 = vsel %vm278, %v1971, %v1975
      %v1977 = vshrl.u32 %v1769, 16
      %v1979 = vrot.slane %v1977, 4
      %v1980 = vor.u32 %v1979, %v1975
      %v1981 = vrot.slane %v1980, 4
      %v1983 = vshll.u32 %v1770, 16
      %v1985 = vrot.slane %v1983, 5
      %v1986 = vsel %vm278, %v1981, %v1985
      %v1988 = vshrl.u32 %v1771, 16
      %v1990 = vrot.slane %v1988, 4
      %v1991 = vshll.u32 %v1771, 16
      %v1993 = vrot.slane %v1991, 5
      %v1994 = vor.u32 %v1990, %v1993
      %v1995 = vrot.slane %v1994, 4
      %v1997 = vshll.u32 %v1772, 16
      %v1999 = vrot.slane %v1997, 5
      %v2000 = vsel %vm278, %v1995, %v1999
      %v2001 = vshrl.u32 %v1772, 16
      %v2003 = vrot.slane %v2001, 4
      %v2004 = vor.u32 %v2003, %v1999
      %v2005 = vrot.slane %v2004, 4
      %v2007 = vshll.u32 %v1773, 16
      %v2009 = vrot.slane %v2007, 5
      %v2010 = vsel %vm278, %v2005, %v2009
      %v2012 = vshrl.u32 %v1774, 16
      %v2014 = vrot.slane %v2012, 4
      %v2015 = vshll.u32 %v1774, 16
      %v2017 = vrot.slane %v2015, 5
      %v2018 = vor.u32 %v2014, %v2017
      %v2019 = vrot.slane %v2018, 4
      %v2021 = vshll.u32 %v1775, 16
      %v2023 = vrot.slane %v2021, 5
      %v2024 = vsel %vm278, %v2019, %v2023
      %v2025 = vshrl.u32 %v1775, 16
      %v2027 = vrot.slane %v2025, 4
      %v2028 = vor.u32 %v2027, %v2023
      %v2029 = vrot.slane %v2028, 4
      %v2031 = vshll.u32 %v1776, 16
      %v2033 = vrot.slane %v2031, 5
      %v2034 = vsel %vm278, %v2029, %v2033
      %v2036 = vshrl.u32 %v1777, 16
      %v2038 = vrot.slane %v2036, 4
      %v2039 = vshll.u32 %v1777, 16
      %v2041 = vrot.slane %v2039, 5
      %v2042 = vor.u32 %v2038, %v2041
      %v2043 = vrot.slane %v2042, 4
      %v2045 = vshll.u32 %v1778, 16
      %v2047 = vrot.slane %v2045, 5
      %v2048 = vsel %vm278, %v2043, %v2047
      %v2049 = vshrl.u32 %v1778, 16
      %v2051 = vrot.slane %v2049, 4
      %v2052 = vor.u32 %v2051, %v2047
      %v2053 = vrot.slane %v2052, 4
      %v2055 = vshll.u32 %v1779, 16
      %v2057 = vrot.slane %v2055, 5
      %v2058 = vsel %vm278, %v2053, %v2057
      %v2060 = vshrl.u32 %v1780, 16
      %v2062 = vrot.slane %v2060, 4
      %v2063 = vshll.u32 %v1780, 16
      %v2065 = vrot.slane %v2063, 5
      %v2066 = vor.u32 %v2062, %v2065
      %v2067 = vrot.slane %v2066, 4
      %v2069 = vshll.u32 %v1781, 16
      %v2071 = vrot.slane %v2069, 5
      %v2072 = vsel %vm278, %v2067, %v2071
      %v2073 = vshrl.u32 %v1781, 16
      %v2075 = vrot.slane %v2073, 4
      %v2076 = vor.u32 %v2075, %v2071
      %v2077 = vrot.slane %v2076, 4
      %v2079 = vshll.u32 %v1782, 16
      %v2081 = vrot.slane %v2079, 5
      %v2082 = vsel %vm278, %v2077, %v2081
      %v2084 = vshrl.u32 %v1783, 16
      %v2086 = vrot.slane %v2084, 4
      %v2087 = vshll.u32 %v1783, 16
      %v2089 = vrot.slane %v2087, 5
      %v2090 = vor.u32 %v2086, %v2089
      %v2091 = vrot.slane %v2090, 4
      %v2093 = vshll.u32 %v1784, 16
      %v2095 = vrot.slane %v2093, 5
      %v2096 = vsel %vm278, %v2091, %v2095
      %v2097 = vshrl.u32 %v1784, 16
      %v2099 = vrot.slane %v2097, 4
      %v2100 = vor.u32 %v2099, %v2095
      %v2101 = vrot.slane %v2100, 4
      %v2103 = vshll.u32 %v1785, 16
      %v2105 = vrot.slane %v2103, 5
      %v2106 = vsel %vm278, %v2101, %v2105
      %v2108 = vshrl.u32 %v1786, 16
      %v2110 = vrot.slane %v2108, 4
      %v2111 = vshll.u32 %v1786, 16
      %v2113 = vrot.slane %v2111, 5
      %v2114 = vor.u32 %v2110, %v2113
      %v2115 = vrot.slane %v2114, 4
      %v2117 = vshll.u32 %v1787, 16
      %v2119 = vrot.slane %v2117, 5
      %v2120 = vsel %vm278, %v2115, %v2119
      %v2121 = vshrl.u32 %v1787, 16
      %v2123 = vrot.slane %v2121, 4
      %v2124 = vor.u32 %v2123, %v2119
      %v2125 = vrot.slane %v2124, 4
      %v2127 = vshll.u32 %v1788, 16
      %v2129 = vrot.slane %v2127, 5
      %v2130 = vsel %vm278, %v2125, %v2129
      %v2132 = vshrl.u32 %v1789, 16
      %v2134 = vrot.slane %v2132, 4
      %v2135 = vshll.u32 %v1789, 16
      %v2137 = vrot.slane %v2135, 5
      %v2138 = vor.u32 %v2134, %v2137
      %v2139 = vrot.slane %v2138, 4
      %v2141 = vshll.u32 %v1790, 16
      %v2143 = vrot.slane %v2141, 5
      %v2144 = vsel %vm278, %v2139, %v2143
      %v2145 = vshrl.u32 %v1790, 16
      %v2147 = vrot.slane %v2145, 4
      %v2148 = vor.u32 %v2147, %v2143
      %v2149 = vrot.slane %v2148, 4
      %v2151 = vshll.u32 %v1791, 16
      %v2153 = vrot.slane %v2151, 5
      %v2154 = vsel %vm278, %v2149, %v2153
      %v2156 = vshrl.u32 %v1792, 16
      %v2158 = vrot.slane %v2156, 4
      %v2159 = vshll.u32 %v1792, 16
      %v2161 = vrot.slane %v2159, 5
      %v2162 = vor.u32 %v2158, %v2161
      %v2163 = vrot.slane %v2162, 4
      %v2165 = vshll.u32 %v1793, 16
      %v2167 = vrot.slane %v2165, 5
      %v2168 = vsel %vm278, %v2163, %v2167
      %v2169 = vshrl.u32 %v1793, 16
      %v2171 = vrot.slane %v2169, 4
      %v2172 = vor.u32 %v2171, %v2167
      %v2173 = vrot.slane %v2172, 4
      %v2175 = vshll.u32 %v1794, 16
      %v2177 = vrot.slane %v2175, 5
      %v2178 = vsel %vm278, %v2173, %v2177
      %s2179 = scalar_lea.vmem %s1, 8
      %v2180 = vld [vmem:[%s2179] sm:$0x3]
      %v2181 = vunpack.c.l.b16 %v1808
      %v2182 = vunpack.c.l.b16 %v1818
      %v2183 = vunpack.c.l.b16 %v1832
      %v2184 = vunpack.c.l.b16 %v1842
      %v2185 = vunpack.c.l.b16 %v1856
      %v2186 = vunpack.c.l.b16 %v1866
      %v2187 = vunpack.c.l.b16 %v1880
      %v2188 = vunpack.c.l.b16 %v1890
      %v2189 = vunpack.c.l.b16 %v1904
      %v2190 = vunpack.c.l.b16 %v1914
      %v2191 = vunpack.c.l.b16 %v1928
      %v2192 = vunpack.c.l.b16 %v1938
      %v2193 = vunpack.c.l.b16 %v1952
      %v2194 = vunpack.c.l.b16 %v1962
      %v2195 = vunpack.c.l.b16 %v1976
      %v2196 = vunpack.c.l.b16 %v1986
      %v2197 = vunpack.c.l.b16 %v2000
      %v2198 = vunpack.c.l.b16 %v2010
      %v2199 = vunpack.c.l.b16 %v2024
      %v2200 = vunpack.c.l.b16 %v2034
      %v2201 = vunpack.c.l.b16 %v2048
      %v2202 = vunpack.c.l.b16 %v2058
      %v2203 = vunpack.c.l.b16 %v2072
      %v2204 = vunpack.c.l.b16 %v2082
      %v2205 = vunpack.c.l.b16 %v2096
      %v2206 = vunpack.c.l.b16 %v2106
      %v2207 = vunpack.c.l.b16 %v2120
      %v2208 = vunpack.c.l.b16 %v2130
      %v2209 = vunpack.c.l.b16 %v2144
      %v2210 = vunpack.c.l.b16 %v2154
      %v2211 = vunpack.c.l.b16 %v2168
      %v2212 = vunpack.c.l.b16 %v2178
      %v2213 = vpack.c.b16 %v2182, %v2181
      %v2214 = vpack.c.b16 %v2184, %v2183
      %v2215 = vpack.c.b16 %v2186, %v2185
      %v2216 = vpack.c.b16 %v2188, %v2187
      %v2217 = vpack.c.b16 %v2190, %v2189
      %v2218 = vpack.c.b16 %v2192, %v2191
      %v2219 = vpack.c.b16 %v2194, %v2193
      %v2220 = vpack.c.b16 %v2196, %v2195
      %v2221 = vpack.c.b16 %v2198, %v2197
      %v2222 = vpack.c.b16 %v2200, %v2199
      %v2223 = vpack.c.b16 %v2202, %v2201
      %v2224 = vpack.c.b16 %v2204, %v2203
      %v2225 = vpack.c.b16 %v2206, %v2205
      %v2226 = vpack.c.b16 %v2208, %v2207
      %v2227 = vpack.c.b16 %v2210, %v2209
      %v2228 = vpack.c.b16 %v2212, %v2211
      %v2230 = vsel %vm713, %v2213, 0
      %v2233 = vsel %vm713, %v2214, 0
      %v2236 = vsel %vm713, %v2215, 0
      %v2239 = vsel %vm713, %v2216, 0
      %v2242 = vsel %vm713, %v2217, 0
      %v2245 = vsel %vm713, %v2218, 0
      %v2248 = vsel %vm713, %v2219, 0
      %v2251 = vsel %vm713, %v2220, 0
      %v2254 = vsel %vm713, %v2221, 0
      %v2257 = vsel %vm713, %v2222, 0
      %v2260 = vsel %vm713, %v2223, 0
      %v2263 = vsel %vm713, %v2224, 0
      %v2266 = vsel %vm713, %v2225, 0
      %v2269 = vsel %vm713, %v2226, 0
      %v2272 = vsel %vm713, %v2227, 0
      %v2275 = vsel %vm713, %v2228, 0
      %v2278 = vsel %vm762, %v2180, 0
      %2280 = vmatpush.bf16.msra.mxu0 0
      %2281 = vmatpush.bf16.msra.mxu0 0
      %2282 = vmatpush.bf16.msra.mxu0 0
      %2283 = vmatpush.bf16.msra.mxu0 0
      %2284 = vmatpush.bf16.msra.mxu0 0
      %2285 = vmatpush.bf16.msra.mxu0 0
      %2286 = vmatpush.bf16.msra.mxu0 0
      %2287 = vmatpush.bf16.msra.mxu0 %v2278
      %2288 = vmatmul.bf16.gmra.mxu0 %v2230
      %v2289 = vpop.f32.mrf.mxu0
      %v2290 = vadd.f32 0.0, %v2289
      %v2291 = vpop.f32.mrf.mxu0
      %v2292 = vadd.f32 0.0, %v2291
      %2293 = vmatmul.bf16.gmra.mxu0 %v2233
      %v2294 = vpop.f32.mrf.mxu0
      %v2295 = vadd.f32 0.0, %v2294
      %v2296 = vpop.f32.mrf.mxu0
      %v2297 = vadd.f32 0.0, %v2296
      %2298 = vmatmul.bf16.gmra.mxu0 %v2236
      %v2299 = vpop.f32.mrf.mxu0
      %v2300 = vadd.f32 0.0, %v2299
      %v2301 = vpop.f32.mrf.mxu0
      %v2302 = vadd.f32 0.0, %v2301
      %2303 = vmatmul.bf16.gmra.mxu0 %v2239
      %v2304 = vpop.f32.mrf.mxu0
      %v2305 = vadd.f32 0.0, %v2304
      %v2306 = vpop.f32.mrf.mxu0
      %v2307 = vadd.f32 0.0, %v2306
      %2308 = vmatmul.bf16.gmra.mxu0 %v2242
      %v2309 = vpop.f32.mrf.mxu0
      %v2310 = vadd.f32 0.0, %v2309
      %v2311 = vpop.f32.mrf.mxu0
      %v2312 = vadd.f32 0.0, %v2311
      %2313 = vmatmul.bf16.gmra.mxu0 %v2245
      %v2314 = vpop.f32.mrf.mxu0
      %v2315 = vadd.f32 0.0, %v2314
      %v2316 = vpop.f32.mrf.mxu0
      %v2317 = vadd.f32 0.0, %v2316
      %2318 = vmatmul.bf16.gmra.mxu0 %v2248
      %v2319 = vpop.f32.mrf.mxu0
      %v2320 = vadd.f32 0.0, %v2319
      %v2321 = vpop.f32.mrf.mxu0
      %v2322 = vadd.f32 0.0, %v2321
      %2323 = vmatmul.bf16.gmra.mxu0 %v2251
      %v2324 = vpop.f32.mrf.mxu0
      %v2325 = vadd.f32 0.0, %v2324
      %v2326 = vpop.f32.mrf.mxu0
      %v2327 = vadd.f32 0.0, %v2326
      %2328 = vmatmul.bf16.gmra.mxu0 %v2254
      %v2329 = vpop.f32.mrf.mxu0
      %v2330 = vadd.f32 0.0, %v2329
      %v2331 = vpop.f32.mrf.mxu0
      %v2332 = vadd.f32 0.0, %v2331
      %2333 = vmatmul.bf16.gmra.mxu0 %v2257
      %v2334 = vpop.f32.mrf.mxu0
      %v2335 = vadd.f32 0.0, %v2334
      %v2336 = vpop.f32.mrf.mxu0
      %v2337 = vadd.f32 0.0, %v2336
      %2338 = vmatmul.bf16.gmra.mxu0 %v2260
      %v2339 = vpop.f32.mrf.mxu0
      %v2340 = vadd.f32 0.0, %v2339
      %v2341 = vpop.f32.mrf.mxu0
      %v2342 = vadd.f32 0.0, %v2341
      %2343 = vmatmul.bf16.gmra.mxu0 %v2263
      %v2344 = vpop.f32.mrf.mxu0
      %v2345 = vadd.f32 0.0, %v2344
      %v2346 = vpop.f32.mrf.mxu0
      %v2347 = vadd.f32 0.0, %v2346
      %2348 = vmatmul.bf16.gmra.mxu0 %v2266
      %v2349 = vpop.f32.mrf.mxu0
      %v2350 = vadd.f32 0.0, %v2349
      %v2351 = vpop.f32.mrf.mxu0
      %v2352 = vadd.f32 0.0, %v2351
      %2353 = vmatmul.bf16.gmra.mxu0 %v2269
      %v2354 = vpop.f32.mrf.mxu0
      %v2355 = vadd.f32 0.0, %v2354
      %v2356 = vpop.f32.mrf.mxu0
      %v2357 = vadd.f32 0.0, %v2356
      %2358 = vmatmul.bf16.gmra.mxu0 %v2272
      %v2359 = vpop.f32.mrf.mxu0
      %v2360 = vadd.f32 0.0, %v2359
      %v2361 = vpop.f32.mrf.mxu0
      %v2362 = vadd.f32 0.0, %v2361
      %2363 = vmatmul.bf16.gmra.mxu0 %v2275
      %v2364 = vpop.f32.mrf.mxu0
      %v2365 = vadd.f32 0.0, %v2364
      %v2366 = vpop.f32.mrf.mxu0
      %v2367 = vadd.f32 0.0, %v2366
      %2368 = vdwg.mxu0
      %v2369 = vadd.f32 %v1715, %v2290
      %v2370 = vadd.f32 %v1716, %v2292
      %v2371 = vadd.f32 %v1717, %v2295
      %v2372 = vadd.f32 %v1718, %v2297
      %v2373 = vadd.f32 %v1719, %v2300
      %v2374 = vadd.f32 %v1720, %v2302
      %v2375 = vadd.f32 %v1721, %v2305
      %v2376 = vadd.f32 %v1722, %v2307
      %v2377 = vadd.f32 %v1723, %v2310
      %v2378 = vadd.f32 %v1724, %v2312
      %v2379 = vadd.f32 %v1725, %v2315
      %v2380 = vadd.f32 %v1726, %v2317
      %v2381 = vadd.f32 %v1727, %v2320
      %v2382 = vadd.f32 %v1728, %v2322
      %v2383 = vadd.f32 %v1729, %v2325
      %v2384 = vadd.f32 %v1730, %v2327
      %v2385 = vadd.f32 %v1731, %v2330
      %v2386 = vadd.f32 %v1732, %v2332
      %v2387 = vadd.f32 %v1733, %v2335
      %v2388 = vadd.f32 %v1734, %v2337
      %v2389 = vadd.f32 %v1735, %v2340
      %v2390 = vadd.f32 %v1736, %v2342
      %v2391 = vadd.f32 %v1737, %v2345
      %v2392 = vadd.f32 %v1738, %v2347
      %v2393 = vadd.f32 %v1739, %v2350
      %v2394 = vadd.f32 %v1740, %v2352
      %v2395 = vadd.f32 %v1741, %v2355
      %v2396 = vadd.f32 %v1742, %v2357
      %v2397 = vadd.f32 %v1743, %v2360
      %v2398 = vadd.f32 %v1744, %v2362
      %v2399 = vadd.f32 %v1745, %v2365
      %v2400 = vadd.f32 %v1746, %v2367
      %v2401 = vld [vmem:[%s1460] sm:$0xe]
      %v2402 = vld [vmem:[%s1460 + $0xc] sm:$0xe]
      %v2403 = vld [vmem:[%s1460 + $0x18] sm:$0xe]
      %v2404 = vld [vmem:[%s1460 + $0x24] sm:$0xe]
      %v2405 = vld [vmem:[%s1460 + $0x30] sm:$0xe]
      %v2406 = vld [vmem:[%s1460 + $0x3c] sm:$0xe]
      %v2407 = vld [vmem:[%s1460 + $0x48] sm:$0xe]
      %v2408 = vld [vmem:[%s1460 + $0x54] sm:$0xe]
      %v2409 = vld [vmem:[%s1460 + $0x60] sm:$0xe]
      %v2410 = vld [vmem:[%s1460 + $0x6c] sm:$0xe]
      %v2411 = vld [vmem:[%s1460 + $0x78] sm:$0xe]
      %v2412 = vld [vmem:[%s1460 + $0x84] sm:$0xe]
      %v2413 = vld [vmem:[%s1460 + $0x90] sm:$0xe]
      %v2414 = vld [vmem:[%s1460 + $0x9c] sm:$0xe]
      %v2415 = vld [vmem:[%s1460 + $0xa8] sm:$0xe]
      %v2416 = vld [vmem:[%s1460 + $0xb4] sm:$0xe]
      %v2465 = vrot.slane %v2401, 5
      %v2466 = vrot.slane %v2465, 4
      %v2467 = vrot.slane %v1748, 5
      %v2468 = vsel %vm1125, %v2466, %v2467
      %v2469 = vrot.slane %v2467, 4
      %v2470 = vrot.slane %v1749, 5
      %v2471 = vsel %vm1125, %v2469, %v2470
      %v2472 = vrot.slane %v2402, 5
      %v2473 = vrot.slane %v2472, 4
      %v2474 = vrot.slane %v1751, 5
      %v2475 = vsel %vm1125, %v2473, %v2474
      %v2476 = vrot.slane %v2474, 4
      %v2477 = vrot.slane %v1752, 5
      %v2478 = vsel %vm1125, %v2476, %v2477
      %v2479 = vrot.slane %v2403, 5
      %v2480 = vrot.slane %v2479, 4
      %v2481 = vrot.slane %v1754, 5
      %v2482 = vsel %vm1125, %v2480, %v2481
      %v2483 = vrot.slane %v2481, 4
      %v2484 = vrot.slane %v1755, 5
      %v2485 = vsel %vm1125, %v2483, %v2484
      %v2486 = vrot.slane %v2404, 5
      %v2487 = vrot.slane %v2486, 4
      %v2488 = vrot.slane %v1757, 5
      %v2489 = vsel %vm1125, %v2487, %v2488
      %v2490 = vrot.slane %v2488, 4
      %v2491 = vrot.slane %v1758, 5
      %v2492 = vsel %vm1125, %v2490, %v2491
      %v2493 = vrot.slane %v2405, 5
      %v2494 = vrot.slane %v2493, 4
      %v2495 = vrot.slane %v1760, 5
      %v2496 = vsel %vm1125, %v2494, %v2495
      %v2497 = vrot.slane %v2495, 4
      %v2498 = vrot.slane %v1761, 5
      %v2499 = vsel %vm1125, %v2497, %v2498
      %v2500 = vrot.slane %v2406, 5
      %v2501 = vrot.slane %v2500, 4
      %v2502 = vrot.slane %v1763, 5
      %v2503 = vsel %vm1125, %v2501, %v2502
      %v2504 = vrot.slane %v2502, 4
      %v2505 = vrot.slane %v1764, 5
      %v2506 = vsel %vm1125, %v2504, %v2505
      %v2507 = vrot.slane %v2407, 5
      %v2508 = vrot.slane %v2507, 4
      %v2509 = vrot.slane %v1766, 5
      %v2510 = vsel %vm1125, %v2508, %v2509
      %v2511 = vrot.slane %v2509, 4
      %v2512 = vrot.slane %v1767, 5
      %v2513 = vsel %vm1125, %v2511, %v2512
      %v2514 = vrot.slane %v2408, 5
      %v2515 = vrot.slane %v2514, 4
      %v2516 = vrot.slane %v1769, 5
      %v2517 = vsel %vm1125, %v2515, %v2516
      %v2518 = vrot.slane %v2516, 4
      %v2519 = vrot.slane %v1770, 5
      %v2520 = vsel %vm1125, %v2518, %v2519
      %v2521 = vrot.slane %v2409, 5
      %v2522 = vrot.slane %v2521, 4
      %v2523 = vrot.slane %v1772, 5
      %v2524 = vsel %vm1125, %v2522, %v2523
      %v2525 = vrot.slane %v2523, 4
      %v2526 = vrot.slane %v1773, 5
      %v2527 = vsel %vm1125, %v2525, %v2526
      %v2528 = vrot.slane %v2410, 5
      %v2529 = vrot.slane %v2528, 4
      %v2530 = vrot.slane %v1775, 5
      %v2531 = vsel %vm1125, %v2529, %v2530
      %v2532 = vrot.slane %v2530, 4
      %v2533 = vrot.slane %v1776, 5
      %v2534 = vsel %vm1125, %v2532, %v2533
      %v2535 = vrot.slane %v2411, 5
      %v2536 = vrot.slane %v2535, 4
      %v2537 = vrot.slane %v1778, 5
      %v2538 = vsel %vm1125, %v2536, %v2537
      %v2539 = vrot.slane %v2537, 4
      %v2540 = vrot.slane %v1779, 5
      %v2541 = vsel %vm1125, %v2539, %v2540
      %v2542 = vrot.slane %v2412, 5
      %v2543 = vrot.slane %v2542, 4
      %v2544 = vrot.slane %v1781, 5
      %v2545 = vsel %vm1125, %v2543, %v2544
      %v2546 = vrot.slane %v2544, 4
      %v2547 = vrot.slane %v1782, 5
      %v2548 = vsel %vm1125, %v2546, %v2547
      %v2549 = vrot.slane %v2413, 5
      %v2550 = vrot.slane %v2549, 4
      %v2551 = vrot.slane %v1784, 5
      %v2552 = vsel %vm1125, %v2550, %v2551
      %v2553 = vrot.slane %v2551, 4
      %v2554 = vrot.slane %v1785, 5
      %v2555 = vsel %vm1125, %v2553, %v2554
      %v2556 = vrot.slane %v2414, 5
      %v2557 = vrot.slane %v2556, 4
      %v2558 = vrot.slane %v1787, 5
      %v2559 = vsel %vm1125, %v2557, %v2558
      %v2560 = vrot.slane %v2558, 4
      %v2561 = vrot.slane %v1788, 5
      %v2562 = vsel %vm1125, %v2560, %v2561
      %v2563 = vrot.slane %v2415, 5
      %v2564 = vrot.slane %v2563, 4
      %v2565 = vrot.slane %v1790, 5
      %v2566 = vsel %vm1125, %v2564, %v2565
      %v2567 = vrot.slane %v2565, 4
      %v2568 = vrot.slane %v1791, 5
      %v2569 = vsel %vm1125, %v2567, %v2568
      %v2570 = vrot.slane %v2416, 5
      %v2571 = vrot.slane %v2570, 4
      %v2572 = vrot.slane %v1793, 5
      %v2573 = vsel %vm1125, %v2571, %v2572
      %v2574 = vrot.slane %v2572, 4
      %v2575 = vrot.slane %v1794, 5
      %v2576 = vsel %vm1125, %v2574, %v2575
      %s2577 = scalar_lea.vmem %s1, 10
      %v2578 = vld [vmem:[%s2577] sm:$0x3]
      %v2579 = vunpack.c.l.b16 %v2468
      %v2580 = vunpack.c.l.b16 %v2471
      %v2581 = vunpack.c.l.b16 %v2475
      %v2582 = vunpack.c.l.b16 %v2478
      %v2583 = vunpack.c.l.b16 %v2482
      %v2584 = vunpack.c.l.b16 %v2485
      %v2585 = vunpack.c.l.b16 %v2489
      %v2586 = vunpack.c.l.b16 %v2492
      %v2587 = vunpack.c.l.b16 %v2496
      %v2588 = vunpack.c.l.b16 %v2499
      %v2589 = vunpack.c.l.b16 %v2503
      %v2590 = vunpack.c.l.b16 %v2506
      %v2591 = vunpack.c.l.b16 %v2510
      %v2592 = vunpack.c.l.b16 %v2513
      %v2593 = vunpack.c.l.b16 %v2517
      %v2594 = vunpack.c.l.b16 %v2520
      %v2595 = vunpack.c.l.b16 %v2524
      %v2596 = vunpack.c.l.b16 %v2527
      %v2597 = vunpack.c.l.b16 %v2531
      %v2598 = vunpack.c.l.b16 %v2534
      %v2599 = vunpack.c.l.b16 %v2538
      %v2600 = vunpack.c.l.b16 %v2541
      %v2601 = vunpack.c.l.b16 %v2545
      %v2602 = vunpack.c.l.b16 %v2548
      %v2603 = vunpack.c.l.b16 %v2552
      %v2604 = vunpack.c.l.b16 %v2555
      %v2605 = vunpack.c.l.b16 %v2559
      %v2606 = vunpack.c.l.b16 %v2562
      %v2607 = vunpack.c.l.b16 %v2566
      %v2608 = vunpack.c.l.b16 %v2569
      %v2609 = vunpack.c.l.b16 %v2573
      %v2610 = vunpack.c.l.b16 %v2576
      %v2611 = vpack.c.b16 %v2580, %v2579
      %v2612 = vpack.c.b16 %v2582, %v2581
      %v2613 = vpack.c.b16 %v2584, %v2583
      %v2614 = vpack.c.b16 %v2586, %v2585
      %v2615 = vpack.c.b16 %v2588, %v2587
      %v2616 = vpack.c.b16 %v2590, %v2589
      %v2617 = vpack.c.b16 %v2592, %v2591
      %v2618 = vpack.c.b16 %v2594, %v2593
      %v2619 = vpack.c.b16 %v2596, %v2595
      %v2620 = vpack.c.b16 %v2598, %v2597
      %v2621 = vpack.c.b16 %v2600, %v2599
      %v2622 = vpack.c.b16 %v2602, %v2601
      %v2623 = vpack.c.b16 %v2604, %v2603
      %v2624 = vpack.c.b16 %v2606, %v2605
      %v2625 = vpack.c.b16 %v2608, %v2607
      %v2626 = vpack.c.b16 %v2610, %v2609
      %v2628 = vsel %vm713, %v2611, 0
      %v2631 = vsel %vm713, %v2612, 0
      %v2634 = vsel %vm713, %v2613, 0
      %v2637 = vsel %vm713, %v2614, 0
      %v2640 = vsel %vm713, %v2615, 0
      %v2643 = vsel %vm713, %v2616, 0
      %v2646 = vsel %vm713, %v2617, 0
      %v2649 = vsel %vm713, %v2618, 0
      %v2652 = vsel %vm713, %v2619, 0
      %v2655 = vsel %vm713, %v2620, 0
      %v2658 = vsel %vm713, %v2621, 0
      %v2661 = vsel %vm713, %v2622, 0
      %v2664 = vsel %vm713, %v2623, 0
      %v2667 = vsel %vm713, %v2624, 0
      %v2670 = vsel %vm713, %v2625, 0
      %v2673 = vsel %vm713, %v2626, 0
      %v2676 = vsel %vm762, %v2578, 0
      %2678 = vmatpush.bf16.msra.mxu0 0
      %2679 = vmatpush.bf16.msra.mxu0 0
      %2680 = vmatpush.bf16.msra.mxu0 0
      %2681 = vmatpush.bf16.msra.mxu0 0
      %2682 = vmatpush.bf16.msra.mxu0 0
      %2683 = vmatpush.bf16.msra.mxu0 0
      %2684 = vmatpush.bf16.msra.mxu0 0
      %2685 = vmatpush.bf16.msra.mxu0 %v2676
      %2686 = vmatmul.bf16.gmra.mxu0 %v2628
      %v2687 = vpop.f32.mrf.mxu0
      %v2688 = vadd.f32 0.0, %v2687
      %v2689 = vpop.f32.mrf.mxu0
      %v2690 = vadd.f32 0.0, %v2689
      %2691 = vmatmul.bf16.gmra.mxu0 %v2631
      %v2692 = vpop.f32.mrf.mxu0
      %v2693 = vadd.f32 0.0, %v2692
      %v2694 = vpop.f32.mrf.mxu0
      %v2695 = vadd.f32 0.0, %v2694
      %2696 = vmatmul.bf16.gmra.mxu0 %v2634
      %v2697 = vpop.f32.mrf.mxu0
      %v2698 = vadd.f32 0.0, %v2697
      %v2699 = vpop.f32.mrf.mxu0
      %v2700 = vadd.f32 0.0, %v2699
      %2701 = vmatmul.bf16.gmra.mxu0 %v2637
      %v2702 = vpop.f32.mrf.mxu0
      %v2703 = vadd.f32 0.0, %v2702
      %v2704 = vpop.f32.mrf.mxu0
      %v2705 = vadd.f32 0.0, %v2704
      %2706 = vmatmul.bf16.gmra.mxu0 %v2640
      %v2707 = vpop.f32.mrf.mxu0
      %v2708 = vadd.f32 0.0, %v2707
      %v2709 = vpop.f32.mrf.mxu0
      %v2710 = vadd.f32 0.0, %v2709
      %2711 = vmatmul.bf16.gmra.mxu0 %v2643
      %v2712 = vpop.f32.mrf.mxu0
      %v2713 = vadd.f32 0.0, %v2712
      %v2714 = vpop.f32.mrf.mxu0
      %v2715 = vadd.f32 0.0, %v2714
      %2716 = vmatmul.bf16.gmra.mxu0 %v2646
      %v2717 = vpop.f32.mrf.mxu0
      %v2718 = vadd.f32 0.0, %v2717
      %v2719 = vpop.f32.mrf.mxu0
      %v2720 = vadd.f32 0.0, %v2719
      %2721 = vmatmul.bf16.gmra.mxu0 %v2649
      %v2722 = vpop.f32.mrf.mxu0
      %v2723 = vadd.f32 0.0, %v2722
      %v2724 = vpop.f32.mrf.mxu0
      %v2725 = vadd.f32 0.0, %v2724
      %2726 = vmatmul.bf16.gmra.mxu0 %v2652
      %v2727 = vpop.f32.mrf.mxu0
      %v2728 = vadd.f32 0.0, %v2727
      %v2729 = vpop.f32.mrf.mxu0
      %v2730 = vadd.f32 0.0, %v2729
      %2731 = vmatmul.bf16.gmra.mxu0 %v2655
      %v2732 = vpop.f32.mrf.mxu0
      %v2733 = vadd.f32 0.0, %v2732
      %v2734 = vpop.f32.mrf.mxu0
      %v2735 = vadd.f32 0.0, %v2734
      %2736 = vmatmul.bf16.gmra.mxu0 %v2658
      %v2737 = vpop.f32.mrf.mxu0
      %v2738 = vadd.f32 0.0, %v2737
      %v2739 = vpop.f32.mrf.mxu0
      %v2740 = vadd.f32 0.0, %v2739
      %2741 = vmatmul.bf16.gmra.mxu0 %v2661
      %v2742 = vpop.f32.mrf.mxu0
      %v2743 = vadd.f32 0.0, %v2742
      %v2744 = vpop.f32.mrf.mxu0
      %v2745 = vadd.f32 0.0, %v2744
      %2746 = vmatmul.bf16.gmra.mxu0 %v2664
      %v2747 = vpop.f32.mrf.mxu0
      %v2748 = vadd.f32 0.0, %v2747
      %v2749 = vpop.f32.mrf.mxu0
      %v2750 = vadd.f32 0.0, %v2749
      %2751 = vmatmul.bf16.gmra.mxu0 %v2667
      %v2752 = vpop.f32.mrf.mxu0
      %v2753 = vadd.f32 0.0, %v2752
      %v2754 = vpop.f32.mrf.mxu0
      %v2755 = vadd.f32 0.0, %v2754
      %2756 = vmatmul.bf16.gmra.mxu0 %v2670
      %v2757 = vpop.f32.mrf.mxu0
      %v2758 = vadd.f32 0.0, %v2757
      %v2759 = vpop.f32.mrf.mxu0
      %v2760 = vadd.f32 0.0, %v2759
      %2761 = vmatmul.bf16.gmra.mxu0 %v2673
      %v2762 = vpop.f32.mrf.mxu0
      %v2763 = vadd.f32 0.0, %v2762
      %v2764 = vpop.f32.mrf.mxu0
      %v2765 = vadd.f32 0.0, %v2764
      %2766 = vdwg.mxu0
      %v2767 = vadd.f32 %v2369, %v2688
      %v2768 = vadd.f32 %v2370, %v2690
      %v2769 = vadd.f32 %v2371, %v2693
      %v2770 = vadd.f32 %v2372, %v2695
      %v2771 = vadd.f32 %v2373, %v2698
      %v2772 = vadd.f32 %v2374, %v2700
      %v2773 = vadd.f32 %v2375, %v2703
      %v2774 = vadd.f32 %v2376, %v2705
      %v2775 = vadd.f32 %v2377, %v2708
      %v2776 = vadd.f32 %v2378, %v2710
      %v2777 = vadd.f32 %v2379, %v2713
      %v2778 = vadd.f32 %v2380, %v2715
      %v2779 = vadd.f32 %v2381, %v2718
      %v2780 = vadd.f32 %v2382, %v2720
      %v2781 = vadd.f32 %v2383, %v2723
      %v2782 = vadd.f32 %v2384, %v2725
      %v2783 = vadd.f32 %v2385, %v2728
      %v2784 = vadd.f32 %v2386, %v2730
      %v2785 = vadd.f32 %v2387, %v2733
      %v2786 = vadd.f32 %v2388, %v2735
      %v2787 = vadd.f32 %v2389, %v2738
      %v2788 = vadd.f32 %v2390, %v2740
      %v2789 = vadd.f32 %v2391, %v2743
      %v2790 = vadd.f32 %v2392, %v2745
      %v2791 = vadd.f32 %v2393, %v2748
      %v2792 = vadd.f32 %v2394, %v2750
      %v2793 = vadd.f32 %v2395, %v2753
      %v2794 = vadd.f32 %v2396, %v2755
      %v2795 = vadd.f32 %v2397, %v2758
      %v2796 = vadd.f32 %v2398, %v2760
      %v2797 = vadd.f32 %v2399, %v2763
      %v2798 = vadd.f32 %v2400, %v2765
      %s2799 = scalar_lea.vmem %s219, 24
      %v2800 = vld [vmem:[%s2799] sm:$0xf]
      %v2801 = vld [vmem:[%s2799 + $0x4] sm:$0xf]
      %v2802 = vld [vmem:[%s2799 + $0xc] sm:$0xf]
      %v2803 = vld [vmem:[%s2799 + $0x10] sm:$0xf]
      %v2804 = vld [vmem:[%s2799 + $0x18] sm:$0xf]
      %v2805 = vld [vmem:[%s2799 + $0x1c] sm:$0xf]
      %v2806 = vld [vmem:[%s2799 + $0x24] sm:$0xf]
      %v2807 = vld [vmem:[%s2799 + $0x28] sm:$0xf]
      %v2808 = vld [vmem:[%s2799 + $0x30] sm:$0xf]
      %v2809 = vld [vmem:[%s2799 + $0x34] sm:$0xf]
      %v2810 = vld [vmem:[%s2799 + $0x3c] sm:$0xf]
      %v2811 = vld [vmem:[%s2799 + $0x40] sm:$0xf]
      %v2812 = vld [vmem:[%s2799 + $0x48] sm:$0xf]
      %v2813 = vld [vmem:[%s2799 + $0x4c] sm:$0xf]
      %v2814 = vld [vmem:[%s2799 + $0x54] sm:$0xf]
      %v2815 = vld [vmem:[%s2799 + $0x58] sm:$0xf]
      %v2816 = vld [vmem:[%s2799 + $0x60] sm:$0xf]
      %v2817 = vld [vmem:[%s2799 + $0x64] sm:$0xf]
      %v2818 = vld [vmem:[%s2799 + $0x6c] sm:$0xf]
      %v2819 = vld [vmem:[%s2799 + $0x70] sm:$0xf]
      %v2820 = vld [vmem:[%s2799 + $0x78] sm:$0xf]
      %v2821 = vld [vmem:[%s2799 + $0x7c] sm:$0xf]
      %v2822 = vld [vmem:[%s2799 + $0x84] sm:$0xf]
      %v2823 = vld [vmem:[%s2799 + $0x88] sm:$0xf]
      %v2824 = vld [vmem:[%s2799 + $0x90] sm:$0xf]
      %v2825 = vld [vmem:[%s2799 + $0x94] sm:$0xf]
      %v2826 = vld [vmem:[%s2799 + $0x9c] sm:$0xf]
      %v2827 = vld [vmem:[%s2799 + $0xa0] sm:$0xf]
      %v2828 = vld [vmem:[%s2799 + $0xa8] sm:$0xf]
      %v2829 = vld [vmem:[%s2799 + $0xac] sm:$0xf]
      %v2830 = vld [vmem:[%s2799 + $0xb4] sm:$0xf]
      %v2831 = vld [vmem:[%s2799 + $0xb8] sm:$0xf]
      %s2832 = scalar_lea.vmem %s1, 12
      %v2833 = vld [vmem:[%s2832] sm:$0x3]
      %v2866 = vunpack.c.l.b16 %v2800
      %v2867 = vunpack.c.l.b16 %v2801
      %v2868 = vunpack.c.l.b16 %v2802
      %v2869 = vunpack.c.l.b16 %v2803
      %v2870 = vunpack.c.l.b16 %v2804
      %v2871 = vunpack.c.l.b16 %v2805
      %v2872 = vunpack.c.l.b16 %v2806
      %v2873 = vunpack.c.l.b16 %v2807
      %v2874 = vunpack.c.l.b16 %v2808
      %v2875 = vunpack.c.l.b16 %v2809
      %v2876 = vunpack.c.l.b16 %v2810
      %v2877 = vunpack.c.l.b16 %v2811
      %v2878 = vunpack.c.l.b16 %v2812
      %v2879 = vunpack.c.l.b16 %v2813
      %v2880 = vunpack.c.l.b16 %v2814
      %v2881 = vunpack.c.l.b16 %v2815
      %v2882 = vunpack.c.l.b16 %v2816
      %v2883 = vunpack.c.l.b16 %v2817
      %v2884 = vunpack.c.l.b16 %v2818
      %v2885 = vunpack.c.l.b16 %v2819
      %v2886 = vunpack.c.l.b16 %v2820
      %v2887 = vunpack.c.l.b16 %v2821
      %v2888 = vunpack.c.l.b16 %v2822
      %v2889 = vunpack.c.l.b16 %v2823
      %v2890 = vunpack.c.l.b16 %v2824
      %v2891 = vunpack.c.l.b16 %v2825
      %v2892 = vunpack.c.l.b16 %v2826
      %v2893 = vunpack.c.l.b16 %v2827
      %v2894 = vunpack.c.l.b16 %v2828
      %v2895 = vunpack.c.l.b16 %v2829
      %v2896 = vunpack.c.l.b16 %v2830
      %v2897 = vunpack.c.l.b16 %v2831
      %v2898 = vpack.c.b16 %v2867, %v2866
      %v2899 = vpack.c.b16 %v2869, %v2868
      %v2900 = vpack.c.b16 %v2871, %v2870
      %v2901 = vpack.c.b16 %v2873, %v2872
      %v2902 = vpack.c.b16 %v2875, %v2874
      %v2903 = vpack.c.b16 %v2877, %v2876
      %v2904 = vpack.c.b16 %v2879, %v2878
      %v2905 = vpack.c.b16 %v2881, %v2880
      %v2906 = vpack.c.b16 %v2883, %v2882
      %v2907 = vpack.c.b16 %v2885, %v2884
      %v2908 = vpack.c.b16 %v2887, %v2886
      %v2909 = vpack.c.b16 %v2889, %v2888
      %v2910 = vpack.c.b16 %v2891, %v2890
      %v2911 = vpack.c.b16 %v2893, %v2892
      %v2912 = vpack.c.b16 %v2895, %v2894
      %v2913 = vpack.c.b16 %v2897, %v2896
      %v2915 = vsel %vm713, %v2898, 0
      %v2918 = vsel %vm713, %v2899, 0
      %v2921 = vsel %vm713, %v2900, 0
      %v2924 = vsel %vm713, %v2901, 0
      %v2927 = vsel %vm713, %v2902, 0
      %v2930 = vsel %vm713, %v2903, 0
      %v2933 = vsel %vm713, %v2904, 0
      %v2936 = vsel %vm713, %v2905, 0
      %v2939 = vsel %vm713, %v2906, 0
      %v2942 = vsel %vm713, %v2907, 0
      %v2945 = vsel %vm713, %v2908, 0
      %v2948 = vsel %vm713, %v2909, 0
      %v2951 = vsel %vm713, %v2910, 0
      %v2954 = vsel %vm713, %v2911, 0
      %v2957 = vsel %vm713, %v2912, 0
      %v2960 = vsel %vm713, %v2913, 0
      %v2963 = vsel %vm762, %v2833, 0
      %2965 = vmatpush.bf16.msra.mxu0 0
      %2966 = vmatpush.bf16.msra.mxu0 0
      %2967 = vmatpush.bf16.msra.mxu0 0
      %2968 = vmatpush.bf16.msra.mxu0 0
      %2969 = vmatpush.bf16.msra.mxu0 0
      %2970 = vmatpush.bf16.msra.mxu0 0
      %2971 = vmatpush.bf16.msra.mxu0 0
      %2972 = vmatpush.bf16.msra.mxu0 %v2963
      %2973 = vmatmul.bf16.gmra.mxu0 %v2915
      %v2974 = vpop.f32.mrf.mxu0
      %v2975 = vadd.f32 0.0, %v2974
      %v2976 = vpop.f32.mrf.mxu0
      %v2977 = vadd.f32 0.0, %v2976
      %2978 = vmatmul.bf16.gmra.mxu0 %v2918
      %v2979 = vpop.f32.mrf.mxu0
      %v2980 = vadd.f32 0.0, %v2979
      %v2981 = vpop.f32.mrf.mxu0
      %v2982 = vadd.f32 0.0, %v2981
      %2983 = vmatmul.bf16.gmra.mxu0 %v2921
      %v2984 = vpop.f32.mrf.mxu0
      %v2985 = vadd.f32 0.0, %v2984
      %v2986 = vpop.f32.mrf.mxu0
      %v2987 = vadd.f32 0.0, %v2986
      %2988 = vmatmul.bf16.gmra.mxu0 %v2924
      %v2989 = vpop.f32.mrf.mxu0
      %v2990 = vadd.f32 0.0, %v2989
      %v2991 = vpop.f32.mrf.mxu0
      %v2992 = vadd.f32 0.0, %v2991
      %2993 = vmatmul.bf16.gmra.mxu0 %v2927
      %v2994 = vpop.f32.mrf.mxu0
      %v2995 = vadd.f32 0.0, %v2994
      %v2996 = vpop.f32.mrf.mxu0
      %v2997 = vadd.f32 0.0, %v2996
      %2998 = vmatmul.bf16.gmra.mxu0 %v2930
      %v2999 = vpop.f32.mrf.mxu0
      %v3000 = vadd.f32 0.0, %v2999
      %v3001 = vpop.f32.mrf.mxu0
      %v3002 = vadd.f32 0.0, %v3001
      %3003 = vmatmul.bf16.gmra.mxu0 %v2933
      %v3004 = vpop.f32.mrf.mxu0
      %v3005 = vadd.f32 0.0, %v3004
      %v3006 = vpop.f32.mrf.mxu0
      %v3007 = vadd.f32 0.0, %v3006
      %3008 = vmatmul.bf16.gmra.mxu0 %v2936
      %v3009 = vpop.f32.mrf.mxu0
      %v3010 = vadd.f32 0.0, %v3009
      %v3011 = vpop.f32.mrf.mxu0
      %v3012 = vadd.f32 0.0, %v3011
      %3013 = vmatmul.bf16.gmra.mxu0 %v2939
      %v3014 = vpop.f32.mrf.mxu0
      %v3015 = vadd.f32 0.0, %v3014
      %v3016 = vpop.f32.mrf.mxu0
      %v3017 = vadd.f32 0.0, %v3016
      %3018 = vmatmul.bf16.gmra.mxu0 %v2942
      %v3019 = vpop.f32.mrf.mxu0
      %v3020 = vadd.f32 0.0, %v3019
      %v3021 = vpop.f32.mrf.mxu0
      %v3022 = vadd.f32 0.0, %v3021
      %3023 = vmatmul.bf16.gmra.mxu0 %v2945
      %v3024 = vpop.f32.mrf.mxu0
      %v3025 = vadd.f32 0.0, %v3024
      %v3026 = vpop.f32.mrf.mxu0
      %v3027 = vadd.f32 0.0, %v3026
      %3028 = vmatmul.bf16.gmra.mxu0 %v2948
      %v3029 = vpop.f32.mrf.mxu0
      %v3030 = vadd.f32 0.0, %v3029
      %v3031 = vpop.f32.mrf.mxu0
      %v3032 = vadd.f32 0.0, %v3031
      %3033 = vmatmul.bf16.gmra.mxu0 %v2951
      %v3034 = vpop.f32.mrf.mxu0
      %v3035 = vadd.f32 0.0, %v3034
      %v3036 = vpop.f32.mrf.mxu0
      %v3037 = vadd.f32 0.0, %v3036
      %3038 = vmatmul.bf16.gmra.mxu0 %v2954
      %v3039 = vpop.f32.mrf.mxu0
      %v3040 = vadd.f32 0.0, %v3039
      %v3041 = vpop.f32.mrf.mxu0
      %v3042 = vadd.f32 0.0, %v3041
      %3043 = vmatmul.bf16.gmra.mxu0 %v2957
      %v3044 = vpop.f32.mrf.mxu0
      %v3045 = vadd.f32 0.0, %v3044
      %v3046 = vpop.f32.mrf.mxu0
      %v3047 = vadd.f32 0.0, %v3046
      %3048 = vmatmul.bf16.gmra.mxu0 %v2960
      %v3049 = vpop.f32.mrf.mxu0
      %v3050 = vadd.f32 0.0, %v3049
      %v3051 = vpop.f32.mrf.mxu0
      %v3052 = vadd.f32 0.0, %v3051
      %3053 = vdwg.mxu0
      %v3054 = vadd.f32 %v2767, %v2975
      %v3055 = vadd.f32 %v2768, %v2977
      %v3056 = vadd.f32 %v2769, %v2980
      %v3057 = vadd.f32 %v2770, %v2982
      %v3058 = vadd.f32 %v2771, %v2985
      %v3059 = vadd.f32 %v2772, %v2987
      %v3060 = vadd.f32 %v2773, %v2990
      %v3061 = vadd.f32 %v2774, %v2992
      %v3062 = vadd.f32 %v2775, %v2995
      %v3063 = vadd.f32 %v2776, %v2997
      %v3064 = vadd.f32 %v2777, %v3000
      %v3065 = vadd.f32 %v2778, %v3002
      %v3066 = vadd.f32 %v2779, %v3005
      %v3067 = vadd.f32 %v2780, %v3007
      %v3068 = vadd.f32 %v2781, %v3010
      %v3069 = vadd.f32 %v2782, %v3012
      %v3070 = vadd.f32 %v2783, %v3015
      %v3071 = vadd.f32 %v2784, %v3017
      %v3072 = vadd.f32 %v2785, %v3020
      %v3073 = vadd.f32 %v2786, %v3022
      %v3074 = vadd.f32 %v2787, %v3025
      %v3075 = vadd.f32 %v2788, %v3027
      %v3076 = vadd.f32 %v2789, %v3030
      %v3077 = vadd.f32 %v2790, %v3032
      %v3078 = vadd.f32 %v2791, %v3035
      %v3079 = vadd.f32 %v2792, %v3037
      %v3080 = vadd.f32 %v2793, %v3040
      %v3081 = vadd.f32 %v2794, %v3042
      %v3082 = vadd.f32 %v2795, %v3045
      %v3083 = vadd.f32 %v2796, %v3047
      %v3084 = vadd.f32 %v2797, %v3050
      %v3085 = vadd.f32 %v2798, %v3052
      %v3086 = vld [vmem:[%s2799] sm:$0xf]
      %v3087 = vld [vmem:[%s2799 + $0x4] sm:$0xf]
      %v3088 = vld [vmem:[%s2799 + $0x8] sm:$0x1]
      %v3089 = vld [vmem:[%s2799 + $0xc] sm:$0xf]
      %v3090 = vld [vmem:[%s2799 + $0x10] sm:$0xf]
      %v3091 = vld [vmem:[%s2799 + $0x14] sm:$0x1]
      %v3092 = vld [vmem:[%s2799 + $0x18] sm:$0xf]
      %v3093 = vld [vmem:[%s2799 + $0x1c] sm:$0xf]
      %v3094 = vld [vmem:[%s2799 + $0x20] sm:$0x1]
      %v3095 = vld [vmem:[%s2799 + $0x24] sm:$0xf]
      %v3096 = vld [vmem:[%s2799 + $0x28] sm:$0xf]
      %v3097 = vld [vmem:[%s2799 + $0x2c] sm:$0x1]
      %v3098 = vld [vmem:[%s2799 + $0x30] sm:$0xf]
      %v3099 = vld [vmem:[%s2799 + $0x34] sm:$0xf]
      %v3100 = vld [vmem:[%s2799 + $0x38] sm:$0x1]
      %v3101 = vld [vmem:[%s2799 + $0x3c] sm:$0xf]
      %v3102 = vld [vmem:[%s2799 + $0x40] sm:$0xf]
      %v3103 = vld [vmem:[%s2799 + $0x44] sm:$0x1]
      %v3104 = vld [vmem:[%s2799 + $0x48] sm:$0xf]
      %v3105 = vld [vmem:[%s2799 + $0x4c] sm:$0xf]
      %v3106 = vld [vmem:[%s2799 + $0x50] sm:$0x1]
      %v3107 = vld [vmem:[%s2799 + $0x54] sm:$0xf]
      %v3108 = vld [vmem:[%s2799 + $0x58] sm:$0xf]
      %v3109 = vld [vmem:[%s2799 + $0x5c] sm:$0x1]
      %v3110 = vld [vmem:[%s2799 + $0x60] sm:$0xf]
      %v3111 = vld [vmem:[%s2799 + $0x64] sm:$0xf]
      %v3112 = vld [vmem:[%s2799 + $0x68] sm:$0x1]
      %v3113 = vld [vmem:[%s2799 + $0x6c] sm:$0xf]
      %v3114 = vld [vmem:[%s2799 + $0x70] sm:$0xf]
      %v3115 = vld [vmem:[%s2799 + $0x74] sm:$0x1]
      %v3116 = vld [vmem:[%s2799 + $0x78] sm:$0xf]
      %v3117 = vld [vmem:[%s2799 + $0x7c] sm:$0xf]
      %v3118 = vld [vmem:[%s2799 + $0x80] sm:$0x1]
      %v3119 = vld [vmem:[%s2799 + $0x84] sm:$0xf]
      %v3120 = vld [vmem:[%s2799 + $0x88] sm:$0xf]
      %v3121 = vld [vmem:[%s2799 + $0x8c] sm:$0x1]
      %v3122 = vld [vmem:[%s2799 + $0x90] sm:$0xf]
      %v3123 = vld [vmem:[%s2799 + $0x94] sm:$0xf]
      %v3124 = vld [vmem:[%s2799 + $0x98] sm:$0x1]
      %v3125 = vld [vmem:[%s2799 + $0x9c] sm:$0xf]
      %v3126 = vld [vmem:[%s2799 + $0xa0] sm:$0xf]
      %v3127 = vld [vmem:[%s2799 + $0xa4] sm:$0x1]
      %v3128 = vld [vmem:[%s2799 + $0xa8] sm:$0xf]
      %v3129 = vld [vmem:[%s2799 + $0xac] sm:$0xf]
      %v3130 = vld [vmem:[%s2799 + $0xb0] sm:$0x1]
      %v3131 = vld [vmem:[%s2799 + $0xb4] sm:$0xf]
      %v3132 = vld [vmem:[%s2799 + $0xb8] sm:$0xf]
      %v3133 = vld [vmem:[%s2799 + $0xbc] sm:$0x1]
      %v3135 = vshrl.u32 %v3086, 16
      %v3137 = vrot.slane %v3135, 4
      %v3138 = vshll.u32 %v3086, 16
      %v3140 = vrot.slane %v3138, 5
      %v3141 = vor.u32 %v3137, %v3140
      %v3142 = vrot.slane %v3141, 4
      %v3144 = vshll.u32 %v3087, 16
      %v3146 = vrot.slane %v3144, 5
      %v3147 = vsel %vm278, %v3142, %v3146
      %v3148 = vshrl.u32 %v3087, 16
      %v3150 = vrot.slane %v3148, 4
      %v3151 = vor.u32 %v3150, %v3146
      %v3152 = vrot.slane %v3151, 4
      %v3154 = vshll.u32 %v3088, 16
      %v3156 = vrot.slane %v3154, 5
      %v3157 = vsel %vm278, %v3152, %v3156
      %v3159 = vshrl.u32 %v3089, 16
      %v3161 = vrot.slane %v3159, 4
      %v3162 = vshll.u32 %v3089, 16
      %v3164 = vrot.slane %v3162, 5
      %v3165 = vor.u32 %v3161, %v3164
      %v3166 = vrot.slane %v3165, 4
      %v3168 = vshll.u32 %v3090, 16
      %v3170 = vrot.slane %v3168, 5
      %v3171 = vsel %vm278, %v3166, %v3170
      %v3172 = vshrl.u32 %v3090, 16
      %v3174 = vrot.slane %v3172, 4
      %v3175 = vor.u32 %v3174, %v3170
      %v3176 = vrot.slane %v3175, 4
      %v3178 = vshll.u32 %v3091, 16
      %v3180 = vrot.slane %v3178, 5
      %v3181 = vsel %vm278, %v3176, %v3180
      %v3183 = vshrl.u32 %v3092, 16
      %v3185 = vrot.slane %v3183, 4
      %v3186 = vshll.u32 %v3092, 16
      %v3188 = vrot.slane %v3186, 5
      %v3189 = vor.u32 %v3185, %v3188
      %v3190 = vrot.slane %v3189, 4
      %v3192 = vshll.u32 %v3093, 16
      %v3194 = vrot.slane %v3192, 5
      %v3195 = vsel %vm278, %v3190, %v3194
      %v3196 = vshrl.u32 %v3093, 16
      %v3198 = vrot.slane %v3196, 4
      %v3199 = vor.u32 %v3198, %v3194
      %v3200 = vrot.slane %v3199, 4
      %v3202 = vshll.u32 %v3094, 16
      %v3204 = vrot.slane %v3202, 5
      %v3205 = vsel %vm278, %v3200, %v3204
      %v3207 = vshrl.u32 %v3095, 16
      %v3209 = vrot.slane %v3207, 4
      %v3210 = vshll.u32 %v3095, 16
      %v3212 = vrot.slane %v3210, 5
      %v3213 = vor.u32 %v3209, %v3212
      %v3214 = vrot.slane %v3213, 4
      %v3216 = vshll.u32 %v3096, 16
      %v3218 = vrot.slane %v3216, 5
      %v3219 = vsel %vm278, %v3214, %v3218
      %v3220 = vshrl.u32 %v3096, 16
      %v3222 = vrot.slane %v3220, 4
      %v3223 = vor.u32 %v3222, %v3218
      %v3224 = vrot.slane %v3223, 4
      %v3226 = vshll.u32 %v3097, 16
      %v3228 = vrot.slane %v3226, 5
      %v3229 = vsel %vm278, %v3224, %v3228
      %v3231 = vshrl.u32 %v3098, 16
      %v3233 = vrot.slane %v3231, 4
      %v3234 = vshll.u32 %v3098, 16
      %v3236 = vrot.slane %v3234, 5
      %v3237 = vor.u32 %v3233, %v3236
      %v3238 = vrot.slane %v3237, 4
      %v3240 = vshll.u32 %v3099, 16
      %v3242 = vrot.slane %v3240, 5
      %v3243 = vsel %vm278, %v3238, %v3242
      %v3244 = vshrl.u32 %v3099, 16
      %v3246 = vrot.slane %v3244, 4
      %v3247 = vor.u32 %v3246, %v3242
      %v3248 = vrot.slane %v3247, 4
      %v3250 = vshll.u32 %v3100, 16
      %v3252 = vrot.slane %v3250, 5
      %v3253 = vsel %vm278, %v3248, %v3252
      %v3255 = vshrl.u32 %v3101, 16
      %v3257 = vrot.slane %v3255, 4
      %v3258 = vshll.u32 %v3101, 16
      %v3260 = vrot.slane %v3258, 5
      %v3261 = vor.u32 %v3257, %v3260
      %v3262 = vrot.slane %v3261, 4
      %v3264 = vshll.u32 %v3102, 16
      %v3266 = vrot.slane %v3264, 5
      %v3267 = vsel %vm278, %v3262, %v3266
      %v3268 = vshrl.u32 %v3102, 16
      %v3270 = vrot.slane %v3268, 4
      %v3271 = vor.u32 %v3270, %v3266
      %v3272 = vrot.slane %v3271, 4
      %v3274 = vshll.u32 %v3103, 16
      %v3276 = vrot.slane %v3274, 5
      %v3277 = vsel %vm278, %v3272, %v3276
      %v3279 = vshrl.u32 %v3104, 16
      %v3281 = vrot.slane %v3279, 4
      %v3282 = vshll.u32 %v3104, 16
      %v3284 = vrot.slane %v3282, 5
      %v3285 = vor.u32 %v3281, %v3284
      %v3286 = vrot.slane %v3285, 4
      %v3288 = vshll.u32 %v3105, 16
      %v3290 = vrot.slane %v3288, 5
      %v3291 = vsel %vm278, %v3286, %v3290
      %v3292 = vshrl.u32 %v3105, 16
      %v3294 = vrot.slane %v3292, 4
      %v3295 = vor.u32 %v3294, %v3290
      %v3296 = vrot.slane %v3295, 4
      %v3298 = vshll.u32 %v3106, 16
      %v3300 = vrot.slane %v3298, 5
      %v3301 = vsel %vm278, %v3296, %v3300
      %v3303 = vshrl.u32 %v3107, 16
      %v3305 = vrot.slane %v3303, 4
      %v3306 = vshll.u32 %v3107, 16
      %v3308 = vrot.slane %v3306, 5
      %v3309 = vor.u32 %v3305, %v3308
      %v3310 = vrot.slane %v3309, 4
      %v3312 = vshll.u32 %v3108, 16
      %v3314 = vrot.slane %v3312, 5
      %v3315 = vsel %vm278, %v3310, %v3314
      %v3316 = vshrl.u32 %v3108, 16
      %v3318 = vrot.slane %v3316, 4
      %v3319 = vor.u32 %v3318, %v3314
      %v3320 = vrot.slane %v3319, 4
      %v3322 = vshll.u32 %v3109, 16
      %v3324 = vrot.slane %v3322, 5
      %v3325 = vsel %vm278, %v3320, %v3324
      %v3327 = vshrl.u32 %v3110, 16
      %v3329 = vrot.slane %v3327, 4
      %v3330 = vshll.u32 %v3110, 16
      %v3332 = vrot.slane %v3330, 5
      %v3333 = vor.u32 %v3329, %v3332
      %v3334 = vrot.slane %v3333, 4
      %v3336 = vshll.u32 %v3111, 16
      %v3338 = vrot.slane %v3336, 5
      %v3339 = vsel %vm278, %v3334, %v3338
      %v3340 = vshrl.u32 %v3111, 16
      %v3342 = vrot.slane %v3340, 4
      %v3343 = vor.u32 %v3342, %v3338
      %v3344 = vrot.slane %v3343, 4
      %v3346 = vshll.u32 %v3112, 16
      %v3348 = vrot.slane %v3346, 5
      %v3349 = vsel %vm278, %v3344, %v3348
      %v3351 = vshrl.u32 %v3113, 16
      %v3353 = vrot.slane %v3351, 4
      %v3354 = vshll.u32 %v3113, 16
      %v3356 = vrot.slane %v3354, 5
      %v3357 = vor.u32 %v3353, %v3356
      %v3358 = vrot.slane %v3357, 4
      %v3360 = vshll.u32 %v3114, 16
      %v3362 = vrot.slane %v3360, 5
      %v3363 = vsel %vm278, %v3358, %v3362
      %v3364 = vshrl.u32 %v3114, 16
      %v3366 = vrot.slane %v3364, 4
      %v3367 = vor.u32 %v3366, %v3362
      %v3368 = vrot.slane %v3367, 4
      %v3370 = vshll.u32 %v3115, 16
      %v3372 = vrot.slane %v3370, 5
      %v3373 = vsel %vm278, %v3368, %v3372
      %v3375 = vshrl.u32 %v3116, 16
      %v3377 = vrot.slane %v3375, 4
      %v3378 = vshll.u32 %v3116, 16
      %v3380 = vrot.slane %v3378, 5
      %v3381 = vor.u32 %v3377, %v3380
      %v3382 = vrot.slane %v3381, 4
      %v3384 = vshll.u32 %v3117, 16
      %v3386 = vrot.slane %v3384, 5
      %v3387 = vsel %vm278, %v3382, %v3386
      %v3388 = vshrl.u32 %v3117, 16
      %v3390 = vrot.slane %v3388, 4
      %v3391 = vor.u32 %v3390, %v3386
      %v3392 = vrot.slane %v3391, 4
      %v3394 = vshll.u32 %v3118, 16
      %v3396 = vrot.slane %v3394, 5
      %v3397 = vsel %vm278, %v3392, %v3396
      %v3399 = vshrl.u32 %v3119, 16
      %v3401 = vrot.slane %v3399, 4
      %v3402 = vshll.u32 %v3119, 16
      %v3404 = vrot.slane %v3402, 5
      %v3405 = vor.u32 %v3401, %v3404
      %v3406 = vrot.slane %v3405, 4
      %v3408 = vshll.u32 %v3120, 16
      %v3410 = vrot.slane %v3408, 5
      %v3411 = vsel %vm278, %v3406, %v3410
      %v3412 = vshrl.u32 %v3120, 16
      %v3414 = vrot.slane %v3412, 4
      %v3415 = vor.u32 %v3414, %v3410
      %v3416 = vrot.slane %v3415, 4
      %v3418 = vshll.u32 %v3121, 16
      %v3420 = vrot.slane %v3418, 5
      %v3421 = vsel %vm278, %v3416, %v3420
      %v3423 = vshrl.u32 %v3122, 16
      %v3425 = vrot.slane %v3423, 4
      %v3426 = vshll.u32 %v3122, 16
      %v3428 = vrot.slane %v3426, 5
      %v3429 = vor.u32 %v3425, %v3428
      %v3430 = vrot.slane %v3429, 4
      %v3432 = vshll.u32 %v3123, 16
      %v3434 = vrot.slane %v3432, 5
      %v3435 = vsel %vm278, %v3430, %v3434
      %v3436 = vshrl.u32 %v3123, 16
      %v3438 = vrot.slane %v3436, 4
      %v3439 = vor.u32 %v3438, %v3434
      %v3440 = vrot.slane %v3439, 4
      %v3442 = vshll.u32 %v3124, 16
      %v3444 = vrot.slane %v3442, 5
      %v3445 = vsel %vm278, %v3440, %v3444
      %v3447 = vshrl.u32 %v3125, 16
      %v3449 = vrot.slane %v3447, 4
      %v3450 = vshll.u32 %v3125, 16
      %v3452 = vrot.slane %v3450, 5
      %v3453 = vor.u32 %v3449, %v3452
      %v3454 = vrot.slane %v3453, 4
      %v3456 = vshll.u32 %v3126, 16
      %v3458 = vrot.slane %v3456, 5
      %v3459 = vsel %vm278, %v3454, %v3458
      %v3460 = vshrl.u32 %v3126, 16
      %v3462 = vrot.slane %v3460, 4
      %v3463 = vor.u32 %v3462, %v3458
      %v3464 = vrot.slane %v3463, 4
      %v3466 = vshll.u32 %v3127, 16
      %v3468 = vrot.slane %v3466, 5
      %v3469 = vsel %vm278, %v3464, %v3468
      %v3471 = vshrl.u32 %v3128, 16
      %v3473 = vrot.slane %v3471, 4
      %v3474 = vshll.u32 %v3128, 16
      %v3476 = vrot.slane %v3474, 5
      %v3477 = vor.u32 %v3473, %v3476
      %v3478 = vrot.slane %v3477, 4
      %v3480 = vshll.u32 %v3129, 16
      %v3482 = vrot.slane %v3480, 5
      %v3483 = vsel %vm278, %v3478, %v3482
      %v3484 = vshrl.u32 %v3129, 16
      %v3486 = vrot.slane %v3484, 4
      %v3487 = vor.u32 %v3486, %v3482
      %v3488 = vrot.slane %v3487, 4
      %v3490 = vshll.u32 %v3130, 16
      %v3492 = vrot.slane %v3490, 5
      %v3493 = vsel %vm278, %v3488, %v3492
      %v3495 = vshrl.u32 %v3131, 16
      %v3497 = vrot.slane %v3495, 4
      %v3498 = vshll.u32 %v3131, 16
      %v3500 = vrot.slane %v3498, 5
      %v3501 = vor.u32 %v3497, %v3500
      %v3502 = vrot.slane %v3501, 4
      %v3504 = vshll.u32 %v3132, 16
      %v3506 = vrot.slane %v3504, 5
      %v3507 = vsel %vm278, %v3502, %v3506
      %v3508 = vshrl.u32 %v3132, 16
      %v3510 = vrot.slane %v3508, 4
      %v3511 = vor.u32 %v3510, %v3506
      %v3512 = vrot.slane %v3511, 4
      %v3514 = vshll.u32 %v3133, 16
      %v3516 = vrot.slane %v3514, 5
      %v3517 = vsel %vm278, %v3512, %v3516
      %s3518 = scalar_lea.vmem %s1, 14
      %v3519 = vld [vmem:[%s3518] sm:$0x3]
      %v3520 = vunpack.c.l.b16 %v3147
      %v3521 = vunpack.c.l.b16 %v3157
      %v3522 = vunpack.c.l.b16 %v3171
      %v3523 = vunpack.c.l.b16 %v3181
      %v3524 = vunpack.c.l.b16 %v3195
      %v3525 = vunpack.c.l.b16 %v3205
      %v3526 = vunpack.c.l.b16 %v3219
      %v3527 = vunpack.c.l.b16 %v3229
      %v3528 = vunpack.c.l.b16 %v3243
      %v3529 = vunpack.c.l.b16 %v3253
      %v3530 = vunpack.c.l.b16 %v3267
      %v3531 = vunpack.c.l.b16 %v3277
      %v3532 = vunpack.c.l.b16 %v3291
      %v3533 = vunpack.c.l.b16 %v3301
      %v3534 = vunpack.c.l.b16 %v3315
      %v3535 = vunpack.c.l.b16 %v3325
      %v3536 = vunpack.c.l.b16 %v3339
      %v3537 = vunpack.c.l.b16 %v3349
      %v3538 = vunpack.c.l.b16 %v3363
      %v3539 = vunpack.c.l.b16 %v3373
      %v3540 = vunpack.c.l.b16 %v3387
      %v3541 = vunpack.c.l.b16 %v3397
      %v3542 = vunpack.c.l.b16 %v3411
      %v3543 = vunpack.c.l.b16 %v3421
      %v3544 = vunpack.c.l.b16 %v3435
      %v3545 = vunpack.c.l.b16 %v3445
      %v3546 = vunpack.c.l.b16 %v3459
      %v3547 = vunpack.c.l.b16 %v3469
      %v3548 = vunpack.c.l.b16 %v3483
      %v3549 = vunpack.c.l.b16 %v3493
      %v3550 = vunpack.c.l.b16 %v3507
      %v3551 = vunpack.c.l.b16 %v3517
      %v3552 = vpack.c.b16 %v3521, %v3520
      %v3553 = vpack.c.b16 %v3523, %v3522
      %v3554 = vpack.c.b16 %v3525, %v3524
      %v3555 = vpack.c.b16 %v3527, %v3526
      %v3556 = vpack.c.b16 %v3529, %v3528
      %v3557 = vpack.c.b16 %v3531, %v3530
      %v3558 = vpack.c.b16 %v3533, %v3532
      %v3559 = vpack.c.b16 %v3535, %v3534
      %v3560 = vpack.c.b16 %v3537, %v3536
      %v3561 = vpack.c.b16 %v3539, %v3538
      %v3562 = vpack.c.b16 %v3541, %v3540
      %v3563 = vpack.c.b16 %v3543, %v3542
      %v3564 = vpack.c.b16 %v3545, %v3544
      %v3565 = vpack.c.b16 %v3547, %v3546
      %v3566 = vpack.c.b16 %v3549, %v3548
      %v3567 = vpack.c.b16 %v3551, %v3550
      %v3569 = vsel %vm713, %v3552, 0
      %v3572 = vsel %vm713, %v3553, 0
      %v3575 = vsel %vm713, %v3554, 0
      %v3578 = vsel %vm713, %v3555, 0
      %v3581 = vsel %vm713, %v3556, 0
      %v3584 = vsel %vm713, %v3557, 0
      %v3587 = vsel %vm713, %v3558, 0
      %v3590 = vsel %vm713, %v3559, 0
      %v3593 = vsel %vm713, %v3560, 0
      %v3596 = vsel %vm713, %v3561, 0
      %v3599 = vsel %vm713, %v3562, 0
      %v3602 = vsel %vm713, %v3563, 0
      %v3605 = vsel %vm713, %v3564, 0
      %v3608 = vsel %vm713, %v3565, 0
      %v3611 = vsel %vm713, %v3566, 0
      %v3614 = vsel %vm713, %v3567, 0
      %v3617 = vsel %vm762, %v3519, 0
      %3619 = vmatpush.bf16.msra.mxu0 0
      %3620 = vmatpush.bf16.msra.mxu0 0
      %3621 = vmatpush.bf16.msra.mxu0 0
      %3622 = vmatpush.bf16.msra.mxu0 0
      %3623 = vmatpush.bf16.msra.mxu0 0
      %3624 = vmatpush.bf16.msra.mxu0 0
      %3625 = vmatpush.bf16.msra.mxu0 0
      %3626 = vmatpush.bf16.msra.mxu0 %v3617
      %3627 = vmatmul.bf16.gmra.mxu0 %v3569
      %v3628 = vpop.f32.mrf.mxu0
      %v3629 = vadd.f32 0.0, %v3628
      %v3630 = vpop.f32.mrf.mxu0
      %v3631 = vadd.f32 0.0, %v3630
      %3632 = vmatmul.bf16.gmra.mxu0 %v3572
      %v3633 = vpop.f32.mrf.mxu0
      %v3634 = vadd.f32 0.0, %v3633
      %v3635 = vpop.f32.mrf.mxu0
      %v3636 = vadd.f32 0.0, %v3635
      %3637 = vmatmul.bf16.gmra.mxu0 %v3575
      %v3638 = vpop.f32.mrf.mxu0
      %v3639 = vadd.f32 0.0, %v3638
      %v3640 = vpop.f32.mrf.mxu0
      %v3641 = vadd.f32 0.0, %v3640
      %3642 = vmatmul.bf16.gmra.mxu0 %v3578
      %v3643 = vpop.f32.mrf.mxu0
      %v3644 = vadd.f32 0.0, %v3643
      %v3645 = vpop.f32.mrf.mxu0
      %v3646 = vadd.f32 0.0, %v3645
      %3647 = vmatmul.bf16.gmra.mxu0 %v3581
      %v3648 = vpop.f32.mrf.mxu0
      %v3649 = vadd.f32 0.0, %v3648
      %v3650 = vpop.f32.mrf.mxu0
      %v3651 = vadd.f32 0.0, %v3650
      %3652 = vmatmul.bf16.gmra.mxu0 %v3584
      %v3653 = vpop.f32.mrf.mxu0
      %v3654 = vadd.f32 0.0, %v3653
      %v3655 = vpop.f32.mrf.mxu0
      %v3656 = vadd.f32 0.0, %v3655
      %3657 = vmatmul.bf16.gmra.mxu0 %v3587
      %v3658 = vpop.f32.mrf.mxu0
      %v3659 = vadd.f32 0.0, %v3658
      %v3660 = vpop.f32.mrf.mxu0
      %v3661 = vadd.f32 0.0, %v3660
      %3662 = vmatmul.bf16.gmra.mxu0 %v3590
      %v3663 = vpop.f32.mrf.mxu0
      %v3664 = vadd.f32 0.0, %v3663
      %v3665 = vpop.f32.mrf.mxu0
      %v3666 = vadd.f32 0.0, %v3665
      %3667 = vmatmul.bf16.gmra.mxu0 %v3593
      %v3668 = vpop.f32.mrf.mxu0
      %v3669 = vadd.f32 0.0, %v3668
      %v3670 = vpop.f32.mrf.mxu0
      %v3671 = vadd.f32 0.0, %v3670
      %3672 = vmatmul.bf16.gmra.mxu0 %v3596
      %v3673 = vpop.f32.mrf.mxu0
      %v3674 = vadd.f32 0.0, %v3673
      %v3675 = vpop.f32.mrf.mxu0
      %v3676 = vadd.f32 0.0, %v3675
      %3677 = vmatmul.bf16.gmra.mxu0 %v3599
      %v3678 = vpop.f32.mrf.mxu0
      %v3679 = vadd.f32 0.0, %v3678
      %v3680 = vpop.f32.mrf.mxu0
      %v3681 = vadd.f32 0.0, %v3680
      %3682 = vmatmul.bf16.gmra.mxu0 %v3602
      %v3683 = vpop.f32.mrf.mxu0
      %v3684 = vadd.f32 0.0, %v3683
      %v3685 = vpop.f32.mrf.mxu0
      %v3686 = vadd.f32 0.0, %v3685
      %3687 = vmatmul.bf16.gmra.mxu0 %v3605
      %v3688 = vpop.f32.mrf.mxu0
      %v3689 = vadd.f32 0.0, %v3688
      %v3690 = vpop.f32.mrf.mxu0
      %v3691 = vadd.f32 0.0, %v3690
      %3692 = vmatmul.bf16.gmra.mxu0 %v3608
      %v3693 = vpop.f32.mrf.mxu0
      %v3694 = vadd.f32 0.0, %v3693
      %v3695 = vpop.f32.mrf.mxu0
      %v3696 = vadd.f32 0.0, %v3695
      %3697 = vmatmul.bf16.gmra.mxu0 %v3611
      %v3698 = vpop.f32.mrf.mxu0
      %v3699 = vadd.f32 0.0, %v3698
      %v3700 = vpop.f32.mrf.mxu0
      %v3701 = vadd.f32 0.0, %v3700
      %3702 = vmatmul.bf16.gmra.mxu0 %v3614
      %v3703 = vpop.f32.mrf.mxu0
      %v3704 = vadd.f32 0.0, %v3703
      %v3705 = vpop.f32.mrf.mxu0
      %v3706 = vadd.f32 0.0, %v3705
      %3707 = vdwg.mxu0
      %v3708 = vadd.f32 %v3054, %v3629
      %v3709 = vadd.f32 %v3055, %v3631
      %v3710 = vadd.f32 %v3056, %v3634
      %v3711 = vadd.f32 %v3057, %v3636
      %v3712 = vadd.f32 %v3058, %v3639
      %v3713 = vadd.f32 %v3059, %v3641
      %v3714 = vadd.f32 %v3060, %v3644
      %v3715 = vadd.f32 %v3061, %v3646
      %v3716 = vadd.f32 %v3062, %v3649
      %v3717 = vadd.f32 %v3063, %v3651
      %v3718 = vadd.f32 %v3064, %v3654
      %v3719 = vadd.f32 %v3065, %v3656
      %v3720 = vadd.f32 %v3066, %v3659
      %v3721 = vadd.f32 %v3067, %v3661
      %v3722 = vadd.f32 %v3068, %v3664
      %v3723 = vadd.f32 %v3069, %v3666
      %v3724 = vadd.f32 %v3070, %v3669
      %v3725 = vadd.f32 %v3071, %v3671
      %v3726 = vadd.f32 %v3072, %v3674
      %v3727 = vadd.f32 %v3073, %v3676
      %v3728 = vadd.f32 %v3074, %v3679
      %v3729 = vadd.f32 %v3075, %v3681
      %v3730 = vadd.f32 %v3076, %v3684
      %v3731 = vadd.f32 %v3077, %v3686
      %v3732 = vadd.f32 %v3078, %v3689
      %v3733 = vadd.f32 %v3079, %v3691
      %v3734 = vadd.f32 %v3080, %v3694
      %v3735 = vadd.f32 %v3081, %v3696
      %v3736 = vadd.f32 %v3082, %v3699
      %v3737 = vadd.f32 %v3083, %v3701
      %v3738 = vadd.f32 %v3084, %v3704
      %v3739 = vadd.f32 %v3085, %v3706
      %v3740 = vld [vmem:[%s2799] sm:$0xe]
      %v3741 = vld [vmem:[%s2799 + $0xc] sm:$0xe]
      %v3742 = vld [vmem:[%s2799 + $0x18] sm:$0xe]
      %v3743 = vld [vmem:[%s2799 + $0x24] sm:$0xe]
      %v3744 = vld [vmem:[%s2799 + $0x30] sm:$0xe]
      %v3745 = vld [vmem:[%s2799 + $0x3c] sm:$0xe]
      %v3746 = vld [vmem:[%s2799 + $0x48] sm:$0xe]
      %v3747 = vld [vmem:[%s2799 + $0x54] sm:$0xe]
      %v3748 = vld [vmem:[%s2799 + $0x60] sm:$0xe]
      %v3749 = vld [vmem:[%s2799 + $0x6c] sm:$0xe]
      %v3750 = vld [vmem:[%s2799 + $0x78] sm:$0xe]
      %v3751 = vld [vmem:[%s2799 + $0x84] sm:$0xe]
      %v3752 = vld [vmem:[%s2799 + $0x90] sm:$0xe]
      %v3753 = vld [vmem:[%s2799 + $0x9c] sm:$0xe]
      %v3754 = vld [vmem:[%s2799 + $0xa8] sm:$0xe]
      %v3755 = vld [vmem:[%s2799 + $0xb4] sm:$0xe]
      %v3804 = vrot.slane %v3740, 5
      %v3805 = vrot.slane %v3804, 4
      %v3806 = vrot.slane %v3087, 5
      %v3807 = vsel %vm1125, %v3805, %v3806
      %v3808 = vrot.slane %v3806, 4
      %v3809 = vrot.slane %v3088, 5
      %v3810 = vsel %vm1125, %v3808, %v3809
      %v3811 = vrot.slane %v3741, 5
      %v3812 = vrot.slane %v3811, 4
      %v3813 = vrot.slane %v3090, 5
      %v3814 = vsel %vm1125, %v3812, %v3813
      %v3815 = vrot.slane %v3813, 4
      %v3816 = vrot.slane %v3091, 5
      %v3817 = vsel %vm1125, %v3815, %v3816
      %v3818 = vrot.slane %v3742, 5
      %v3819 = vrot.slane %v3818, 4
      %v3820 = vrot.slane %v3093, 5
      %v3821 = vsel %vm1125, %v3819, %v3820
      %v3822 = vrot.slane %v3820, 4
      %v3823 = vrot.slane %v3094, 5
      %v3824 = vsel %vm1125, %v3822, %v3823
      %v3825 = vrot.slane %v3743, 5
      %v3826 = vrot.slane %v3825, 4
      %v3827 = vrot.slane %v3096, 5
      %v3828 = vsel %vm1125, %v3826, %v3827
      %v3829 = vrot.slane %v3827, 4
      %v3830 = vrot.slane %v3097, 5
      %v3831 = vsel %vm1125, %v3829, %v3830
      %v3832 = vrot.slane %v3744, 5
      %v3833 = vrot.slane %v3832, 4
      %v3834 = vrot.slane %v3099, 5
      %v3835 = vsel %vm1125, %v3833, %v3834
      %v3836 = vrot.slane %v3834, 4
      %v3837 = vrot.slane %v3100, 5
      %v3838 = vsel %vm1125, %v3836, %v3837
      %v3839 = vrot.slane %v3745, 5
      %v3840 = vrot.slane %v3839, 4
      %v3841 = vrot.slane %v3102, 5
      %v3842 = vsel %vm1125, %v3840, %v3841
      %v3843 = vrot.slane %v3841, 4
      %v3844 = vrot.slane %v3103, 5
      %v3845 = vsel %vm1125, %v3843, %v3844
      %v3846 = vrot.slane %v3746, 5
      %v3847 = vrot.slane %v3846, 4
      %v3848 = vrot.slane %v3105, 5
      %v3849 = vsel %vm1125, %v3847, %v3848
      %v3850 = vrot.slane %v3848, 4
      %v3851 = vrot.slane %v3106, 5
      %v3852 = vsel %vm1125, %v3850, %v3851
      %v3853 = vrot.slane %v3747, 5
      %v3854 = vrot.slane %v3853, 4
      %v3855 = vrot.slane %v3108, 5
      %v3856 = vsel %vm1125, %v3854, %v3855
      %v3857 = vrot.slane %v3855, 4
      %v3858 = vrot.slane %v3109, 5
      %v3859 = vsel %vm1125, %v3857, %v3858
      %v3860 = vrot.slane %v3748, 5
      %v3861 = vrot.slane %v3860, 4
      %v3862 = vrot.slane %v3111, 5
      %v3863 = vsel %vm1125, %v3861, %v3862
      %v3864 = vrot.slane %v3862, 4
      %v3865 = vrot.slane %v3112, 5
      %v3866 = vsel %vm1125, %v3864, %v3865
      %v3867 = vrot.slane %v3749, 5
      %v3868 = vrot.slane %v3867, 4
      %v3869 = vrot.slane %v3114, 5
      %v3870 = vsel %vm1125, %v3868, %v3869
      %v3871 = vrot.slane %v3869, 4
      %v3872 = vrot.slane %v3115, 5
      %v3873 = vsel %vm1125, %v3871, %v3872
      %v3874 = vrot.slane %v3750, 5
      %v3875 = vrot.slane %v3874, 4
      %v3876 = vrot.slane %v3117, 5
      %v3877 = vsel %vm1125, %v3875, %v3876
      %v3878 = vrot.slane %v3876, 4
      %v3879 = vrot.slane %v3118, 5
      %v3880 = vsel %vm1125, %v3878, %v3879
      %v3881 = vrot.slane %v3751, 5
      %v3882 = vrot.slane %v3881, 4
      %v3883 = vrot.slane %v3120, 5
      %v3884 = vsel %vm1125, %v3882, %v3883
      %v3885 = vrot.slane %v3883, 4
      %v3886 = vrot.slane %v3121, 5
      %v3887 = vsel %vm1125, %v3885, %v3886
      %v3888 = vrot.slane %v3752, 5
      %v3889 = vrot.slane %v3888, 4
      %v3890 = vrot.slane %v3123, 5
      %v3891 = vsel %vm1125, %v3889, %v3890
      %v3892 = vrot.slane %v3890, 4
      %v3893 = vrot.slane %v3124, 5
      %v3894 = vsel %vm1125, %v3892, %v3893
      %v3895 = vrot.slane %v3753, 5
      %v3896 = vrot.slane %v3895, 4
      %v3897 = vrot.slane %v3126, 5
      %v3898 = vsel %vm1125, %v3896, %v3897
      %v3899 = vrot.slane %v3897, 4
      %v3900 = vrot.slane %v3127, 5
      %v3901 = vsel %vm1125, %v3899, %v3900
      %v3902 = vrot.slane %v3754, 5
      %v3903 = vrot.slane %v3902, 4
      %v3904 = vrot.slane %v3129, 5
      %v3905 = vsel %vm1125, %v3903, %v3904
      %v3906 = vrot.slane %v3904, 4
      %v3907 = vrot.slane %v3130, 5
      %v3908 = vsel %vm1125, %v3906, %v3907
      %v3909 = vrot.slane %v3755, 5
      %v3910 = vrot.slane %v3909, 4
      %v3911 = vrot.slane %v3132, 5
      %v3912 = vsel %vm1125, %v3910, %v3911
      %v3913 = vrot.slane %v3911, 4
      %v3914 = vrot.slane %v3133, 5
      %v3915 = vsel %vm1125, %v3913, %v3914
      %s3916 = scalar_lea.vmem %s1, 16
      %v3917 = vld [vmem:[%s3916] sm:$0x3]
      %v3918 = vunpack.c.l.b16 %v3807
      %v3919 = vunpack.c.l.b16 %v3810
      %v3920 = vunpack.c.l.b16 %v3814
      %v3921 = vunpack.c.l.b16 %v3817
      %v3922 = vunpack.c.l.b16 %v3821
      %v3923 = vunpack.c.l.b16 %v3824
      %v3924 = vunpack.c.l.b16 %v3828
      %v3925 = vunpack.c.l.b16 %v3831
      %v3926 = vunpack.c.l.b16 %v3835
      %v3927 = vunpack.c.l.b16 %v3838
      %v3928 = vunpack.c.l.b16 %v3842
      %v3929 = vunpack.c.l.b16 %v3845
      %v3930 = vunpack.c.l.b16 %v3849
      %v3931 = vunpack.c.l.b16 %v3852
      %v3932 = vunpack.c.l.b16 %v3856
      %v3933 = vunpack.c.l.b16 %v3859
      %v3934 = vunpack.c.l.b16 %v3863
      %v3935 = vunpack.c.l.b16 %v3866
      %v3936 = vunpack.c.l.b16 %v3870
      %v3937 = vunpack.c.l.b16 %v3873
      %v3938 = vunpack.c.l.b16 %v3877
      %v3939 = vunpack.c.l.b16 %v3880
      %v3940 = vunpack.c.l.b16 %v3884
      %v3941 = vunpack.c.l.b16 %v3887
      %v3942 = vunpack.c.l.b16 %v3891
      %v3943 = vunpack.c.l.b16 %v3894
      %v3944 = vunpack.c.l.b16 %v3898
      %v3945 = vunpack.c.l.b16 %v3901
      %v3946 = vunpack.c.l.b16 %v3905
      %v3947 = vunpack.c.l.b16 %v3908
      %v3948 = vunpack.c.l.b16 %v3912
      %v3949 = vunpack.c.l.b16 %v3915
      %v3950 = vpack.c.b16 %v3919, %v3918
      %v3951 = vpack.c.b16 %v3921, %v3920
      %v3952 = vpack.c.b16 %v3923, %v3922
      %v3953 = vpack.c.b16 %v3925, %v3924
      %v3954 = vpack.c.b16 %v3927, %v3926
      %v3955 = vpack.c.b16 %v3929, %v3928
      %v3956 = vpack.c.b16 %v3931, %v3930
      %v3957 = vpack.c.b16 %v3933, %v3932
      %v3958 = vpack.c.b16 %v3935, %v3934
      %v3959 = vpack.c.b16 %v3937, %v3936
      %v3960 = vpack.c.b16 %v3939, %v3938
      %v3961 = vpack.c.b16 %v3941, %v3940
      %v3962 = vpack.c.b16 %v3943, %v3942
      %v3963 = vpack.c.b16 %v3945, %v3944
      %v3964 = vpack.c.b16 %v3947, %v3946
      %v3965 = vpack.c.b16 %v3949, %v3948
      %v3967 = vsel %vm713, %v3950, 0
      %v3970 = vsel %vm713, %v3951, 0
      %v3973 = vsel %vm713, %v3952, 0
      %v3976 = vsel %vm713, %v3953, 0
      %v3979 = vsel %vm713, %v3954, 0
      %v3982 = vsel %vm713, %v3955, 0
      %v3985 = vsel %vm713, %v3956, 0
      %v3988 = vsel %vm713, %v3957, 0
      %v3991 = vsel %vm713, %v3958, 0
      %v3994 = vsel %vm713, %v3959, 0
      %v3997 = vsel %vm713, %v3960, 0
      %v4000 = vsel %vm713, %v3961, 0
      %v4003 = vsel %vm713, %v3962, 0
      %v4006 = vsel %vm713, %v3963, 0
      %v4009 = vsel %vm713, %v3964, 0
      %v4012 = vsel %vm713, %v3965, 0
      %v4015 = vsel %vm762, %v3917, 0
      %4017 = vmatpush.bf16.msra.mxu0 0
      %4018 = vmatpush.bf16.msra.mxu0 0
      %4019 = vmatpush.bf16.msra.mxu0 0
      %4020 = vmatpush.bf16.msra.mxu0 0
      %4021 = vmatpush.bf16.msra.mxu0 0
      %4022 = vmatpush.bf16.msra.mxu0 0
      %4023 = vmatpush.bf16.msra.mxu0 0
      %4024 = vmatpush.bf16.msra.mxu0 %v4015
      %4025 = vmatmul.bf16.gmra.mxu0 %v3967
      %v4026 = vpop.f32.mrf.mxu0
      %v4027 = vadd.f32 0.0, %v4026
      %v4028 = vpop.f32.mrf.mxu0
      %v4029 = vadd.f32 0.0, %v4028
      %4030 = vmatmul.bf16.gmra.mxu0 %v3970
      %v4031 = vpop.f32.mrf.mxu0
      %v4032 = vadd.f32 0.0, %v4031
      %v4033 = vpop.f32.mrf.mxu0
      %v4034 = vadd.f32 0.0, %v4033
      %4035 = vmatmul.bf16.gmra.mxu0 %v3973
      %v4036 = vpop.f32.mrf.mxu0
      %v4037 = vadd.f32 0.0, %v4036
      %v4038 = vpop.f32.mrf.mxu0
      %v4039 = vadd.f32 0.0, %v4038
      %4040 = vmatmul.bf16.gmra.mxu0 %v3976
      %v4041 = vpop.f32.mrf.mxu0
      %v4042 = vadd.f32 0.0, %v4041
      %v4043 = vpop.f32.mrf.mxu0
      %v4044 = vadd.f32 0.0, %v4043
      %4045 = vmatmul.bf16.gmra.mxu0 %v3979
      %v4046 = vpop.f32.mrf.mxu0
      %v4047 = vadd.f32 0.0, %v4046
      %v4048 = vpop.f32.mrf.mxu0
      %v4049 = vadd.f32 0.0, %v4048
      %4050 = vmatmul.bf16.gmra.mxu0 %v3982
      %v4051 = vpop.f32.mrf.mxu0
      %v4052 = vadd.f32 0.0, %v4051
      %v4053 = vpop.f32.mrf.mxu0
      %v4054 = vadd.f32 0.0, %v4053
      %4055 = vmatmul.bf16.gmra.mxu0 %v3985
      %v4056 = vpop.f32.mrf.mxu0
      %v4057 = vadd.f32 0.0, %v4056
      %v4058 = vpop.f32.mrf.mxu0
      %v4059 = vadd.f32 0.0, %v4058
      %4060 = vmatmul.bf16.gmra.mxu0 %v3988
      %v4061 = vpop.f32.mrf.mxu0
      %v4062 = vadd.f32 0.0, %v4061
      %v4063 = vpop.f32.mrf.mxu0
      %v4064 = vadd.f32 0.0, %v4063
      %4065 = vmatmul.bf16.gmra.mxu0 %v3991
      %v4066 = vpop.f32.mrf.mxu0
      %v4067 = vadd.f32 0.0, %v4066
      %v4068 = vpop.f32.mrf.mxu0
      %v4069 = vadd.f32 0.0, %v4068
      %4070 = vmatmul.bf16.gmra.mxu0 %v3994
      %v4071 = vpop.f32.mrf.mxu0
      %v4072 = vadd.f32 0.0, %v4071
      %v4073 = vpop.f32.mrf.mxu0
      %v4074 = vadd.f32 0.0, %v4073
      %4075 = vmatmul.bf16.gmra.mxu0 %v3997
      %v4076 = vpop.f32.mrf.mxu0
      %v4077 = vadd.f32 0.0, %v4076
      %v4078 = vpop.f32.mrf.mxu0
      %v4079 = vadd.f32 0.0, %v4078
      %4080 = vmatmul.bf16.gmra.mxu0 %v4000
      %v4081 = vpop.f32.mrf.mxu0
      %v4082 = vadd.f32 0.0, %v4081
      %v4083 = vpop.f32.mrf.mxu0
      %v4084 = vadd.f32 0.0, %v4083
      %4085 = vmatmul.bf16.gmra.mxu0 %v4003
      %v4086 = vpop.f32.mrf.mxu0
      %v4087 = vadd.f32 0.0, %v4086
      %v4088 = vpop.f32.mrf.mxu0
      %v4089 = vadd.f32 0.0, %v4088
      %4090 = vmatmul.bf16.gmra.mxu0 %v4006
      %v4091 = vpop.f32.mrf.mxu0
      %v4092 = vadd.f32 0.0, %v4091
      %v4093 = vpop.f32.mrf.mxu0
      %v4094 = vadd.f32 0.0, %v4093
      %4095 = vmatmul.bf16.gmra.mxu0 %v4009
      %v4096 = vpop.f32.mrf.mxu0
      %v4097 = vadd.f32 0.0, %v4096
      %v4098 = vpop.f32.mrf.mxu0
      %v4099 = vadd.f32 0.0, %v4098
      %4100 = vmatmul.bf16.gmra.mxu0 %v4012
      %v4101 = vpop.f32.mrf.mxu0
      %v4102 = vadd.f32 0.0, %v4101
      %v4103 = vpop.f32.mrf.mxu0
      %v4104 = vadd.f32 0.0, %v4103
      %4105 = vdwg.mxu0
      %v4106 = vadd.f32 %v3708, %v4027
      %v4107 = vadd.f32 %v3709, %v4029
      %v4108 = vadd.f32 %v3710, %v4032
      %v4109 = vadd.f32 %v3711, %v4034
      %v4110 = vadd.f32 %v3712, %v4037
      %v4111 = vadd.f32 %v3713, %v4039
      %v4112 = vadd.f32 %v3714, %v4042
      %v4113 = vadd.f32 %v3715, %v4044
      %v4114 = vadd.f32 %v3716, %v4047
      %v4115 = vadd.f32 %v3717, %v4049
      %v4116 = vadd.f32 %v3718, %v4052
      %v4117 = vadd.f32 %v3719, %v4054
      %v4118 = vadd.f32 %v3720, %v4057
      %v4119 = vadd.f32 %v3721, %v4059
      %v4120 = vadd.f32 %v3722, %v4062
      %v4121 = vadd.f32 %v3723, %v4064
      %v4122 = vadd.f32 %v3724, %v4067
      %v4123 = vadd.f32 %v3725, %v4069
      %v4124 = vadd.f32 %v3726, %v4072
      %v4125 = vadd.f32 %v3727, %v4074
      %v4126 = vadd.f32 %v3728, %v4077
      %v4127 = vadd.f32 %v3729, %v4079
      %v4128 = vadd.f32 %v3730, %v4082
      %v4129 = vadd.f32 %v3731, %v4084
      %v4130 = vadd.f32 %v3732, %v4087
      %v4131 = vadd.f32 %v3733, %v4089
      %v4132 = vadd.f32 %v3734, %v4092
      %v4133 = vadd.f32 %v3735, %v4094
      %v4134 = vadd.f32 %v3736, %v4097
      %v4135 = vadd.f32 %v3737, %v4099
      %v4136 = vadd.f32 %v3738, %v4102
      %v4137 = vadd.f32 %v3739, %v4104
      %v4138 = vld [vmem:[%s2] sm:$0x1]
      %v4140 = vperm.slane %v4138, 0
      %v4142 = vadd.f32 %v4106, %v4140
      %v4143 = vadd.f32 %v4107, %v4140
      %v4144 = vadd.f32 %v4108, %v4140
      %v4145 = vadd.f32 %v4109, %v4140
      %v4146 = vadd.f32 %v4110, %v4140
      %v4147 = vadd.f32 %v4111, %v4140
      %v4148 = vadd.f32 %v4112, %v4140
      %v4149 = vadd.f32 %v4113, %v4140
      %v4150 = vadd.f32 %v4114, %v4140
      %v4151 = vadd.f32 %v4115, %v4140
      %v4152 = vadd.f32 %v4116, %v4140
      %v4153 = vadd.f32 %v4117, %v4140
      %v4154 = vadd.f32 %v4118, %v4140
      %v4155 = vadd.f32 %v4119, %v4140
      %v4156 = vadd.f32 %v4120, %v4140
      %v4157 = vadd.f32 %v4121, %v4140
      %v4158 = vadd.f32 %v4122, %v4140
      %v4159 = vadd.f32 %v4123, %v4140
      %v4160 = vadd.f32 %v4124, %v4140
      %v4161 = vadd.f32 %v4125, %v4140
      %v4162 = vadd.f32 %v4126, %v4140
      %v4163 = vadd.f32 %v4127, %v4140
      %v4164 = vadd.f32 %v4128, %v4140
      %v4165 = vadd.f32 %v4129, %v4140
      %v4166 = vadd.f32 %v4130, %v4140
      %v4167 = vadd.f32 %v4131, %v4140
      %v4168 = vadd.f32 %v4132, %v4140
      %v4169 = vadd.f32 %v4133, %v4140
      %v4170 = vadd.f32 %v4134, %v4140
      %v4171 = vadd.f32 %v4135, %v4140
      %v4172 = vadd.f32 %v4136, %v4140
      %v4173 = vadd.f32 %v4137, %v4140
      %v4174 = vmax.f32 %v4142, 0.0
      %v4175 = vmax.f32 %v4143, 0.0
      %v4176 = vmax.f32 %v4144, 0.0
      %v4177 = vmax.f32 %v4145, 0.0
      %v4178 = vmax.f32 %v4146, 0.0
      %v4179 = vmax.f32 %v4147, 0.0
      %v4180 = vmax.f32 %v4148, 0.0
      %v4181 = vmax.f32 %v4149, 0.0
      %v4182 = vmax.f32 %v4150, 0.0
      %v4183 = vmax.f32 %v4151, 0.0
      %v4184 = vmax.f32 %v4152, 0.0
      %v4185 = vmax.f32 %v4153, 0.0
      %v4186 = vmax.f32 %v4154, 0.0
      %v4187 = vmax.f32 %v4155, 0.0
      %v4188 = vmax.f32 %v4156, 0.0
      %v4189 = vmax.f32 %v4157, 0.0
      %v4190 = vmax.f32 %v4158, 0.0
      %v4191 = vmax.f32 %v4159, 0.0
      %v4192 = vmax.f32 %v4160, 0.0
      %v4193 = vmax.f32 %v4161, 0.0
      %v4194 = vmax.f32 %v4162, 0.0
      %v4195 = vmax.f32 %v4163, 0.0
      %v4196 = vmax.f32 %v4164, 0.0
      %v4197 = vmax.f32 %v4165, 0.0
      %v4198 = vmax.f32 %v4166, 0.0
      %v4199 = vmax.f32 %v4167, 0.0
      %v4200 = vmax.f32 %v4168, 0.0
      %v4201 = vmax.f32 %v4169, 0.0
      %v4202 = vmax.f32 %v4170, 0.0
      %v4203 = vmax.f32 %v4171, 0.0
      %v4204 = vmax.f32 %v4172, 0.0
      %v4205 = vmax.f32 %v4173, 0.0
      %v4206 = vpack.c.bf16 %v4175, %v4174
      %v4207 = vpack.c.bf16 %v4177, %v4176
      %v4208 = vpack.c.bf16 %v4179, %v4178
      %v4209 = vpack.c.bf16 %v4181, %v4180
      %v4210 = vpack.c.bf16 %v4183, %v4182
      %v4211 = vpack.c.bf16 %v4185, %v4184
      %v4212 = vpack.c.bf16 %v4187, %v4186
      %v4213 = vpack.c.bf16 %v4189, %v4188
      %v4214 = vpack.c.bf16 %v4191, %v4190
      %v4215 = vpack.c.bf16 %v4193, %v4192
      %v4216 = vpack.c.bf16 %v4195, %v4194
      %v4217 = vpack.c.bf16 %v4197, %v4196
      %v4218 = vpack.c.bf16 %v4199, %v4198
      %v4219 = vpack.c.bf16 %v4201, %v4200
      %v4220 = vpack.c.bf16 %v4203, %v4202
      %v4221 = vpack.c.bf16 %v4205, %v4204
      %v4222 = vld [vmem:[%s3] sm:$0xf]
      %v4223 = vld [vmem:[%s3 + $0x4] sm:$0xf]
      %v4224 = vld [vmem:[%s3 + $0x8] sm:$0xf]
      %v4225 = vld [vmem:[%s3 + $0xc] sm:$0xf]
      %v4226 = vld [vmem:[%s4] sm:$0x1]
      %v4228 = vperm.slane %v4226, 0
      %v4234 = vunpack.c.l.b16 %v4222
      %v4235 = vunpack.c.l.b16 %v4223
      %v4236 = vunpack.c.l.b16 %v4224
      %v4237 = vunpack.c.l.b16 %v4225
      %v4238 = vpack.c.b16 %v4235, %v4234
      %v4239 = vpack.c.b16 %v4237, %v4236
      %vm4242 = vcmask 261120
      %v4244 = vsel %vm4242, %v4206, 0
      %v4247 = vsel %vm4242, %v4207, 0
      %v4250 = vsel %vm4242, %v4208, 0
      %v4253 = vsel %vm4242, %v4209, 0
      %v4256 = vsel %vm4242, %v4210, 0
      %v4259 = vsel %vm4242, %v4211, 0
      %v4262 = vsel %vm4242, %v4212, 0
      %v4265 = vsel %vm4242, %v4213, 0
      %v4268 = vsel %vm4242, %v4214, 0
      %v4271 = vsel %vm4242, %v4215, 0
      %v4274 = vsel %vm4242, %v4216, 0
      %v4277 = vsel %vm4242, %v4217, 0
      %v4280 = vsel %vm4242, %v4218, 0
      %v4283 = vsel %vm4242, %v4219, 0
      %v4286 = vsel %vm4242, %v4220, 0
      %v4289 = vsel %vm4242, %v4221, 0
      %4291 = vmatpush.bf16.msra.mxu0 0
      %4292 = vmatpush.bf16.msra.mxu0 0
      %4293 = vmatpush.bf16.msra.mxu0 0
      %4294 = vmatpush.bf16.msra.mxu0 0
      %4295 = vmatpush.bf16.msra.mxu0 0
      %4296 = vmatpush.bf16.msra.mxu0 0
      %4297 = vmatpush.bf16.msra.mxu0 %v4239
      %4298 = vmatpush.bf16.msra.mxu0 %v4238
      %4299 = vmatmul.bf16.gmra.mxu0 %v4244
      %v4300 = vpop.f32.mrf.mxu0
      %v4301 = vadd.f32 %v4228, %v4300
      %v4302 = vpop.f32.mrf.mxu0
      %v4303 = vadd.f32 %v4228, %v4302
      %4304 = vmatmul.bf16.gmra.mxu0 %v4247
      %v4305 = vpop.f32.mrf.mxu0
      %v4306 = vadd.f32 %v4228, %v4305
      %v4307 = vpop.f32.mrf.mxu0
      %v4308 = vadd.f32 %v4228, %v4307
      %4309 = vmatmul.bf16.gmra.mxu0 %v4250
      %v4310 = vpop.f32.mrf.mxu0
      %v4311 = vadd.f32 %v4228, %v4310
      %v4312 = vpop.f32.mrf.mxu0
      %v4313 = vadd.f32 %v4228, %v4312
      %4314 = vmatmul.bf16.gmra.mxu0 %v4253
      %v4315 = vpop.f32.mrf.mxu0
      %v4316 = vadd.f32 %v4228, %v4315
      %v4317 = vpop.f32.mrf.mxu0
      %v4318 = vadd.f32 %v4228, %v4317
      %4319 = vmatmul.bf16.gmra.mxu0 %v4256
      %v4320 = vpop.f32.mrf.mxu0
      %v4321 = vadd.f32 %v4228, %v4320
      %v4322 = vpop.f32.mrf.mxu0
      %v4323 = vadd.f32 %v4228, %v4322
      %4324 = vmatmul.bf16.gmra.mxu0 %v4259
      %v4325 = vpop.f32.mrf.mxu0
      %v4326 = vadd.f32 %v4228, %v4325
      %v4327 = vpop.f32.mrf.mxu0
      %v4328 = vadd.f32 %v4228, %v4327
      %4329 = vmatmul.bf16.gmra.mxu0 %v4262
      %v4330 = vpop.f32.mrf.mxu0
      %v4331 = vadd.f32 %v4228, %v4330
      %v4332 = vpop.f32.mrf.mxu0
      %v4333 = vadd.f32 %v4228, %v4332
      %4334 = vmatmul.bf16.gmra.mxu0 %v4265
      %v4335 = vpop.f32.mrf.mxu0
      %v4336 = vadd.f32 %v4228, %v4335
      %v4337 = vpop.f32.mrf.mxu0
      %v4338 = vadd.f32 %v4228, %v4337
      %4339 = vmatmul.bf16.gmra.mxu0 %v4268
      %v4340 = vpop.f32.mrf.mxu0
      %v4341 = vadd.f32 %v4228, %v4340
      %v4342 = vpop.f32.mrf.mxu0
      %v4343 = vadd.f32 %v4228, %v4342
      %4344 = vmatmul.bf16.gmra.mxu0 %v4271
      %v4345 = vpop.f32.mrf.mxu0
      %v4346 = vadd.f32 %v4228, %v4345
      %v4347 = vpop.f32.mrf.mxu0
      %v4348 = vadd.f32 %v4228, %v4347
      %4349 = vmatmul.bf16.gmra.mxu0 %v4274
      %v4350 = vpop.f32.mrf.mxu0
      %v4351 = vadd.f32 %v4228, %v4350
      %v4352 = vpop.f32.mrf.mxu0
      %v4353 = vadd.f32 %v4228, %v4352
      %4354 = vmatmul.bf16.gmra.mxu0 %v4277
      %v4355 = vpop.f32.mrf.mxu0
      %v4356 = vadd.f32 %v4228, %v4355
      %v4357 = vpop.f32.mrf.mxu0
      %v4358 = vadd.f32 %v4228, %v4357
      %4359 = vmatmul.bf16.gmra.mxu0 %v4280
      %v4360 = vpop.f32.mrf.mxu0
      %v4361 = vadd.f32 %v4228, %v4360
      %v4362 = vpop.f32.mrf.mxu0
      %v4363 = vadd.f32 %v4228, %v4362
      %4364 = vmatmul.bf16.gmra.mxu0 %v4283
      %v4365 = vpop.f32.mrf.mxu0
      %v4366 = vadd.f32 %v4228, %v4365
      %v4367 = vpop.f32.mrf.mxu0
      %v4368 = vadd.f32 %v4228, %v4367
      %4369 = vmatmul.bf16.gmra.mxu0 %v4286
      %v4370 = vpop.f32.mrf.mxu0
      %v4371 = vadd.f32 %v4228, %v4370
      %v4372 = vpop.f32.mrf.mxu0
      %v4373 = vadd.f32 %v4228, %v4372
      %4374 = vmatmul.bf16.gmra.mxu0 %v4289
      %v4375 = vpop.f32.mrf.mxu0
      %v4376 = vadd.f32 %v4228, %v4375
      %v4377 = vpop.f32.mrf.mxu0
      %v4378 = vadd.f32 %v4228, %v4377
      %4379 = vdwg.mxu0
      %4380 = vst [vmem:[%s224] sm:$0xff] %v4301
      %4381 = vst [vmem:[%s224 + $0x8] sm:$0xff] %v4303
      %4382 = vst [vmem:[%s224 + $0x10] sm:$0xff] %v4306
      %4383 = vst [vmem:[%s224 + $0x18] sm:$0xff] %v4308
      %4384 = vst [vmem:[%s224 + $0x20] sm:$0xff] %v4311
      %4385 = vst [vmem:[%s224 + $0x28] sm:$0xff] %v4313
      %4386 = vst [vmem:[%s224 + $0x30] sm:$0xff] %v4316
      %4387 = vst [vmem:[%s224 + $0x38] sm:$0xff] %v4318
      %4388 = vst [vmem:[%s224 + $0x40] sm:$0xff] %v4321
      %4389 = vst [vmem:[%s224 + $0x48] sm:$0xff] %v4323
      %4390 = vst [vmem:[%s224 + $0x50] sm:$0xff] %v4326
      %4391 = vst [vmem:[%s224 + $0x58] sm:$0xff] %v4328
      %4392 = vst [vmem:[%s224 + $0x60] sm:$0xff] %v4331
      %4393 = vst [vmem:[%s224 + $0x68] sm:$0xff] %v4333
      %4394 = vst [vmem:[%s224 + $0x70] sm:$0xff] %v4336
      %4395 = vst [vmem:[%s224 + $0x78] sm:$0xff] %v4338
      %4396 = vst [vmem:[%s224 + $0x80] sm:$0xff] %v4341
      %4397 = vst [vmem:[%s224 + $0x88] sm:$0xff] %v4343
      %4398 = vst [vmem:[%s224 + $0x90] sm:$0xff] %v4346
      %4399 = vst [vmem:[%s224 + $0x98] sm:$0xff] %v4348
      %4400 = vst [vmem:[%s224 + $0xa0] sm:$0xff] %v4351
      %4401 = vst [vmem:[%s224 + $0xa8] sm:$0xff] %v4353
      %4402 = vst [vmem:[%s224 + $0xb0] sm:$0xff] %v4356
      %4403 = vst [vmem:[%s224 + $0xb8] sm:$0xff] %v4358
      %4404 = vst [vmem:[%s224 + $0xc0] sm:$0xff] %v4361
      %4405 = vst [vmem:[%s224 + $0xc8] sm:$0xff] %v4363
      %4406 = vst [vmem:[%s224 + $0xd0] sm:$0xff] %v4366
      %4407 = vst [vmem:[%s224 + $0xd8] sm:$0xff] %v4368
      %4408 = vst [vmem:[%s224 + $0xe0] sm:$0xff] %v4371
      %4409 = vst [vmem:[%s224 + $0xe8] sm:$0xff] %v4373
      %4410 = vst [vmem:[%s224 + $0xf0] sm:$0xff] %v4376
      %4411 = vst [vmem:[%s224 + $0xf8] sm:$0xff] %v4378
      %s4412 = smul.u32 32, %s16
      %p4413 = scmp.lt.s32.totalorder %s4412, 63
      %s4414 = scalar_select %p4413, %s4412, 63
      %s4415 = smul.addr %s4414, 8
      %s4416 = scalar_lea.vmem %s5, %s4415
      // Predicated region
      $region41: #{a_call__.1} parent=39 // pred_check
        %p4417 = pneg %p144
      $region42: #{a_call__.1} parent=39 // pred_check_branch
        %4419 = sbr.rel (%p4417) target = $region44
      $region43: #{a_call__.1} parent=39 // pred_region
        %s4420 = smul.u32 32, %s16
      $region44: #{a_call__.1} parent=39 // pred_fallthru
        _
    $region40: #{a_call__.1} parent=5 // pred_fallthru
      _
    %p4421 = scmp.le.s32.totalorder 2, %s11
    // Predicated region
    $region45: #{a_call__.1} parent=5 // pred_check
      %p4422 = pneg %p4421
    $region46: #{a_call__.1} parent=5 // pred_check_branch
      %4424 = sbr.rel (%p4422) target = $region48
    $region47: #{a_call__.1} parent=5 // pred_region
      %s4425 = ssub.s32 %s11, 2
      // Predicated region
      $region49: #{a_call__.1} parent=47 // pred_check
        %p4426 = pneg %p150
      $region50: #{a_call__.1} parent=47 // pred_check_branch
        %4428 = sbr.rel (%p4426) target = $region52
      $region51: #{a_call__.1} parent=47 // pred_region
        %s4429 = smul.u32 32, %s17
        %p4430 = scmp.lt.s32.totalorder %s4429, 63
        %s4431 = scalar_select %p4430, %s4429, 63
        %s4432 = smul.addr %s4431, 8
        %s4433 = scalar_lea.vmem %s5, %s4432
      $region52: #{a_call__.1} parent=47 // pred_fallthru
        _
    $region48: #{a_call__.1} parent=5 // pred_fallthru
      _
  $region6: #{a_call__.1} parent=0 // loop_footer
    %s15 = sadd.s32 1, %s11
  $region7: #{a_call__.1} parent=0 // loop_footer_branch
    %10 = sbr.rel target = $region3
  $region8: #{a_call__.1} parent=0 // loop_exit
    _

</llo_original>
